<compile_context>
chip_gen: v5e
topology: v5e:2x2
jax: 0.10.0
libtpu: 0.0.40
codegen_flags: <defaults>
</compile_context>

<pallas_src>
import functools

import jax
import jax.numpy as jnp
from jax.experimental import pallas as pl
from jax.experimental.pallas import tpu as pltpu


# -----------------------------------------------------------------------------
# fused forward kernel (one batch element per grid step; all weights resident)
# -----------------------------------------------------------------------------
def fwd_kernel(x_ref, w_emb_ref, pos_ref,
               wq_ref, bq_ref, wk_ref, bk_ref, wv_ref, bv_ref,
               wo_ref, bo_ref,
               g1_ref, be1_ref, w1_ref, b1_ref, w2_ref, b2_ref,
               g2_ref, be2_ref,
               wfc_ref, bfc_ref,
               out_ref, *, num_heads, num_layers):
    _, S, Din = x_ref.shape
    E = w_emb_ref.shape[1]
    H = num_heads
    hd = E // H
    eps = 1e-5
    scale = 1.0 / jnp.sqrt(jnp.float32(hd))

    def layer_norm(r, g, be):
        # single-pass: E[x] and E[x^2] computed independently (no dependent reduce)
        mean = jnp.mean(r, axis=-1, keepdims=True)
        mean_sq = jnp.mean(r * r, axis=-1, keepdims=True)
        var = mean_sq - mean * mean
        return (r - mean) * jax.lax.rsqrt(var + eps) * g + be

    # --- embedding (Linear) + (positional row + embedding bias, pre-folded) ---
    x2 = x_ref[...].reshape(S, Din).astype(jnp.float32)
    h = jnp.dot(x2, w_emb_ref[...], preferred_element_type=jnp.float32) + pos_ref[...]
    # dropout = identity in eval

    # --- encoder layers (static loop, weights stacked on leading layer axis) ---
    for li in range(num_layers):
        wq, bq = wq_ref[li], bq_ref[li]      # (H, E, hd), (H, 1, hd)
        wk, bk = wk_ref[li], bk_ref[li]
        wv, bv = wv_ref[li], bv_ref[li]
        wo, bo = wo_ref[li], bo_ref[li]      # (H, hd, E), (1, E)
        g1, be1 = g1_ref[li], be1_ref[li]
        w1, b1 = w1_ref[li], b1_ref[li]
        w2, b2 = w2_ref[li], b2_ref[li]
        g2, be2 = g2_ref[li], be2_ref[li]

        # head-batched projections: (H, S, E) x (H, E, hd) -> (H, S, hd)
        hb = jnp.broadcast_to(h[None, :, :], (H, S, E))
        q = jnp.einsum('hse,hed->hsd', hb, wq,
                       preferred_element_type=jnp.float32) + bq
        k = jnp.einsum('hse,hed->hsd', hb, wk,
                       preferred_element_type=jnp.float32) + bk
        v = jnp.einsum('hse,hed->hsd', hb, wv,
                       preferred_element_type=jnp.float32) + bv

        # all-head attention in two batched einsums
        s = jnp.einsum('hqd,hkd->hqk', q, k,
                       preferred_element_type=jnp.float32) * scale   # (H, S, S)
        m = jnp.max(s, axis=-1, keepdims=True)
        p = jnp.exp(s - m)
        p = p * pl.reciprocal(jnp.sum(p, axis=-1, keepdims=True), approx=True)
        ctx = jnp.einsum('hqk,hkd->hqd', p, v,
                         preferred_element_type=jnp.float32)          # (H, S, hd)

        # output projection: batched per-head matmul, summed over heads
        partial = jnp.einsum('hqd,hde->hqe', ctx, wo,
                             preferred_element_type=jnp.float32)      # (H, S, E)
        attn = jnp.sum(partial, axis=0) + bo                          # (S, E)

        # residual + LayerNorm 1 (post-LN)
        h1 = layer_norm(h + attn, g1, be1)

        # feed-forward (ReLU), dim_feedforward == E
        f = jnp.dot(h1, w1, preferred_element_type=jnp.float32) + b1
        f = jnp.maximum(f, 0.0)
        f = jnp.dot(f, w2, preferred_element_type=jnp.float32) + b2

        # residual + LayerNorm 2
        h = layer_norm(h1 + f, g2, be2)

    # --- final linear head, lane-dense padded output (S, o_pad) ---
    y = jnp.dot(h, wfc_ref[...], preferred_element_type=jnp.float32) + bfc_ref[...]
    out_ref[...] = y.reshape(1, S, -1).astype(out_ref.dtype)


# -----------------------------------------------------------------------------
# wrapper: one pallas_call, batch-parallel grid, weights fully resident
# -----------------------------------------------------------------------------
def _full_spec(arr):
    ndim = arr.ndim
    return pl.BlockSpec(arr.shape, lambda b, _n=ndim: (0,) * _n)


def transformer_forward(x, params, num_heads, num_layers, output_dim):
    B, S, Din = x.shape
    E = params["w_emb"].shape[1]
    o_pad = params["w_fc_pad"].shape[1]
    L, H = num_layers, num_heads

    ordered = [
        params["w_emb"], params["pos_b"],
        params["w_q"], params["b_q"], params["w_k"], params["b_k"],
        params["w_v"], params["b_v"], params["w_o"], params["b_o"],
        params["g1"], params["be1"], params["w1"], params["b1"],
        params["w2"], params["b2"], params["g2"], params["be2"],
        params["w_fc_pad"], params["b_fc_pad"],
    ]

    in_specs = [pl.BlockSpec((1, S, Din), lambda b: (b, 0, 0))]
    in_specs += [_full_spec(a) for a in ordered]

    # advisory cost estimate (helps XLA overlap surrounding HBM traffic)
    per_layer_flops = (6 * S * E * E          # q/k/v projections
                       + 4 * S * S * E        # scores + context
                       + 2 * S * E * E        # output projection
                       + 4 * S * E * E)       # feed-forward (F == E)
    flops = B * (2 * S * Din * E + L * per_layer_flops + 2 * S * E * o_pad)
    transcendentals = B * L * (H * S * S + H * S + 2 * S)
    bytes_accessed = (int(x.size) * x.dtype.itemsize
                      + sum(int(a.size) * a.dtype.itemsize for a in ordered)
                      + B * S * o_pad * 4)

    out = pl.pallas_call(
        functools.partial(fwd_kernel, num_heads=num_heads, num_layers=num_layers),
        grid=(B,),
        in_specs=in_specs,
        out_specs=pl.BlockSpec((1, S, o_pad), lambda b: (b, 0, 0)),
        out_shape=jax.ShapeDtypeStruct((B, S, o_pad), jnp.float32),
        compiler_params=pltpu.CompilerParams(dimension_semantics=("parallel",)),
        cost_estimate=pl.CostEstimate(flops=int(flops),
                                      transcendentals=int(transcendentals),
                                      bytes_accessed=int(bytes_accessed)),
    )(x, *ordered)
    # slice the lane-dense padded slab back to output_dim outside the kernel
    return out[..., :output_dim]


# -----------------------------------------------------------------------------
# deterministic parameter construction (layer weights stacked on a leading axis;
# attention weights pre-reshaped to head-batched layouts — done once, outside
# the kernel, so it is free w.r.t. kernel performance)
# -----------------------------------------------------------------------------
def init_params(key, input_dim, embed_dim, num_heads, num_layers, output_dim,
                max_len, seq_len):
    E = embed_dim
    H = num_heads
    hd = E // H
    F = embed_dim  # dim_feedforward == embed_dim (as passed in the module)
    scale = 0.02
    keys = jax.random.split(key, 5 + num_layers)

    w_emb = scale * jax.random.normal(keys[0], (input_dim, E), jnp.float32)
    b_emb = jnp.zeros((1, E), jnp.float32)

    pos_table = scale * jax.random.normal(keys[1], (max_len, E), jnp.float32)
    pos_b = pos_table[:seq_len] + b_emb            # fold embedding bias into pos rows

    # final FC, zero-padded on the output dim to a lane-dense multiple of 128
    o_pad = ((output_dim + 127) // 128) * 128
    w_fc = scale * jax.random.normal(keys[2], (E, output_dim), jnp.float32)
    w_fc_pad = jnp.zeros((E, o_pad), jnp.float32).at[:, :output_dim].set(w_fc)
    b_fc_pad = jnp.zeros((1, o_pad), jnp.float32)

    def head_split_cols(w):
        # (E, E) -> (H, E, hd): head h == w[:, h*hd:(h+1)*hd]
        return jnp.transpose(w.reshape(E, H, hd), (1, 0, 2))

    w_q, b_q, w_k, b_k, w_v, b_v = [], [], [], [], [], []
    w_o, b_o = [], []
    w1, b1, w2, b2 = [], [], [], []
    g1, be1, g2, be2 = [], [], [], []
    for li in range(num_layers):
        lk = jax.random.split(keys[5 + li], 6)
        w_q.append(head_split_cols(scale * jax.random.normal(lk[0], (E, E), jnp.float32)))
        w_k.append(head_split_cols(scale * jax.random.normal(lk[1], (E, E), jnp.float32)))
        w_v.append(head_split_cols(scale * jax.random.normal(lk[2], (E, E), jnp.float32)))
        b_q.append(jnp.zeros((H, 1, hd), jnp.float32))
        b_k.append(jnp.zeros((H, 1, hd), jnp.float32))
        b_v.append(jnp.zeros((H, 1, hd), jnp.float32))
        # output projection: head h uses rows h*hd:(h+1)*hd of wo -> (H, hd, E)
        w_o.append((scale * jax.random.normal(lk[3], (E, E), jnp.float32)).reshape(H, hd, E))
        b_o.append(jnp.zeros((1, E), jnp.float32))
        w1.append(scale * jax.random.normal(lk[4], (E, F), jnp.float32))
        b1.append(jnp.zeros((1, F), jnp.float32))
        w2.append(scale * jax.random.normal(lk[5], (F, E), jnp.float32))
        b2.append(jnp.zeros((1, E), jnp.float32))
        g1.append(jnp.ones((1, E), jnp.float32)); be1.append(jnp.zeros((1, E), jnp.float32))
        g2.append(jnp.ones((1, E), jnp.float32)); be2.append(jnp.zeros((1, E), jnp.float32))

    stack = lambda xs: jnp.stack(xs, axis=0)
    return {
        "w_emb": w_emb, "pos_b": pos_b,
        "w_q": stack(w_q), "b_q": stack(b_q),
        "w_k": stack(w_k), "b_k": stack(b_k),
        "w_v": stack(w_v), "b_v": stack(b_v),
        "w_o": stack(w_o), "b_o": stack(b_o),
        "g1": stack(g1), "be1": stack(be1),
        "w1": stack(w1), "b1": stack(b1),
        "w2": stack(w2), "b2": stack(b2),
        "g2": stack(g2), "be2": stack(be2),
        "w_fc_pad": w_fc_pad, "b_fc_pad": b_fc_pad,
    }


# -----------------------------------------------------------------------------
# main
# -----------------------------------------------------------------------------
if __name__ == "__main__":
    B, S = 2, 8
    input_dim, embed_dim, num_heads, num_layers, output_dim = 16, 32, 4, 2, 8
    max_len = 64

    key = jax.random.PRNGKey(0)
    k_x, k_p = jax.random.split(key)

    x = jax.random.normal(k_x, (B, S, input_dim), jnp.float32)
    params = init_params(k_p, input_dim, embed_dim, num_heads, num_layers,
                         output_dim, max_len, seq_len=S)

    out = transformer_forward(x, params, num_heads, num_layers, output_dim)
    out = jax.block_until_ready(out)

    assert out.shape == (B, S, output_dim), out.shape
    assert bool(jnp.all(jnp.isfinite(out)))
    print("KERNEL_OK")
</pallas_src>

<mosaic_0001>
module attributes {stable_mosaic.version = 11 : i64} {
  func.func @fwd_kernel(%arg0: i32, %arg1: memref<1x8x16xf32, #tpu.memory_space<vmem>>, %arg2: memref<16x32xf32, #tpu.memory_space<vmem>>, %arg3: memref<8x32xf32, #tpu.memory_space<vmem>>, %arg4: memref<2x4x32x8xf32, #tpu.memory_space<vmem>>, %arg5: memref<2x4x1x8xf32, #tpu.memory_space<vmem>>, %arg6: memref<2x4x32x8xf32, #tpu.memory_space<vmem>>, %arg7: memref<2x4x1x8xf32, #tpu.memory_space<vmem>>, %arg8: memref<2x4x32x8xf32, #tpu.memory_space<vmem>>, %arg9: memref<2x4x1x8xf32, #tpu.memory_space<vmem>>, %arg10: memref<2x4x8x32xf32, #tpu.memory_space<vmem>>, %arg11: memref<2x1x32xf32, #tpu.memory_space<vmem>>, %arg12: memref<2x1x32xf32, #tpu.memory_space<vmem>>, %arg13: memref<2x1x32xf32, #tpu.memory_space<vmem>>, %arg14: memref<2x32x32xf32, #tpu.memory_space<vmem>>, %arg15: memref<2x1x32xf32, #tpu.memory_space<vmem>>, %arg16: memref<2x32x32xf32, #tpu.memory_space<vmem>>, %arg17: memref<2x1x32xf32, #tpu.memory_space<vmem>>, %arg18: memref<2x1x32xf32, #tpu.memory_space<vmem>>, %arg19: memref<2x1x32xf32, #tpu.memory_space<vmem>>, %arg20: memref<32x128xf32, #tpu.memory_space<vmem>>, %arg21: memref<1x128xf32, #tpu.memory_space<vmem>>, %arg22: memref<1x8x128xf32, #tpu.memory_space<vmem>>) attributes {dimension_semantics = [#tpu.dimension_semantics<parallel>], iteration_bounds = array<i64: 2>, scalar_prefetch = 0 : i64, scratch_operands = 0 : i64, tpu.core_type = #tpu.core_type<tc>, window_params = [{transform_indices = @transform_0, window_bounds = array<i64: 1, 8, 16>}, {pipeline_mode = #tpu.pipeline_mode<synchronous>, transform_indices = @transform_1, window_bounds = array<i64: 16, 32>}, {pipeline_mode = #tpu.pipeline_mode<synchronous>, transform_indices = @transform_2, window_bounds = array<i64: 8, 32>}, {pipeline_mode = #tpu.pipeline_mode<synchronous>, transform_indices = @transform_3, window_bounds = array<i64: 2, 4, 32, 8>}, {pipeline_mode = #tpu.pipeline_mode<synchronous>, transform_indices = @transform_4, window_bounds = array<i64: 2, 4, 1, 8>}, {pipeline_mode = #tpu.pipeline_mode<synchronous>, transform_indices = @transform_5, window_bounds = array<i64: 2, 4, 32, 8>}, {pipeline_mode = #tpu.pipeline_mode<synchronous>, transform_indices = @transform_6, window_bounds = array<i64: 2, 4, 1, 8>}, {pipeline_mode = #tpu.pipeline_mode<synchronous>, transform_indices = @transform_7, window_bounds = array<i64: 2, 4, 32, 8>}, {pipeline_mode = #tpu.pipeline_mode<synchronous>, transform_indices = @transform_8, window_bounds = array<i64: 2, 4, 1, 8>}, {pipeline_mode = #tpu.pipeline_mode<synchronous>, transform_indices = @transform_9, window_bounds = array<i64: 2, 4, 8, 32>}, {pipeline_mode = #tpu.pipeline_mode<synchronous>, transform_indices = @transform_10, window_bounds = array<i64: 2, 1, 32>}, {pipeline_mode = #tpu.pipeline_mode<synchronous>, transform_indices = @transform_11, window_bounds = array<i64: 2, 1, 32>}, {pipeline_mode = #tpu.pipeline_mode<synchronous>, transform_indices = @transform_12, window_bounds = array<i64: 2, 1, 32>}, {pipeline_mode = #tpu.pipeline_mode<synchronous>, transform_indices = @transform_13, window_bounds = array<i64: 2, 32, 32>}, {pipeline_mode = #tpu.pipeline_mode<synchronous>, transform_indices = @transform_14, window_bounds = array<i64: 2, 1, 32>}, {pipeline_mode = #tpu.pipeline_mode<synchronous>, transform_indices = @transform_15, window_bounds = array<i64: 2, 32, 32>}, {pipeline_mode = #tpu.pipeline_mode<synchronous>, transform_indices = @transform_16, window_bounds = array<i64: 2, 1, 32>}, {pipeline_mode = #tpu.pipeline_mode<synchronous>, transform_indices = @transform_17, window_bounds = array<i64: 2, 1, 32>}, {pipeline_mode = #tpu.pipeline_mode<synchronous>, transform_indices = @transform_18, window_bounds = array<i64: 2, 1, 32>}, {pipeline_mode = #tpu.pipeline_mode<synchronous>, transform_indices = @transform_19, window_bounds = array<i64: 32, 128>}, {pipeline_mode = #tpu.pipeline_mode<synchronous>, transform_indices = @transform_20, window_bounds = array<i64: 1, 128>}, {transform_indices = @transform_21, window_bounds = array<i64: 1, 8, 128>}]} {
    %cst = arith.constant 8.000000e+00 : f32
    %0 = math.sqrt %cst : f32
    %cst_0 = arith.constant 1.000000e+00 : f32
    %1 = arith.divf %cst_0, %0 : f32
    %c0 = arith.constant 0 : index
    %c0_1 = arith.constant 0 : index
    %c0_2 = arith.constant 0 : index
    %2 = vector.load %arg1[%c0, %c0_1, %c0_2] : memref<1x8x16xf32, #tpu.memory_space<vmem>>, vector<1x8x16xf32>
    %3 = vector.shape_cast %2 : vector<1x8x16xf32> to vector<8x16xf32>
    %c0_3 = arith.constant 0 : index
    %c0_4 = arith.constant 0 : index
    %4 = vector.load %arg2[%c0_3, %c0_4] : memref<16x32xf32, #tpu.memory_space<vmem>>, vector<16x32xf32>
    %cst_5 = arith.constant dense<0.000000e+00> : vector<8x32xf32>
    %5 = tpu.matmul %3, %4, %cst_5 {dimension_numbers = #tpu.dot_dimension_numbers<[1], [0], [0], [1], [0, 0, 1, 1], [], []>} : vector<8x16xf32>, vector<16x32xf32>, vector<8x32xf32> -> vector<8x32xf32>
    %c0_6 = arith.constant 0 : index
    %c0_7 = arith.constant 0 : index
    %6 = vector.load %arg3[%c0_6, %c0_7] : memref<8x32xf32, #tpu.memory_space<vmem>>, vector<8x32xf32>
    %7 = arith.addf %5, %6 : vector<8x32xf32>
    %c0_8 = arith.constant 0 : index
    %c0_9 = arith.constant 0 : index
    %c0_10 = arith.constant 0 : index
    %c0_11 = arith.constant 0 : index
    %8 = vector.load %arg4[%c0_8, %c0_9, %c0_10, %c0_11] : memref<2x4x32x8xf32, #tpu.memory_space<vmem>>, vector<1x4x32x8xf32>
    %9 = vector.shape_cast %8 : vector<1x4x32x8xf32> to vector<4x32x8xf32>
    %c0_12 = arith.constant 0 : index
    %c0_13 = arith.constant 0 : index
    %c0_14 = arith.constant 0 : index
    %c0_15 = arith.constant 0 : index
    %10 = vector.load %arg5[%c0_12, %c0_13, %c0_14, %c0_15] : memref<2x4x1x8xf32, #tpu.memory_space<vmem>>, vector<1x4x1x8xf32>
    %11 = vector.shape_cast %10 : vector<1x4x1x8xf32> to vector<4x1x8xf32>
    %c0_16 = arith.constant 0 : index
    %c0_17 = arith.constant 0 : index
    %c0_18 = arith.constant 0 : index
    %c0_19 = arith.constant 0 : index
    %12 = vector.load %arg6[%c0_16, %c0_17, %c0_18, %c0_19] : memref<2x4x32x8xf32, #tpu.memory_space<vmem>>, vector<1x4x32x8xf32>
    %13 = vector.shape_cast %12 : vector<1x4x32x8xf32> to vector<4x32x8xf32>
    %c0_20 = arith.constant 0 : index
    %c0_21 = arith.constant 0 : index
    %c0_22 = arith.constant 0 : index
    %c0_23 = arith.constant 0 : index
    %14 = vector.load %arg7[%c0_20, %c0_21, %c0_22, %c0_23] : memref<2x4x1x8xf32, #tpu.memory_space<vmem>>, vector<1x4x1x8xf32>
    %15 = vector.shape_cast %14 : vector<1x4x1x8xf32> to vector<4x1x8xf32>
    %c0_24 = arith.constant 0 : index
    %c0_25 = arith.constant 0 : index
    %c0_26 = arith.constant 0 : index
    %c0_27 = arith.constant 0 : index
    %16 = vector.load %arg8[%c0_24, %c0_25, %c0_26, %c0_27] : memref<2x4x32x8xf32, #tpu.memory_space<vmem>>, vector<1x4x32x8xf32>
    %17 = vector.shape_cast %16 : vector<1x4x32x8xf32> to vector<4x32x8xf32>
    %c0_28 = arith.constant 0 : index
    %c0_29 = arith.constant 0 : index
    %c0_30 = arith.constant 0 : index
    %c0_31 = arith.constant 0 : index
    %18 = vector.load %arg9[%c0_28, %c0_29, %c0_30, %c0_31] : memref<2x4x1x8xf32, #tpu.memory_space<vmem>>, vector<1x4x1x8xf32>
    %19 = vector.shape_cast %18 : vector<1x4x1x8xf32> to vector<4x1x8xf32>
    %c0_32 = arith.constant 0 : index
    %c0_33 = arith.constant 0 : index
    %c0_34 = arith.constant 0 : index
    %c0_35 = arith.constant 0 : index
    %20 = vector.load %arg10[%c0_32, %c0_33, %c0_34, %c0_35] : memref<2x4x8x32xf32, #tpu.memory_space<vmem>>, vector<1x4x8x32xf32>
    %21 = vector.shape_cast %20 : vector<1x4x8x32xf32> to vector<4x8x32xf32>
    %c0_36 = arith.constant 0 : index
    %c0_37 = arith.constant 0 : index
    %c0_38 = arith.constant 0 : index
    %22 = vector.load %arg11[%c0_36, %c0_37, %c0_38] : memref<2x1x32xf32, #tpu.memory_space<vmem>>, vector<1x1x32xf32>
    %23 = vector.shape_cast %22 : vector<1x1x32xf32> to vector<1x32xf32>
    %c0_39 = arith.constant 0 : index
    %c0_40 = arith.constant 0 : index
    %c0_41 = arith.constant 0 : index
    %24 = vector.load %arg12[%c0_39, %c0_40, %c0_41] : memref<2x1x32xf32, #tpu.memory_space<vmem>>, vector<1x1x32xf32>
    %25 = vector.shape_cast %24 : vector<1x1x32xf32> to vector<1x32xf32>
    %c0_42 = arith.constant 0 : index
    %c0_43 = arith.constant 0 : index
    %c0_44 = arith.constant 0 : index
    %26 = vector.load %arg13[%c0_42, %c0_43, %c0_44] : memref<2x1x32xf32, #tpu.memory_space<vmem>>, vector<1x1x32xf32>
    %27 = vector.shape_cast %26 : vector<1x1x32xf32> to vector<1x32xf32>
    %c0_45 = arith.constant 0 : index
    %c0_46 = arith.constant 0 : index
    %c0_47 = arith.constant 0 : index
    %28 = vector.load %arg14[%c0_45, %c0_46, %c0_47] : memref<2x32x32xf32, #tpu.memory_space<vmem>>, vector<1x32x32xf32>
    %29 = vector.shape_cast %28 : vector<1x32x32xf32> to vector<32x32xf32>
    %c0_48 = arith.constant 0 : index
    %c0_49 = arith.constant 0 : index
    %c0_50 = arith.constant 0 : index
    %30 = vector.load %arg15[%c0_48, %c0_49, %c0_50] : memref<2x1x32xf32, #tpu.memory_space<vmem>>, vector<1x1x32xf32>
    %31 = vector.shape_cast %30 : vector<1x1x32xf32> to vector<1x32xf32>
    %c0_51 = arith.constant 0 : index
    %c0_52 = arith.constant 0 : index
    %c0_53 = arith.constant 0 : index
    %32 = vector.load %arg16[%c0_51, %c0_52, %c0_53] : memref<2x32x32xf32, #tpu.memory_space<vmem>>, vector<1x32x32xf32>
    %33 = vector.shape_cast %32 : vector<1x32x32xf32> to vector<32x32xf32>
    %c0_54 = arith.constant 0 : index
    %c0_55 = arith.constant 0 : index
    %c0_56 = arith.constant 0 : index
    %34 = vector.load %arg17[%c0_54, %c0_55, %c0_56] : memref<2x1x32xf32, #tpu.memory_space<vmem>>, vector<1x1x32xf32>
    %35 = vector.shape_cast %34 : vector<1x1x32xf32> to vector<1x32xf32>
    %c0_57 = arith.constant 0 : index
    %c0_58 = arith.constant 0 : index
    %c0_59 = arith.constant 0 : index
    %36 = vector.load %arg18[%c0_57, %c0_58, %c0_59] : memref<2x1x32xf32, #tpu.memory_space<vmem>>, vector<1x1x32xf32>
    %37 = vector.shape_cast %36 : vector<1x1x32xf32> to vector<1x32xf32>
    %c0_60 = arith.constant 0 : index
    %c0_61 = arith.constant 0 : index
    %c0_62 = arith.constant 0 : index
    %38 = vector.load %arg19[%c0_60, %c0_61, %c0_62] : memref<2x1x32xf32, #tpu.memory_space<vmem>>, vector<1x1x32xf32>
    %39 = vector.shape_cast %38 : vector<1x1x32xf32> to vector<1x32xf32>
    %40 = vector.shape_cast %7 : vector<8x32xf32> to vector<1x8x32xf32>
    %41 = vector.shape_cast %40 : vector<1x8x32xf32> to vector<1x8x32xf32>
    %42 = vector.broadcast %41 : vector<1x8x32xf32> to vector<4x8x32xf32>
    "tpu.trace_start"() <{level = 10 : i32, message = "hse,hed->hsd"}> : () -> ()
    %cst_63 = arith.constant dense<0.000000e+00> : vector<4x8x8xf32>
    %43 = tpu.matmul %42, %9, %cst_63 {dimension_numbers = #tpu.dot_dimension_numbers<[2], [1], [1], [2], [0, 0, 0, 1, 1, 2], [0], [0]>} : vector<4x8x32xf32>, vector<4x32x8xf32>, vector<4x8x8xf32> -> vector<4x8x8xf32>
    "tpu.trace_stop"() : () -> ()
    %44 = vector.broadcast %11 : vector<4x1x8xf32> to vector<4x8x8xf32>
    %45 = arith.addf %43, %44 : vector<4x8x8xf32>
    "tpu.trace_start"() <{level = 10 : i32, message = "hse,hed->hsd"}> : () -> ()
    %cst_64 = arith.constant dense<0.000000e+00> : vector<4x8x8xf32>
    %46 = tpu.matmul %42, %13, %cst_64 {dimension_numbers = #tpu.dot_dimension_numbers<[2], [1], [1], [2], [0, 0, 0, 1, 1, 2], [0], [0]>} : vector<4x8x32xf32>, vector<4x32x8xf32>, vector<4x8x8xf32> -> vector<4x8x8xf32>
    "tpu.trace_stop"() : () -> ()
    %47 = vector.broadcast %15 : vector<4x1x8xf32> to vector<4x8x8xf32>
    %48 = arith.addf %46, %47 : vector<4x8x8xf32>
    "tpu.trace_start"() <{level = 10 : i32, message = "hse,hed->hsd"}> : () -> ()
    %cst_65 = arith.constant dense<0.000000e+00> : vector<4x8x8xf32>
    %49 = tpu.matmul %42, %17, %cst_65 {dimension_numbers = #tpu.dot_dimension_numbers<[2], [1], [1], [2], [0, 0, 0, 1, 1, 2], [0], [0]>} : vector<4x8x32xf32>, vector<4x32x8xf32>, vector<4x8x8xf32> -> vector<4x8x8xf32>
    "tpu.trace_stop"() : () -> ()
    %50 = vector.broadcast %19 : vector<4x1x8xf32> to vector<4x8x8xf32>
    %51 = arith.addf %49, %50 : vector<4x8x8xf32>
    "tpu.trace_start"() <{level = 10 : i32, message = "hqd,hkd->hqk"}> : () -> ()
    %cst_66 = arith.constant dense<0.000000e+00> : vector<4x8x8xf32>
    %52 = tpu.matmul %45, %48, %cst_66 {dimension_numbers = #tpu.dot_dimension_numbers<[2], [2], [1], [1], [0, 0, 0, 1, 1, 1], [0], [0]>} : vector<4x8x8xf32>, vector<4x8x8xf32>, vector<4x8x8xf32> -> vector<4x8x8xf32>
    "tpu.trace_stop"() : () -> ()
    %53 = vector.broadcast %1 : f32 to vector<4x8x8xf32>
    %54 = arith.mulf %52, %53 : vector<4x8x8xf32>
    %cst_67 = arith.constant dense<0xFF800000> : vector<4x8xf32>
    %55 = vector.multi_reduction <maximumf>, %54, %cst_67 [2] : vector<4x8x8xf32> to vector<4x8xf32>
    %56 = vector.shape_cast %55 : vector<4x8xf32> to vector<4x8x1xf32>
    %57 = vector.broadcast %56 : vector<4x8x1xf32> to vector<4x8x8xf32>
    %58 = arith.subf %54, %57 : vector<4x8x8xf32>
    %59 = math.exp %58 : vector<4x8x8xf32>
    %cst_68 = arith.constant dense<0.000000e+00> : vector<4x8xf32>
    %60 = vector.multi_reduction <add>, %59, %cst_68 [2] : vector<4x8x8xf32> to vector<4x8xf32>
    %61 = vector.shape_cast %60 : vector<4x8xf32> to vector<4x8x1xf32>
    %62 = tpu.reciprocal %61 {approx = true} : vector<4x8x1xf32> -> vector<4x8x1xf32>
    %63 = vector.broadcast %62 : vector<4x8x1xf32> to vector<4x8x8xf32>
    %64 = arith.mulf %59, %63 : vector<4x8x8xf32>
    "tpu.trace_start"() <{level = 10 : i32, message = "hqk,hkd->hqd"}> : () -> ()
    %cst_69 = arith.constant dense<0.000000e+00> : vector<4x8x8xf32>
    %65 = tpu.matmul %64, %51, %cst_69 {dimension_numbers = #tpu.dot_dimension_numbers<[2], [1], [1], [2], [0, 0, 0, 1, 1, 2], [0], [0]>} : vector<4x8x8xf32>, vector<4x8x8xf32>, vector<4x8x8xf32> -> vector<4x8x8xf32>
    "tpu.trace_stop"() : () -> ()
    "tpu.trace_start"() <{level = 10 : i32, message = "hqd,hde->hqe"}> : () -> ()
    %cst_70 = arith.constant dense<0.000000e+00> : vector<4x8x32xf32>
    %66 = tpu.matmul %65, %21, %cst_70 {dimension_numbers = #tpu.dot_dimension_numbers<[2], [1], [1], [2], [0, 0, 0, 1, 1, 2], [0], [0]>} : vector<4x8x8xf32>, vector<4x8x32xf32>, vector<4x8x32xf32> -> vector<4x8x32xf32>
    "tpu.trace_stop"() : () -> ()
    %cst_71 = arith.constant dense<0.000000e+00> : vector<8x32xf32>
    %67 = vector.multi_reduction <add>, %66, %cst_71 [0] : vector<4x8x32xf32> to vector<8x32xf32>
    %68 = vector.broadcast %23 : vector<1x32xf32> to vector<8x32xf32>
    %69 = arith.addf %67, %68 : vector<8x32xf32>
    %70 = arith.addf %7, %69 : vector<8x32xf32>
    %cst_72 = arith.constant dense<0.000000e+00> : vector<8xf32>
    %71 = vector.multi_reduction <add>, %70, %cst_72 [1] : vector<8x32xf32> to vector<8xf32>
    %72 = vector.shape_cast %71 : vector<8xf32> to vector<8x1xf32>
    %cst_73 = arith.constant 3.200000e+01 : f32
    %73 = vector.broadcast %cst_73 : f32 to vector<8x1xf32>
    %74 = arith.divf %72, %73 : vector<8x1xf32>
    %75 = arith.mulf %70, %70 : vector<8x32xf32>
    %cst_74 = arith.constant dense<0.000000e+00> : vector<8xf32>
    %76 = vector.multi_reduction <add>, %75, %cst_74 [1] : vector<8x32xf32> to vector<8xf32>
    %77 = vector.shape_cast %76 : vector<8xf32> to vector<8x1xf32>
    %cst_75 = arith.constant 3.200000e+01 : f32
    %78 = vector.broadcast %cst_75 : f32 to vector<8x1xf32>
    %79 = arith.divf %77, %78 : vector<8x1xf32>
    %80 = arith.mulf %74, %74 : vector<8x1xf32>
    %81 = arith.subf %79, %80 : vector<8x1xf32>
    %82 = vector.broadcast %74 : vector<8x1xf32> to vector<8x32xf32>
    %83 = arith.subf %70, %82 : vector<8x32xf32>
    %cst_76 = arith.constant 9.99999974E-6 : f32
    %84 = vector.broadcast %cst_76 : f32 to vector<8x1xf32>
    %85 = arith.addf %81, %84 : vector<8x1xf32>
    %86 = math.rsqrt %85 : vector<8x1xf32>
    %87 = vector.broadcast %86 : vector<8x1xf32> to vector<8x32xf32>
    %88 = arith.mulf %83, %87 : vector<8x32xf32>
    %89 = vector.broadcast %25 : vector<1x32xf32> to vector<8x32xf32>
    %90 = arith.mulf %88, %89 : vector<8x32xf32>
    %91 = vector.broadcast %27 : vector<1x32xf32> to vector<8x32xf32>
    %92 = arith.addf %90, %91 : vector<8x32xf32>
    %cst_77 = arith.constant dense<0.000000e+00> : vector<8x32xf32>
    %93 = tpu.matmul %92, %29, %cst_77 {dimension_numbers = #tpu.dot_dimension_numbers<[1], [0], [0], [1], [0, 0, 1, 1], [], []>} : vector<8x32xf32>, vector<32x32xf32>, vector<8x32xf32> -> vector<8x32xf32>
    %94 = vector.broadcast %31 : vector<1x32xf32> to vector<8x32xf32>
    %95 = arith.addf %93, %94 : vector<8x32xf32>
    %cst_78 = arith.constant 0.000000e+00 : f32
    %96 = vector.broadcast %cst_78 : f32 to vector<8x32xf32>
    %97 = arith.maximumf %95, %96 : vector<8x32xf32>
    %cst_79 = arith.constant dense<0.000000e+00> : vector<8x32xf32>
    %98 = tpu.matmul %97, %33, %cst_79 {dimension_numbers = #tpu.dot_dimension_numbers<[1], [0], [0], [1], [0, 0, 1, 1], [], []>} : vector<8x32xf32>, vector<32x32xf32>, vector<8x32xf32> -> vector<8x32xf32>
    %99 = vector.broadcast %35 : vector<1x32xf32> to vector<8x32xf32>
    %100 = arith.addf %98, %99 : vector<8x32xf32>
    %101 = arith.addf %92, %100 : vector<8x32xf32>
    %cst_80 = arith.constant dense<0.000000e+00> : vector<8xf32>
    %102 = vector.multi_reduction <add>, %101, %cst_80 [1] : vector<8x32xf32> to vector<8xf32>
    %103 = vector.shape_cast %102 : vector<8xf32> to vector<8x1xf32>
    %cst_81 = arith.constant 3.200000e+01 : f32
    %104 = vector.broadcast %cst_81 : f32 to vector<8x1xf32>
    %105 = arith.divf %103, %104 : vector<8x1xf32>
    %106 = arith.mulf %101, %101 : vector<8x32xf32>
    %cst_82 = arith.constant dense<0.000000e+00> : vector<8xf32>
    %107 = vector.multi_reduction <add>, %106, %cst_82 [1] : vector<8x32xf32> to vector<8xf32>
    %108 = vector.shape_cast %107 : vector<8xf32> to vector<8x1xf32>
    %cst_83 = arith.constant 3.200000e+01 : f32
    %109 = vector.broadcast %cst_83 : f32 to vector<8x1xf32>
    %110 = arith.divf %108, %109 : vector<8x1xf32>
    %111 = arith.mulf %105, %105 : vector<8x1xf32>
    %112 = arith.subf %110, %111 : vector<8x1xf32>
    %113 = vector.broadcast %105 : vector<8x1xf32> to vector<8x32xf32>
    %114 = arith.subf %101, %113 : vector<8x32xf32>
    %cst_84 = arith.constant 9.99999974E-6 : f32
    %115 = vector.broadcast %cst_84 : f32 to vector<8x1xf32>
    %116 = arith.addf %112, %115 : vector<8x1xf32>
    %117 = math.rsqrt %116 : vector<8x1xf32>
    %118 = vector.broadcast %117 : vector<8x1xf32> to vector<8x32xf32>
    %119 = arith.mulf %114, %118 : vector<8x32xf32>
    %120 = vector.broadcast %37 : vector<1x32xf32> to vector<8x32xf32>
    %121 = arith.mulf %119, %120 : vector<8x32xf32>
    %122 = vector.broadcast %39 : vector<1x32xf32> to vector<8x32xf32>
    %123 = arith.addf %121, %122 : vector<8x32xf32>
    %c1 = arith.constant 1 : index
    %c0_85 = arith.constant 0 : index
    %c0_86 = arith.constant 0 : index
    %c0_87 = arith.constant 0 : index
    %124 = vector.load %arg4[%c1, %c0_85, %c0_86, %c0_87] : memref<2x4x32x8xf32, #tpu.memory_space<vmem>>, vector<1x4x32x8xf32>
    %125 = vector.shape_cast %124 : vector<1x4x32x8xf32> to vector<4x32x8xf32>
    %c1_88 = arith.constant 1 : index
    %c0_89 = arith.constant 0 : index
    %c0_90 = arith.constant 0 : index
    %c0_91 = arith.constant 0 : index
    %126 = vector.load %arg5[%c1_88, %c0_89, %c0_90, %c0_91] : memref<2x4x1x8xf32, #tpu.memory_space<vmem>>, vector<1x4x1x8xf32>
    %127 = vector.shape_cast %126 : vector<1x4x1x8xf32> to vector<4x1x8xf32>
    %c1_92 = arith.constant 1 : index
    %c0_93 = arith.constant 0 : index
    %c0_94 = arith.constant 0 : index
    %c0_95 = arith.constant 0 : index
    %128 = vector.load %arg6[%c1_92, %c0_93, %c0_94, %c0_95] : memref<2x4x32x8xf32, #tpu.memory_space<vmem>>, vector<1x4x32x8xf32>
    %129 = vector.shape_cast %128 : vector<1x4x32x8xf32> to vector<4x32x8xf32>
    %c1_96 = arith.constant 1 : index
    %c0_97 = arith.constant 0 : index
    %c0_98 = arith.constant 0 : index
    %c0_99 = arith.constant 0 : index
    %130 = vector.load %arg7[%c1_96, %c0_97, %c0_98, %c0_99] : memref<2x4x1x8xf32, #tpu.memory_space<vmem>>, vector<1x4x1x8xf32>
    %131 = vector.shape_cast %130 : vector<1x4x1x8xf32> to vector<4x1x8xf32>
    %c1_100 = arith.constant 1 : index
    %c0_101 = arith.constant 0 : index
    %c0_102 = arith.constant 0 : index
    %c0_103 = arith.constant 0 : index
    %132 = vector.load %arg8[%c1_100, %c0_101, %c0_102, %c0_103] : memref<2x4x32x8xf32, #tpu.memory_space<vmem>>, vector<1x4x32x8xf32>
    %133 = vector.shape_cast %132 : vector<1x4x32x8xf32> to vector<4x32x8xf32>
    %c1_104 = arith.constant 1 : index
    %c0_105 = arith.constant 0 : index
    %c0_106 = arith.constant 0 : index
    %c0_107 = arith.constant 0 : index
    %134 = vector.load %arg9[%c1_104, %c0_105, %c0_106, %c0_107] : memref<2x4x1x8xf32, #tpu.memory_space<vmem>>, vector<1x4x1x8xf32>
    %135 = vector.shape_cast %134 : vector<1x4x1x8xf32> to vector<4x1x8xf32>
    %c1_108 = arith.constant 1 : index
    %c0_109 = arith.constant 0 : index
    %c0_110 = arith.constant 0 : index
    %c0_111 = arith.constant 0 : index
    %136 = vector.load %arg10[%c1_108, %c0_109, %c0_110, %c0_111] : memref<2x4x8x32xf32, #tpu.memory_space<vmem>>, vector<1x4x8x32xf32>
    %137 = vector.shape_cast %136 : vector<1x4x8x32xf32> to vector<4x8x32xf32>
    %c1_112 = arith.constant 1 : index
    %c0_113 = arith.constant 0 : index
    %c0_114 = arith.constant 0 : index
    %138 = vector.load %arg11[%c1_112, %c0_113, %c0_114] : memref<2x1x32xf32, #tpu.memory_space<vmem>>, vector<1x1x32xf32>
    %139 = vector.shape_cast %138 : vector<1x1x32xf32> to vector<1x32xf32>
    %c1_115 = arith.constant 1 : index
    %c0_116 = arith.constant 0 : index
    %c0_117 = arith.constant 0 : index
    %140 = vector.load %arg12[%c1_115, %c0_116, %c0_117] : memref<2x1x32xf32, #tpu.memory_space<vmem>>, vector<1x1x32xf32>
    %141 = vector.shape_cast %140 : vector<1x1x32xf32> to vector<1x32xf32>
    %c1_118 = arith.constant 1 : index
    %c0_119 = arith.constant 0 : index
    %c0_120 = arith.constant 0 : index
    %142 = vector.load %arg13[%c1_118, %c0_119, %c0_120] : memref<2x1x32xf32, #tpu.memory_space<vmem>>, vector<1x1x32xf32>
    %143 = vector.shape_cast %142 : vector<1x1x32xf32> to vector<1x32xf32>
    %c1_121 = arith.constant 1 : index
    %c0_122 = arith.constant 0 : index
    %c0_123 = arith.constant 0 : index
    %144 = vector.load %arg14[%c1_121, %c0_122, %c0_123] : memref<2x32x32xf32, #tpu.memory_space<vmem>>, vector<1x32x32xf32>
    %145 = vector.shape_cast %144 : vector<1x32x32xf32> to vector<32x32xf32>
    %c1_124 = arith.constant 1 : index
    %c0_125 = arith.constant 0 : index
    %c0_126 = arith.constant 0 : index
    %146 = vector.load %arg15[%c1_124, %c0_125, %c0_126] : memref<2x1x32xf32, #tpu.memory_space<vmem>>, vector<1x1x32xf32>
    %147 = vector.shape_cast %146 : vector<1x1x32xf32> to vector<1x32xf32>
    %c1_127 = arith.constant 1 : index
    %c0_128 = arith.constant 0 : index
    %c0_129 = arith.constant 0 : index
    %148 = vector.load %arg16[%c1_127, %c0_128, %c0_129] : memref<2x32x32xf32, #tpu.memory_space<vmem>>, vector<1x32x32xf32>
    %149 = vector.shape_cast %148 : vector<1x32x32xf32> to vector<32x32xf32>
    %c1_130 = arith.constant 1 : index
    %c0_131 = arith.constant 0 : index
    %c0_132 = arith.constant 0 : index
    %150 = vector.load %arg17[%c1_130, %c0_131, %c0_132] : memref<2x1x32xf32, #tpu.memory_space<vmem>>, vector<1x1x32xf32>
    %151 = vector.shape_cast %150 : vector<1x1x32xf32> to vector<1x32xf32>
    %c1_133 = arith.constant 1 : index
    %c0_134 = arith.constant 0 : index
    %c0_135 = arith.constant 0 : index
    %152 = vector.load %arg18[%c1_133, %c0_134, %c0_135] : memref<2x1x32xf32, #tpu.memory_space<vmem>>, vector<1x1x32xf32>
    %153 = vector.shape_cast %152 : vector<1x1x32xf32> to vector<1x32xf32>
    %c1_136 = arith.constant 1 : index
    %c0_137 = arith.constant 0 : index
    %c0_138 = arith.constant 0 : index
    %154 = vector.load %arg19[%c1_136, %c0_137, %c0_138] : memref<2x1x32xf32, #tpu.memory_space<vmem>>, vector<1x1x32xf32>
    %155 = vector.shape_cast %154 : vector<1x1x32xf32> to vector<1x32xf32>
    %156 = vector.shape_cast %123 : vector<8x32xf32> to vector<1x8x32xf32>
    %157 = vector.shape_cast %156 : vector<1x8x32xf32> to vector<1x8x32xf32>
    %158 = vector.broadcast %157 : vector<1x8x32xf32> to vector<4x8x32xf32>
    "tpu.trace_start"() <{level = 10 : i32, message = "hse,hed->hsd"}> : () -> ()
    %cst_139 = arith.constant dense<0.000000e+00> : vector<4x8x8xf32>
    %159 = tpu.matmul %158, %125, %cst_139 {dimension_numbers = #tpu.dot_dimension_numbers<[2], [1], [1], [2], [0, 0, 0, 1, 1, 2], [0], [0]>} : vector<4x8x32xf32>, vector<4x32x8xf32>, vector<4x8x8xf32> -> vector<4x8x8xf32>
    "tpu.trace_stop"() : () -> ()
    %160 = vector.broadcast %127 : vector<4x1x8xf32> to vector<4x8x8xf32>
    %161 = arith.addf %159, %160 : vector<4x8x8xf32>
    "tpu.trace_start"() <{level = 10 : i32, message = "hse,hed->hsd"}> : () -> ()
    %cst_140 = arith.constant dense<0.000000e+00> : vector<4x8x8xf32>
    %162 = tpu.matmul %158, %129, %cst_140 {dimension_numbers = #tpu.dot_dimension_numbers<[2], [1], [1], [2], [0, 0, 0, 1, 1, 2], [0], [0]>} : vector<4x8x32xf32>, vector<4x32x8xf32>, vector<4x8x8xf32> -> vector<4x8x8xf32>
    "tpu.trace_stop"() : () -> ()
    %163 = vector.broadcast %131 : vector<4x1x8xf32> to vector<4x8x8xf32>
    %164 = arith.addf %162, %163 : vector<4x8x8xf32>
    "tpu.trace_start"() <{level = 10 : i32, message = "hse,hed->hsd"}> : () -> ()
    %cst_141 = arith.constant dense<0.000000e+00> : vector<4x8x8xf32>
    %165 = tpu.matmul %158, %133, %cst_141 {dimension_numbers = #tpu.dot_dimension_numbers<[2], [1], [1], [2], [0, 0, 0, 1, 1, 2], [0], [0]>} : vector<4x8x32xf32>, vector<4x32x8xf32>, vector<4x8x8xf32> -> vector<4x8x8xf32>
    "tpu.trace_stop"() : () -> ()
    %166 = vector.broadcast %135 : vector<4x1x8xf32> to vector<4x8x8xf32>
    %167 = arith.addf %165, %166 : vector<4x8x8xf32>
    "tpu.trace_start"() <{level = 10 : i32, message = "hqd,hkd->hqk"}> : () -> ()
    %cst_142 = arith.constant dense<0.000000e+00> : vector<4x8x8xf32>
    %168 = tpu.matmul %161, %164, %cst_142 {dimension_numbers = #tpu.dot_dimension_numbers<[2], [2], [1], [1], [0, 0, 0, 1, 1, 1], [0], [0]>} : vector<4x8x8xf32>, vector<4x8x8xf32>, vector<4x8x8xf32> -> vector<4x8x8xf32>
    "tpu.trace_stop"() : () -> ()
    %169 = vector.broadcast %1 : f32 to vector<4x8x8xf32>
    %170 = arith.mulf %168, %169 : vector<4x8x8xf32>
    %cst_143 = arith.constant dense<0xFF800000> : vector<4x8xf32>
    %171 = vector.multi_reduction <maximumf>, %170, %cst_143 [2] : vector<4x8x8xf32> to vector<4x8xf32>
    %172 = vector.shape_cast %171 : vector<4x8xf32> to vector<4x8x1xf32>
    %173 = vector.broadcast %172 : vector<4x8x1xf32> to vector<4x8x8xf32>
    %174 = arith.subf %170, %173 : vector<4x8x8xf32>
    %175 = math.exp %174 : vector<4x8x8xf32>
    %cst_144 = arith.constant dense<0.000000e+00> : vector<4x8xf32>
    %176 = vector.multi_reduction <add>, %175, %cst_144 [2] : vector<4x8x8xf32> to vector<4x8xf32>
    %177 = vector.shape_cast %176 : vector<4x8xf32> to vector<4x8x1xf32>
    %178 = tpu.reciprocal %177 {approx = true} : vector<4x8x1xf32> -> vector<4x8x1xf32>
    %179 = vector.broadcast %178 : vector<4x8x1xf32> to vector<4x8x8xf32>
    %180 = arith.mulf %175, %179 : vector<4x8x8xf32>
    "tpu.trace_start"() <{level = 10 : i32, message = "hqk,hkd->hqd"}> : () -> ()
    %cst_145 = arith.constant dense<0.000000e+00> : vector<4x8x8xf32>
    %181 = tpu.matmul %180, %167, %cst_145 {dimension_numbers = #tpu.dot_dimension_numbers<[2], [1], [1], [2], [0, 0, 0, 1, 1, 2], [0], [0]>} : vector<4x8x8xf32>, vector<4x8x8xf32>, vector<4x8x8xf32> -> vector<4x8x8xf32>
    "tpu.trace_stop"() : () -> ()
    "tpu.trace_start"() <{level = 10 : i32, message = "hqd,hde->hqe"}> : () -> ()
    %cst_146 = arith.constant dense<0.000000e+00> : vector<4x8x32xf32>
    %182 = tpu.matmul %181, %137, %cst_146 {dimension_numbers = #tpu.dot_dimension_numbers<[2], [1], [1], [2], [0, 0, 0, 1, 1, 2], [0], [0]>} : vector<4x8x8xf32>, vector<4x8x32xf32>, vector<4x8x32xf32> -> vector<4x8x32xf32>
    "tpu.trace_stop"() : () -> ()
    %cst_147 = arith.constant dense<0.000000e+00> : vector<8x32xf32>
    %183 = vector.multi_reduction <add>, %182, %cst_147 [0] : vector<4x8x32xf32> to vector<8x32xf32>
    %184 = vector.broadcast %139 : vector<1x32xf32> to vector<8x32xf32>
    %185 = arith.addf %183, %184 : vector<8x32xf32>
    %186 = arith.addf %123, %185 : vector<8x32xf32>
    %cst_148 = arith.constant dense<0.000000e+00> : vector<8xf32>
    %187 = vector.multi_reduction <add>, %186, %cst_148 [1] : vector<8x32xf32> to vector<8xf32>
    %188 = vector.shape_cast %187 : vector<8xf32> to vector<8x1xf32>
    %cst_149 = arith.constant 3.200000e+01 : f32
    %189 = vector.broadcast %cst_149 : f32 to vector<8x1xf32>
    %190 = arith.divf %188, %189 : vector<8x1xf32>
    %191 = arith.mulf %186, %186 : vector<8x32xf32>
    %cst_150 = arith.constant dense<0.000000e+00> : vector<8xf32>
    %192 = vector.multi_reduction <add>, %191, %cst_150 [1] : vector<8x32xf32> to vector<8xf32>
    %193 = vector.shape_cast %192 : vector<8xf32> to vector<8x1xf32>
    %cst_151 = arith.constant 3.200000e+01 : f32
    %194 = vector.broadcast %cst_151 : f32 to vector<8x1xf32>
    %195 = arith.divf %193, %194 : vector<8x1xf32>
    %196 = arith.mulf %190, %190 : vector<8x1xf32>
    %197 = arith.subf %195, %196 : vector<8x1xf32>
    %198 = vector.broadcast %190 : vector<8x1xf32> to vector<8x32xf32>
    %199 = arith.subf %186, %198 : vector<8x32xf32>
    %cst_152 = arith.constant 9.99999974E-6 : f32
    %200 = vector.broadcast %cst_152 : f32 to vector<8x1xf32>
    %201 = arith.addf %197, %200 : vector<8x1xf32>
    %202 = math.rsqrt %201 : vector<8x1xf32>
    %203 = vector.broadcast %202 : vector<8x1xf32> to vector<8x32xf32>
    %204 = arith.mulf %199, %203 : vector<8x32xf32>
    %205 = vector.broadcast %141 : vector<1x32xf32> to vector<8x32xf32>
    %206 = arith.mulf %204, %205 : vector<8x32xf32>
    %207 = vector.broadcast %143 : vector<1x32xf32> to vector<8x32xf32>
    %208 = arith.addf %206, %207 : vector<8x32xf32>
    %cst_153 = arith.constant dense<0.000000e+00> : vector<8x32xf32>
    %209 = tpu.matmul %208, %145, %cst_153 {dimension_numbers = #tpu.dot_dimension_numbers<[1], [0], [0], [1], [0, 0, 1, 1], [], []>} : vector<8x32xf32>, vector<32x32xf32>, vector<8x32xf32> -> vector<8x32xf32>
    %210 = vector.broadcast %147 : vector<1x32xf32> to vector<8x32xf32>
    %211 = arith.addf %209, %210 : vector<8x32xf32>
    %cst_154 = arith.constant 0.000000e+00 : f32
    %212 = vector.broadcast %cst_154 : f32 to vector<8x32xf32>
    %213 = arith.maximumf %211, %212 : vector<8x32xf32>
    %cst_155 = arith.constant dense<0.000000e+00> : vector<8x32xf32>
    %214 = tpu.matmul %213, %149, %cst_155 {dimension_numbers = #tpu.dot_dimension_numbers<[1], [0], [0], [1], [0, 0, 1, 1], [], []>} : vector<8x32xf32>, vector<32x32xf32>, vector<8x32xf32> -> vector<8x32xf32>
    %215 = vector.broadcast %151 : vector<1x32xf32> to vector<8x32xf32>
    %216 = arith.addf %214, %215 : vector<8x32xf32>
    %217 = arith.addf %208, %216 : vector<8x32xf32>
    %cst_156 = arith.constant dense<0.000000e+00> : vector<8xf32>
    %218 = vector.multi_reduction <add>, %217, %cst_156 [1] : vector<8x32xf32> to vector<8xf32>
    %219 = vector.shape_cast %218 : vector<8xf32> to vector<8x1xf32>
    %cst_157 = arith.constant 3.200000e+01 : f32
    %220 = vector.broadcast %cst_157 : f32 to vector<8x1xf32>
    %221 = arith.divf %219, %220 : vector<8x1xf32>
    %222 = arith.mulf %217, %217 : vector<8x32xf32>
    %cst_158 = arith.constant dense<0.000000e+00> : vector<8xf32>
    %223 = vector.multi_reduction <add>, %222, %cst_158 [1] : vector<8x32xf32> to vector<8xf32>
    %224 = vector.shape_cast %223 : vector<8xf32> to vector<8x1xf32>
    %cst_159 = arith.constant 3.200000e+01 : f32
    %225 = vector.broadcast %cst_159 : f32 to vector<8x1xf32>
    %226 = arith.divf %224, %225 : vector<8x1xf32>
    %227 = arith.mulf %221, %221 : vector<8x1xf32>
    %228 = arith.subf %226, %227 : vector<8x1xf32>
    %229 = vector.broadcast %221 : vector<8x1xf32> to vector<8x32xf32>
    %230 = arith.subf %217, %229 : vector<8x32xf32>
    %cst_160 = arith.constant 9.99999974E-6 : f32
    %231 = vector.broadcast %cst_160 : f32 to vector<8x1xf32>
    %232 = arith.addf %228, %231 : vector<8x1xf32>
    %233 = math.rsqrt %232 : vector<8x1xf32>
    %234 = vector.broadcast %233 : vector<8x1xf32> to vector<8x32xf32>
    %235 = arith.mulf %230, %234 : vector<8x32xf32>
    %236 = vector.broadcast %153 : vector<1x32xf32> to vector<8x32xf32>
    %237 = arith.mulf %235, %236 : vector<8x32xf32>
    %238 = vector.broadcast %155 : vector<1x32xf32> to vector<8x32xf32>
    %239 = arith.addf %237, %238 : vector<8x32xf32>
    %c0_161 = arith.constant 0 : index
    %c0_162 = arith.constant 0 : index
    %240 = vector.load %arg20[%c0_161, %c0_162] : memref<32x128xf32, #tpu.memory_space<vmem>>, vector<32x128xf32>
    %cst_163 = arith.constant dense<0.000000e+00> : vector<8x128xf32>
    %241 = tpu.matmul %239, %240, %cst_163 {dimension_numbers = #tpu.dot_dimension_numbers<[1], [0], [0], [1], [0, 0, 1, 1], [], []>} : vector<8x32xf32>, vector<32x128xf32>, vector<8x128xf32> -> vector<8x128xf32>
    %c0_164 = arith.constant 0 : index
    %c0_165 = arith.constant 0 : index
    %242 = vector.load %arg21[%c0_164, %c0_165] : memref<1x128xf32, #tpu.memory_space<vmem>>, vector<1x128xf32>
    %243 = vector.broadcast %242 : vector<1x128xf32> to vector<8x128xf32>
    %244 = arith.addf %241, %243 : vector<8x128xf32>
    %245 = vector.shape_cast %244 : vector<8x128xf32> to vector<1x8x128xf32>
    %c0_166 = arith.constant 0 : index
    %c0_167 = arith.constant 0 : index
    %c0_168 = arith.constant 0 : index
    %246 = vector.load %arg22[%c0_166, %c0_167, %c0_168] : memref<1x8x128xf32, #tpu.memory_space<vmem>>, vector<1x8x128xf32>
    tpu.vector_store %arg22[%c0_166, %c0_167, %c0_168], %245 {strides = array<i32>} : memref<1x8x128xf32, #tpu.memory_space<vmem>>, vector<1x8x128xf32>,
    return
  }
  func.func @transform_0(%arg0: i32) -> (i32, i32, i32) {
    %c0_i32 = arith.constant 0 : i32
    %c0_i32_0 = arith.constant 0 : i32
    %c0_i32_1 = arith.constant 0 : i32
    return %arg0, %c0_i32, %c0_i32_0 : i32, i32, i32
  }
  func.func @transform_1(%arg0: i32) -> (i32, i32) {
    %c0_i32 = arith.constant 0 : i32
    %c0_i32_0 = arith.constant 0 : i32
    %c0_i32_1 = arith.constant 0 : i32
    return %c0_i32, %c0_i32_0 : i32, i32
  }
  func.func @transform_2(%arg0: i32) -> (i32, i32) {
    %c0_i32 = arith.constant 0 : i32
    %c0_i32_0 = arith.constant 0 : i32
    %c0_i32_1 = arith.constant 0 : i32
    return %c0_i32, %c0_i32_0 : i32, i32
  }
  func.func @transform_3(%arg0: i32) -> (i32, i32, i32, i32) {
    %c0_i32 = arith.constant 0 : i32
    %c0_i32_0 = arith.constant 0 : i32
    %c0_i32_1 = arith.constant 0 : i32
    %c0_i32_2 = arith.constant 0 : i32
    %c0_i32_3 = arith.constant 0 : i32
    return %c0_i32, %c0_i32_0, %c0_i32_1, %c0_i32_2 : i32, i32, i32, i32
  }
  func.func @transform_4(%arg0: i32) -> (i32, i32, i32, i32) {
    %c0_i32 = arith.constant 0 : i32
    %c0_i32_0 = arith.constant 0 : i32
    %c0_i32_1 = arith.constant 0 : i32
    %c0_i32_2 = arith.constant 0 : i32
    %c0_i32_3 = arith.constant 0 : i32
    return %c0_i32, %c0_i32_0, %c0_i32_1, %c0_i32_2 : i32, i32, i32, i32
  }
  func.func @transform_5(%arg0: i32) -> (i32, i32, i32, i32) {
    %c0_i32 = arith.constant 0 : i32
    %c0_i32_0 = arith.constant 0 : i32
    %c0_i32_1 = arith.constant 0 : i32
    %c0_i32_2 = arith.constant 0 : i32
    %c0_i32_3 = arith.constant 0 : i32
    return %c0_i32, %c0_i32_0, %c0_i32_1, %c0_i32_2 : i32, i32, i32, i32
  }
  func.func @transform_6(%arg0: i32) -> (i32, i32, i32, i32) {
    %c0_i32 = arith.constant 0 : i32
    %c0_i32_0 = arith.constant 0 : i32
    %c0_i32_1 = arith.constant 0 : i32
    %c0_i32_2 = arith.constant 0 : i32
    %c0_i32_3 = arith.constant 0 : i32
    return %c0_i32, %c0_i32_0, %c0_i32_1, %c0_i32_2 : i32, i32, i32, i32
  }
  func.func @transform_7(%arg0: i32) -> (i32, i32, i32, i32) {
    %c0_i32 = arith.constant 0 : i32
    %c0_i32_0 = arith.constant 0 : i32
    %c0_i32_1 = arith.constant 0 : i32
    %c0_i32_2 = arith.constant 0 : i32
    %c0_i32_3 = arith.constant 0 : i32
    return %c0_i32, %c0_i32_0, %c0_i32_1, %c0_i32_2 : i32, i32, i32, i32
  }
  func.func @transform_8(%arg0: i32) -> (i32, i32, i32, i32) {
    %c0_i32 = arith.constant 0 : i32
    %c0_i32_0 = arith.constant 0 : i32
    %c0_i32_1 = arith.constant 0 : i32
    %c0_i32_2 = arith.constant 0 : i32
    %c0_i32_3 = arith.constant 0 : i32
    return %c0_i32, %c0_i32_0, %c0_i32_1, %c0_i32_2 : i32, i32, i32, i32
  }
  func.func @transform_9(%arg0: i32) -> (i32, i32, i32, i32) {
    %c0_i32 = arith.constant 0 : i32
    %c0_i32_0 = arith.constant 0 : i32
    %c0_i32_1 = arith.constant 0 : i32
    %c0_i32_2 = arith.constant 0 : i32
    %c0_i32_3 = arith.constant 0 : i32
    return %c0_i32, %c0_i32_0, %c0_i32_1, %c0_i32_2 : i32, i32, i32, i32
  }
  func.func @transform_10(%arg0: i32) -> (i32, i32, i32) {
    %c0_i32 = arith.constant 0 : i32
    %c0_i32_0 = arith.constant 0 : i32
    %c0_i32_1 = arith.constant 0 : i32
    %c0_i32_2 = arith.constant 0 : i32
    return %c0_i32, %c0_i32_0, %c0_i32_1 : i32, i32, i32
  }
  func.func @transform_11(%arg0: i32) -> (i32, i32, i32) {
    %c0_i32 = arith.constant 0 : i32
    %c0_i32_0 = arith.constant 0 : i32
    %c0_i32_1 = arith.constant 0 : i32
    %c0_i32_2 = arith.constant 0 : i32
    return %c0_i32, %c0_i32_0, %c0_i32_1 : i32, i32, i32
  }
  func.func @transform_12(%arg0: i32) -> (i32, i32, i32) {
    %c0_i32 = arith.constant 0 : i32
    %c0_i32_0 = arith.constant 0 : i32
    %c0_i32_1 = arith.constant 0 : i32
    %c0_i32_2 = arith.constant 0 : i32
    return %c0_i32, %c0_i32_0, %c0_i32_1 : i32, i32, i32
  }
  func.func @transform_13(%arg0: i32) -> (i32, i32, i32) {
    %c0_i32 = arith.constant 0 : i32
    %c0_i32_0 = arith.constant 0 : i32
    %c0_i32_1 = arith.constant 0 : i32
    %c0_i32_2 = arith.constant 0 : i32
    return %c0_i32, %c0_i32_0, %c0_i32_1 : i32, i32, i32
  }
  func.func @transform_14(%arg0: i32) -> (i32, i32, i32) {
    %c0_i32 = arith.constant 0 : i32
    %c0_i32_0 = arith.constant 0 : i32
    %c0_i32_1 = arith.constant 0 : i32
    %c0_i32_2 = arith.constant 0 : i32
    return %c0_i32, %c0_i32_0, %c0_i32_1 : i32, i32, i32
  }
  func.func @transform_15(%arg0: i32) -> (i32, i32, i32) {
    %c0_i32 = arith.constant 0 : i32
    %c0_i32_0 = arith.constant 0 : i32
    %c0_i32_1 = arith.constant 0 : i32
    %c0_i32_2 = arith.constant 0 : i32
    return %c0_i32, %c0_i32_0, %c0_i32_1 : i32, i32, i32
  }
  func.func @transform_16(%arg0: i32) -> (i32, i32, i32) {
    %c0_i32 = arith.constant 0 : i32
    %c0_i32_0 = arith.constant 0 : i32
    %c0_i32_1 = arith.constant 0 : i32
    %c0_i32_2 = arith.constant 0 : i32
    return %c0_i32, %c0_i32_0, %c0_i32_1 : i32, i32, i32
  }
  func.func @transform_17(%arg0: i32) -> (i32, i32, i32) {
    %c0_i32 = arith.constant 0 : i32
    %c0_i32_0 = arith.constant 0 : i32
    %c0_i32_1 = arith.constant 0 : i32
    %c0_i32_2 = arith.constant 0 : i32
    return %c0_i32, %c0_i32_0, %c0_i32_1 : i32, i32, i32
  }
  func.func @transform_18(%arg0: i32) -> (i32, i32, i32) {
    %c0_i32 = arith.constant 0 : i32
    %c0_i32_0 = arith.constant 0 : i32
    %c0_i32_1 = arith.constant 0 : i32
    %c0_i32_2 = arith.constant 0 : i32
    return %c0_i32, %c0_i32_0, %c0_i32_1 : i32, i32, i32
  }
  func.func @transform_19(%arg0: i32) -> (i32, i32) {
    %c0_i32 = arith.constant 0 : i32
    %c0_i32_0 = arith.constant 0 : i32
    %c0_i32_1 = arith.constant 0 : i32
    return %c0_i32, %c0_i32_0 : i32, i32
  }
  func.func @transform_20(%arg0: i32) -> (i32, i32) {
    %c0_i32 = arith.constant 0 : i32
    %c0_i32_0 = arith.constant 0 : i32
    %c0_i32_1 = arith.constant 0 : i32
    return %c0_i32, %c0_i32_0 : i32, i32
  }
  func.func @transform_21(%arg0: i32) -> (i32, i32, i32) {
    %c0_i32 = arith.constant 0 : i32
    %c0_i32_0 = arith.constant 0 : i32
    %c0_i32_1 = arith.constant 0 : i32
    return %arg0, %c0_i32, %c0_i32_0 : i32, i32, i32
  }
}

</mosaic_0001>

<llo_original>
// kernel: tpu_custom_call.1
$region0: #{tpu_custom_call.1}
  #allocation0 [shape = 'u32[]', space=smem, size = 0x4, offset = 0x4, fixed_abs, tag = 'smem constant byte address 0x4 - core index']
  #allocation1 [shape = 'u32[72,128]{1,0:T(1,128)}', space=vmem, size = 0x9000, scoped, tag = 'internal scratch']
  %s0 = inlined_call_operand.vmem [shape: f32[2,8,16], index: 0, kind: input, shape index: {}]
  %s1 = inlined_call_operand.vmem [shape: f32[16,32], index: 1, kind: input, shape index: {}]
  %s2 = inlined_call_operand.vmem [shape: f32[8,32], index: 2, kind: input, shape index: {}]
  %s3 = inlined_call_operand.vmem [shape: f32[2,4,32,8], index: 3, kind: input, shape index: {}]
  %s4 = inlined_call_operand.vmem [shape: f32[2,4,1,8], index: 4, kind: input, shape index: {}]
  %s5 = inlined_call_operand.vmem [shape: f32[2,4,32,8], index: 5, kind: input, shape index: {}]
  %s6 = inlined_call_operand.vmem [shape: f32[2,4,1,8], index: 6, kind: input, shape index: {}]
  %s7 = inlined_call_operand.vmem [shape: f32[2,4,32,8], index: 7, kind: input, shape index: {}]
  %s8 = inlined_call_operand.vmem [shape: f32[2,4,1,8], index: 8, kind: input, shape index: {}]
  %s9 = inlined_call_operand.vmem [shape: f32[2,4,8,32], index: 9, kind: input, shape index: {}]
  %s10 = inlined_call_operand.vmem [shape: f32[2,1,32], index: 10, kind: input, shape index: {}]
  %s11 = inlined_call_operand.vmem [shape: f32[2,1,32], index: 11, kind: input, shape index: {}]
  %s12 = inlined_call_operand.vmem [shape: f32[2,1,32], index: 12, kind: input, shape index: {}]
  %s13 = inlined_call_operand.vmem [shape: f32[2,32,32], index: 13, kind: input, shape index: {}]
  %s14 = inlined_call_operand.vmem [shape: f32[2,1,32], index: 14, kind: input, shape index: {}]
  %s15 = inlined_call_operand.vmem [shape: f32[2,32,32], index: 15, kind: input, shape index: {}]
  %s16 = inlined_call_operand.vmem [shape: f32[2,1,32], index: 16, kind: input, shape index: {}]
  %s17 = inlined_call_operand.vmem [shape: f32[2,1,32], index: 17, kind: input, shape index: {}]
  %s18 = inlined_call_operand.vmem [shape: f32[2,1,32], index: 18, kind: input, shape index: {}]
  %s19 = inlined_call_operand.vmem [shape: f32[32,128], index: 19, kind: input, shape index: {}]
  %s20 = inlined_call_operand.vmem [shape: f32[1,128], index: 20, kind: input, shape index: {}]
  %s21 = inlined_call_operand.hbm [shape: f32[2,8,128], index: 21, kind: output, shape index: {}]
  %s22 = sld [smem:[#allocation0]]
  $region117: #{tpu_custom_call.1} parent=0
    _
  %s24 = ssub.s32 1, %s22
  %s25 = scalar_select 0, %s24, %s22
  $region1: #{tpu_custom_call.1} parent=0
    #allocation2 [shape = 'u8[8192]{0}', space=vmem, size = 0x2000, scoped, tag = 'output window, operand 0']
    #allocation3 [shape = 's32[2]{0}', space=sflag, size = 0x8, scoped, tag = 'scoped memory for tpu_custom_call.1']
    %26 = vsyncpa [#allocation3], 0
    %s27 = scalar_lea.sflag [#allocation3], 1
    %28 = vsyncpa %s27, 0
    loop: start=0, step=1, limit=4
    $region2: #{tpu_custom_call.1} parent=1 // loop_pre_header
      _
    $region3: #{tpu_custom_call.1} parent=1 // loop_header
      %s30 = sphi 0, %s34
      %p31 = scmp.ge.s32.totalorder %s30, 4
      %s40 = sphi 0, %s42
      %s43 = sphi 0, %s40
      %s44 = sphi 0, %s43
      %s60 = sphi 0, %s44
      %s64 = sphi 0, %s64
      %s66 = sphi 0, %s64
      %s67 = sphi 0, %s66
      %s81 = sphi 0, %s67
      %s85 = sphi 0, %s85
      %s87 = sphi 0, %s85
      %s88 = sphi 0, %s87
      %s102 = sphi 0, %s88
      %s106 = sphi 0, %s106
      %s108 = sphi 0, %s106
      %s109 = sphi 0, %s108
      %s123 = sphi 0, %s109
      %s127 = sphi 0, %s127
      %s129 = sphi 0, %s127
      %s130 = sphi 0, %s129
      %s144 = sphi 0, %s130
      %s148 = sphi 0, %s148
      %s150 = sphi 0, %s148
      %s151 = sphi 0, %s150
      %s165 = sphi 0, %s151
      %s169 = sphi 0, %s169
      %s171 = sphi 0, %s169
      %s172 = sphi 0, %s171
      %s186 = sphi 0, %s172
      %s190 = sphi 0, %s190
      %s192 = sphi 0, %s190
      %s193 = sphi 0, %s192
      %s207 = sphi 0, %s193
      %s211 = sphi 0, %s211
      %s213 = sphi 0, %s211
      %s214 = sphi 0, %s213
      %s228 = sphi 0, %s214
      %s232 = sphi 0, %s232
      %s234 = sphi 0, %s232
      %s235 = sphi 0, %s234
      %s249 = sphi 0, %s235
      %s253 = sphi 0, %s253
      %s255 = sphi 0, %s253
      %s256 = sphi 0, %s255
      %s270 = sphi 0, %s256
      %s274 = sphi 0, %s274
      %s276 = sphi 0, %s274
      %s277 = sphi 0, %s276
      %s291 = sphi 0, %s277
      %s295 = sphi 0, %s295
      %s297 = sphi 0, %s295
      %s298 = sphi 0, %s297
      %s312 = sphi 0, %s298
      %s316 = sphi 0, %s316
      %s318 = sphi 0, %s316
      %s319 = sphi 0, %s318
      %s333 = sphi 0, %s319
      %s337 = sphi 0, %s337
      %s339 = sphi 0, %s337
      %s340 = sphi 0, %s339
      %s354 = sphi 0, %s340
      %s358 = sphi 0, %s358
      %s360 = sphi 0, %s358
      %s361 = sphi 0, %s360
      %s375 = sphi 0, %s361
      %s379 = sphi 0, %s379
      %s381 = sphi 0, %s379
      %s382 = sphi 0, %s381
      %s396 = sphi 0, %s382
      %s400 = sphi 0, %s400
      %s402 = sphi 0, %s400
      %s403 = sphi 0, %s402
      %s417 = sphi 0, %s403
      %s421 = sphi 0, %s421
      %s423 = sphi 0, %s421
      %s424 = sphi 0, %s423
      %s438 = sphi 0, %s424
      %s442 = sphi 0, %s442
      %s444 = sphi 0, %s442
      %s445 = sphi 0, %s444
      %s459 = sphi 0, %s445
      %s463 = sphi 0, %s463
      %s465 = sphi 0, %s463
      %s466 = sphi 0, %s465
      %s480 = sphi 0, %s466
      %s486 = sphi 0, %s488
      %s489 = sphi 0, %s486
      %s490 = sphi 0, %s489
      %s506 = sphi 0, %s490
    $region4: #{tpu_custom_call.1} parent=1 // loop_header_branch
      %33 = sbr.rel (%p31) target = $region8
    $region5: #{tpu_custom_call.1} parent=1 // loop_body
      %s35 = ssub.s32 %s30, 1
      %s36 = ssub.s32 %s30, 2
      %s37 = sadd.s32 %s30, 1
      %s38 = ssub.s32 %s30, %s37
      %p39 = scmp.eq.s32.totalorder %s38, 0
      %s41 = sadd.s32 %s40, 1
      %s42 = scalar_select %p39, %s40, %s41
      %p45 = pneg %p39
      %p46 = scmp.eq.s32.totalorder %s30, 1
      %p47 = por %p45, %p46
      %p48 = scmp.ne.s32.totalorder %s40, %s43
      %p49 = scmp.eq.s32.totalorder %s30, 0
      %p50 = por %p48, %p49
      %p51 = scmp.ne.s32.totalorder %s40, %s43
      %p52 = scmp.eq.s32.totalorder %s35, 1
      %p53 = por %p51, %p52
      %p54 = scmp.ne.s32.totalorder %s43, %s44
      %p55 = scmp.eq.s32.totalorder %s35, 0
      %p56 = por %p54, %p55
      %p57 = scmp.ne.s32.totalorder %s43, %s44
      %p58 = scmp.eq.s32.totalorder %s36, 1
      %p59 = por %p57, %p58
      %p61 = scmp.ne.s32.totalorder %s44, %s60
      %p62 = scmp.eq.s32.totalorder %s36, 0
      %p63 = por %p61, %p62
      %s65 = sadd.s32 %s64, 1
      %p68 = scmp.eq.s32.totalorder %s30, 1
      %p69 = scmp.ne.s32.totalorder %s64, %s66
      %p70 = scmp.eq.s32.totalorder %s30, 0
      %p71 = por %p69, %p70
      %p72 = scmp.ne.s32.totalorder %s64, %s66
      %p73 = scmp.eq.s32.totalorder %s35, 1
      %p74 = por %p72, %p73
      %p75 = scmp.ne.s32.totalorder %s66, %s67
      %p76 = scmp.eq.s32.totalorder %s35, 0
      %p77 = por %p75, %p76
      %p78 = scmp.ne.s32.totalorder %s66, %s67
      %p79 = scmp.eq.s32.totalorder %s36, 1
      %p80 = por %p78, %p79
      %p82 = scmp.ne.s32.totalorder %s67, %s81
      %p83 = scmp.eq.s32.totalorder %s36, 0
      %p84 = por %p82, %p83
      %s86 = sadd.s32 %s85, 1
      %p89 = scmp.eq.s32.totalorder %s30, 1
      %p90 = scmp.ne.s32.totalorder %s85, %s87
      %p91 = scmp.eq.s32.totalorder %s30, 0
      %p92 = por %p90, %p91
      %p93 = scmp.ne.s32.totalorder %s85, %s87
      %p94 = scmp.eq.s32.totalorder %s35, 1
      %p95 = por %p93, %p94
      %p96 = scmp.ne.s32.totalorder %s87, %s88
      %p97 = scmp.eq.s32.totalorder %s35, 0
      %p98 = por %p96, %p97
      %p99 = scmp.ne.s32.totalorder %s87, %s88
      %p100 = scmp.eq.s32.totalorder %s36, 1
      %p101 = por %p99, %p100
      %p103 = scmp.ne.s32.totalorder %s88, %s102
      %p104 = scmp.eq.s32.totalorder %s36, 0
      %p105 = por %p103, %p104
      %s107 = sadd.s32 %s106, 1
      %p110 = scmp.eq.s32.totalorder %s30, 1
      %p111 = scmp.ne.s32.totalorder %s106, %s108
      %p112 = scmp.eq.s32.totalorder %s30, 0
      %p113 = por %p111, %p112
      %p114 = scmp.ne.s32.totalorder %s106, %s108
      %p115 = scmp.eq.s32.totalorder %s35, 1
      %p116 = por %p114, %p115
      %p117 = scmp.ne.s32.totalorder %s108, %s109
      %p118 = scmp.eq.s32.totalorder %s35, 0
      %p119 = por %p117, %p118
      %p120 = scmp.ne.s32.totalorder %s108, %s109
      %p121 = scmp.eq.s32.totalorder %s36, 1
      %p122 = por %p120, %p121
      %p124 = scmp.ne.s32.totalorder %s109, %s123
      %p125 = scmp.eq.s32.totalorder %s36, 0
      %p126 = por %p124, %p125
      %s128 = sadd.s32 %s127, 1
      %p131 = scmp.eq.s32.totalorder %s30, 1
      %p132 = scmp.ne.s32.totalorder %s127, %s129
      %p133 = scmp.eq.s32.totalorder %s30, 0
      %p134 = por %p132, %p133
      %p135 = scmp.ne.s32.totalorder %s127, %s129
      %p136 = scmp.eq.s32.totalorder %s35, 1
      %p137 = por %p135, %p136
      %p138 = scmp.ne.s32.totalorder %s129, %s130
      %p139 = scmp.eq.s32.totalorder %s35, 0
      %p140 = por %p138, %p139
      %p141 = scmp.ne.s32.totalorder %s129, %s130
      %p142 = scmp.eq.s32.totalorder %s36, 1
      %p143 = por %p141, %p142
      %p145 = scmp.ne.s32.totalorder %s130, %s144
      %p146 = scmp.eq.s32.totalorder %s36, 0
      %p147 = por %p145, %p146
      %s149 = sadd.s32 %s148, 1
      %p152 = scmp.eq.s32.totalorder %s30, 1
      %p153 = scmp.ne.s32.totalorder %s148, %s150
      %p154 = scmp.eq.s32.totalorder %s30, 0
      %p155 = por %p153, %p154
      %p156 = scmp.ne.s32.totalorder %s148, %s150
      %p157 = scmp.eq.s32.totalorder %s35, 1
      %p158 = por %p156, %p157
      %p159 = scmp.ne.s32.totalorder %s150, %s151
      %p160 = scmp.eq.s32.totalorder %s35, 0
      %p161 = por %p159, %p160
      %p162 = scmp.ne.s32.totalorder %s150, %s151
      %p163 = scmp.eq.s32.totalorder %s36, 1
      %p164 = por %p162, %p163
      %p166 = scmp.ne.s32.totalorder %s151, %s165
      %p167 = scmp.eq.s32.totalorder %s36, 0
      %p168 = por %p166, %p167
      %s170 = sadd.s32 %s169, 1
      %p173 = scmp.eq.s32.totalorder %s30, 1
      %p174 = scmp.ne.s32.totalorder %s169, %s171
      %p175 = scmp.eq.s32.totalorder %s30, 0
      %p176 = por %p174, %p175
      %p177 = scmp.ne.s32.totalorder %s169, %s171
      %p178 = scmp.eq.s32.totalorder %s35, 1
      %p179 = por %p177, %p178
      %p180 = scmp.ne.s32.totalorder %s171, %s172
      %p181 = scmp.eq.s32.totalorder %s35, 0
      %p182 = por %p180, %p181
      %p183 = scmp.ne.s32.totalorder %s171, %s172
      %p184 = scmp.eq.s32.totalorder %s36, 1
      %p185 = por %p183, %p184
      %p187 = scmp.ne.s32.totalorder %s172, %s186
      %p188 = scmp.eq.s32.totalorder %s36, 0
      %p189 = por %p187, %p188
      %s191 = sadd.s32 %s190, 1
      %p194 = scmp.eq.s32.totalorder %s30, 1
      %p195 = scmp.ne.s32.totalorder %s190, %s192
      %p196 = scmp.eq.s32.totalorder %s30, 0
      %p197 = por %p195, %p196
      %p198 = scmp.ne.s32.totalorder %s190, %s192
      %p199 = scmp.eq.s32.totalorder %s35, 1
      %p200 = por %p198, %p199
      %p201 = scmp.ne.s32.totalorder %s192, %s193
      %p202 = scmp.eq.s32.totalorder %s35, 0
      %p203 = por %p201, %p202
      %p204 = scmp.ne.s32.totalorder %s192, %s193
      %p205 = scmp.eq.s32.totalorder %s36, 1
      %p206 = por %p204, %p205
      %p208 = scmp.ne.s32.totalorder %s193, %s207
      %p209 = scmp.eq.s32.totalorder %s36, 0
      %p210 = por %p208, %p209
      %s212 = sadd.s32 %s211, 1
      %p215 = scmp.eq.s32.totalorder %s30, 1
      %p216 = scmp.ne.s32.totalorder %s211, %s213
      %p217 = scmp.eq.s32.totalorder %s30, 0
      %p218 = por %p216, %p217
      %p219 = scmp.ne.s32.totalorder %s211, %s213
      %p220 = scmp.eq.s32.totalorder %s35, 1
      %p221 = por %p219, %p220
      %p222 = scmp.ne.s32.totalorder %s213, %s214
      %p223 = scmp.eq.s32.totalorder %s35, 0
      %p224 = por %p222, %p223
      %p225 = scmp.ne.s32.totalorder %s213, %s214
      %p226 = scmp.eq.s32.totalorder %s36, 1
      %p227 = por %p225, %p226
      %p229 = scmp.ne.s32.totalorder %s214, %s228
      %p230 = scmp.eq.s32.totalorder %s36, 0
      %p231 = por %p229, %p230
      %s233 = sadd.s32 %s232, 1
      %p236 = scmp.eq.s32.totalorder %s30, 1
      %p237 = scmp.ne.s32.totalorder %s232, %s234
      %p238 = scmp.eq.s32.totalorder %s30, 0
      %p239 = por %p237, %p238
      %p240 = scmp.ne.s32.totalorder %s232, %s234
      %p241 = scmp.eq.s32.totalorder %s35, 1
      %p242 = por %p240, %p241
      %p243 = scmp.ne.s32.totalorder %s234, %s235
      %p244 = scmp.eq.s32.totalorder %s35, 0
      %p245 = por %p243, %p244
      %p246 = scmp.ne.s32.totalorder %s234, %s235
      %p247 = scmp.eq.s32.totalorder %s36, 1
      %p248 = por %p246, %p247
      %p250 = scmp.ne.s32.totalorder %s235, %s249
      %p251 = scmp.eq.s32.totalorder %s36, 0
      %p252 = por %p250, %p251
      %s254 = sadd.s32 %s253, 1
      %p257 = scmp.eq.s32.totalorder %s30, 1
      %p258 = scmp.ne.s32.totalorder %s253, %s255
      %p259 = scmp.eq.s32.totalorder %s30, 0
      %p260 = por %p258, %p259
      %p261 = scmp.ne.s32.totalorder %s253, %s255
      %p262 = scmp.eq.s32.totalorder %s35, 1
      %p263 = por %p261, %p262
      %p264 = scmp.ne.s32.totalorder %s255, %s256
      %p265 = scmp.eq.s32.totalorder %s35, 0
      %p266 = por %p264, %p265
      %p267 = scmp.ne.s32.totalorder %s255, %s256
      %p268 = scmp.eq.s32.totalorder %s36, 1
      %p269 = por %p267, %p268
      %p271 = scmp.ne.s32.totalorder %s256, %s270
      %p272 = scmp.eq.s32.totalorder %s36, 0
      %p273 = por %p271, %p272
      %s275 = sadd.s32 %s274, 1
      %p278 = scmp.eq.s32.totalorder %s30, 1
      %p279 = scmp.ne.s32.totalorder %s274, %s276
      %p280 = scmp.eq.s32.totalorder %s30, 0
      %p281 = por %p279, %p280
      %p282 = scmp.ne.s32.totalorder %s274, %s276
      %p283 = scmp.eq.s32.totalorder %s35, 1
      %p284 = por %p282, %p283
      %p285 = scmp.ne.s32.totalorder %s276, %s277
      %p286 = scmp.eq.s32.totalorder %s35, 0
      %p287 = por %p285, %p286
      %p288 = scmp.ne.s32.totalorder %s276, %s277
      %p289 = scmp.eq.s32.totalorder %s36, 1
      %p290 = por %p288, %p289
      %p292 = scmp.ne.s32.totalorder %s277, %s291
      %p293 = scmp.eq.s32.totalorder %s36, 0
      %p294 = por %p292, %p293
      %s296 = sadd.s32 %s295, 1
      %p299 = scmp.eq.s32.totalorder %s30, 1
      %p300 = scmp.ne.s32.totalorder %s295, %s297
      %p301 = scmp.eq.s32.totalorder %s30, 0
      %p302 = por %p300, %p301
      %p303 = scmp.ne.s32.totalorder %s295, %s297
      %p304 = scmp.eq.s32.totalorder %s35, 1
      %p305 = por %p303, %p304
      %p306 = scmp.ne.s32.totalorder %s297, %s298
      %p307 = scmp.eq.s32.totalorder %s35, 0
      %p308 = por %p306, %p307
      %p309 = scmp.ne.s32.totalorder %s297, %s298
      %p310 = scmp.eq.s32.totalorder %s36, 1
      %p311 = por %p309, %p310
      %p313 = scmp.ne.s32.totalorder %s298, %s312
      %p314 = scmp.eq.s32.totalorder %s36, 0
      %p315 = por %p313, %p314
      %s317 = sadd.s32 %s316, 1
      %p320 = scmp.eq.s32.totalorder %s30, 1
      %p321 = scmp.ne.s32.totalorder %s316, %s318
      %p322 = scmp.eq.s32.totalorder %s30, 0
      %p323 = por %p321, %p322
      %p324 = scmp.ne.s32.totalorder %s316, %s318
      %p325 = scmp.eq.s32.totalorder %s35, 1
      %p326 = por %p324, %p325
      %p327 = scmp.ne.s32.totalorder %s318, %s319
      %p328 = scmp.eq.s32.totalorder %s35, 0
      %p329 = por %p327, %p328
      %p330 = scmp.ne.s32.totalorder %s318, %s319
      %p331 = scmp.eq.s32.totalorder %s36, 1
      %p332 = por %p330, %p331
      %p334 = scmp.ne.s32.totalorder %s319, %s333
      %p335 = scmp.eq.s32.totalorder %s36, 0
      %p336 = por %p334, %p335
      %s338 = sadd.s32 %s337, 1
      %p341 = scmp.eq.s32.totalorder %s30, 1
      %p342 = scmp.ne.s32.totalorder %s337, %s339
      %p343 = scmp.eq.s32.totalorder %s30, 0
      %p344 = por %p342, %p343
      %p345 = scmp.ne.s32.totalorder %s337, %s339
      %p346 = scmp.eq.s32.totalorder %s35, 1
      %p347 = por %p345, %p346
      %p348 = scmp.ne.s32.totalorder %s339, %s340
      %p349 = scmp.eq.s32.totalorder %s35, 0
      %p350 = por %p348, %p349
      %p351 = scmp.ne.s32.totalorder %s339, %s340
      %p352 = scmp.eq.s32.totalorder %s36, 1
      %p353 = por %p351, %p352
      %p355 = scmp.ne.s32.totalorder %s340, %s354
      %p356 = scmp.eq.s32.totalorder %s36, 0
      %p357 = por %p355, %p356
      %s359 = sadd.s32 %s358, 1
      %p362 = scmp.eq.s32.totalorder %s30, 1
      %p363 = scmp.ne.s32.totalorder %s358, %s360
      %p364 = scmp.eq.s32.totalorder %s30, 0
      %p365 = por %p363, %p364
      %p366 = scmp.ne.s32.totalorder %s358, %s360
      %p367 = scmp.eq.s32.totalorder %s35, 1
      %p368 = por %p366, %p367
      %p369 = scmp.ne.s32.totalorder %s360, %s361
      %p370 = scmp.eq.s32.totalorder %s35, 0
      %p371 = por %p369, %p370
      %p372 = scmp.ne.s32.totalorder %s360, %s361
      %p373 = scmp.eq.s32.totalorder %s36, 1
      %p374 = por %p372, %p373
      %p376 = scmp.ne.s32.totalorder %s361, %s375
      %p377 = scmp.eq.s32.totalorder %s36, 0
      %p378 = por %p376, %p377
      %s380 = sadd.s32 %s379, 1
      %p383 = scmp.eq.s32.totalorder %s30, 1
      %p384 = scmp.ne.s32.totalorder %s379, %s381
      %p385 = scmp.eq.s32.totalorder %s30, 0
      %p386 = por %p384, %p385
      %p387 = scmp.ne.s32.totalorder %s379, %s381
      %p388 = scmp.eq.s32.totalorder %s35, 1
      %p389 = por %p387, %p388
      %p390 = scmp.ne.s32.totalorder %s381, %s382
      %p391 = scmp.eq.s32.totalorder %s35, 0
      %p392 = por %p390, %p391
      %p393 = scmp.ne.s32.totalorder %s381, %s382
      %p394 = scmp.eq.s32.totalorder %s36, 1
      %p395 = por %p393, %p394
      %p397 = scmp.ne.s32.totalorder %s382, %s396
      %p398 = scmp.eq.s32.totalorder %s36, 0
      %p399 = por %p397, %p398
      %s401 = sadd.s32 %s400, 1
      %p404 = scmp.eq.s32.totalorder %s30, 1
      %p405 = scmp.ne.s32.totalorder %s400, %s402
      %p406 = scmp.eq.s32.totalorder %s30, 0
      %p407 = por %p405, %p406
      %p408 = scmp.ne.s32.totalorder %s400, %s402
      %p409 = scmp.eq.s32.totalorder %s35, 1
      %p410 = por %p408, %p409
      %p411 = scmp.ne.s32.totalorder %s402, %s403
      %p412 = scmp.eq.s32.totalorder %s35, 0
      %p413 = por %p411, %p412
      %p414 = scmp.ne.s32.totalorder %s402, %s403
      %p415 = scmp.eq.s32.totalorder %s36, 1
      %p416 = por %p414, %p415
      %p418 = scmp.ne.s32.totalorder %s403, %s417
      %p419 = scmp.eq.s32.totalorder %s36, 0
      %p420 = por %p418, %p419
      %s422 = sadd.s32 %s421, 1
      %p425 = scmp.eq.s32.totalorder %s30, 1
      %p426 = scmp.ne.s32.totalorder %s421, %s423
      %p427 = scmp.eq.s32.totalorder %s30, 0
      %p428 = por %p426, %p427
      %p429 = scmp.ne.s32.totalorder %s421, %s423
      %p430 = scmp.eq.s32.totalorder %s35, 1
      %p431 = por %p429, %p430
      %p432 = scmp.ne.s32.totalorder %s423, %s424
      %p433 = scmp.eq.s32.totalorder %s35, 0
      %p434 = por %p432, %p433
      %p435 = scmp.ne.s32.totalorder %s423, %s424
      %p436 = scmp.eq.s32.totalorder %s36, 1
      %p437 = por %p435, %p436
      %p439 = scmp.ne.s32.totalorder %s424, %s438
      %p440 = scmp.eq.s32.totalorder %s36, 0
      %p441 = por %p439, %p440
      %s443 = sadd.s32 %s442, 1
      %p446 = scmp.eq.s32.totalorder %s30, 1
      %p447 = scmp.ne.s32.totalorder %s442, %s444
      %p448 = scmp.eq.s32.totalorder %s30, 0
      %p449 = por %p447, %p448
      %p450 = scmp.ne.s32.totalorder %s442, %s444
      %p451 = scmp.eq.s32.totalorder %s35, 1
      %p452 = por %p450, %p451
      %p453 = scmp.ne.s32.totalorder %s444, %s445
      %p454 = scmp.eq.s32.totalorder %s35, 0
      %p455 = por %p453, %p454
      %p456 = scmp.ne.s32.totalorder %s444, %s445
      %p457 = scmp.eq.s32.totalorder %s36, 1
      %p458 = por %p456, %p457
      %p460 = scmp.ne.s32.totalorder %s445, %s459
      %p461 = scmp.eq.s32.totalorder %s36, 0
      %p462 = por %p460, %p461
      %s464 = sadd.s32 %s463, 1
      %p467 = scmp.eq.s32.totalorder %s30, 1
      %p468 = scmp.ne.s32.totalorder %s463, %s465
      %p469 = scmp.eq.s32.totalorder %s30, 0
      %p470 = por %p468, %p469
      %p471 = scmp.ne.s32.totalorder %s463, %s465
      %p472 = scmp.eq.s32.totalorder %s35, 1
      %p473 = por %p471, %p472
      %p474 = scmp.ne.s32.totalorder %s465, %s466
      %p475 = scmp.eq.s32.totalorder %s35, 0
      %p476 = por %p474, %p475
      %p477 = scmp.ne.s32.totalorder %s465, %s466
      %p478 = scmp.eq.s32.totalorder %s36, 1
      %p479 = por %p477, %p478
      %p481 = scmp.ne.s32.totalorder %s466, %s480
      %p482 = scmp.eq.s32.totalorder %s36, 0
      %p483 = por %p481, %p482
      %s484 = ssub.s32 %s30, %s37
      %p485 = scmp.eq.s32.totalorder %s484, 0
      %s487 = sadd.s32 %s486, 1
      %s488 = scalar_select %p485, %s486, %s487
      %p491 = pneg %p485
      %p492 = scmp.eq.s32.totalorder %s30, 1
      %p493 = por %p491, %p492
      %p494 = scmp.ne.s32.totalorder %s486, %s489
      %p495 = scmp.eq.s32.totalorder %s30, 0
      %p496 = por %p494, %p495
      %p497 = scmp.ne.s32.totalorder %s486, %s489
      %p498 = scmp.eq.s32.totalorder %s35, 1
      %p499 = por %p497, %p498
      %p500 = scmp.ne.s32.totalorder %s489, %s490
      %p501 = scmp.eq.s32.totalorder %s35, 0
      %p502 = por %p500, %p501
      %p503 = scmp.ne.s32.totalorder %s489, %s490
      %p504 = scmp.eq.s32.totalorder %s36, 1
      %p505 = por %p503, %p504
      %p507 = scmp.ne.s32.totalorder %s490, %s506
      %p508 = scmp.eq.s32.totalorder %s36, 0
      %p509 = por %p507, %p508
      %p510 = scmp.le.s32.totalorder 1, %s30
      %p511 = scmp.lt.s32.totalorder %s30, 3
      %p512 = pnand %p510, %p511
      %p513 = pneg %p512
      // Predicated region
      $region9: #{tpu_custom_call.1} parent=5 // pred_check
        _
      $region10: #{tpu_custom_call.1} parent=5 // pred_check_branch
        %515 = sbr.rel (%p512) target = $region12
      $region11: #{tpu_custom_call.1} parent=5 // pred_region
        %s516 = ssub.s32 %s30, 1
        // Predicated region
        $region13: #{tpu_custom_call.1} parent=11 // pred_check
          %p517 = pneg %p77
        $region14: #{tpu_custom_call.1} parent=11 // pred_check_branch
          %519 = sbr.rel (%p517) target = $region16
        $region15: #{tpu_custom_call.1} parent=11 // pred_region
          _
        $region16: #{tpu_custom_call.1} parent=11 // pred_fallthru
          _
        // Predicated region
        $region17: #{tpu_custom_call.1} parent=11 // pred_check
          %p520 = pneg %p98
        $region18: #{tpu_custom_call.1} parent=11 // pred_check_branch
          %522 = sbr.rel (%p520) target = $region20
        $region19: #{tpu_custom_call.1} parent=11 // pred_region
          _
        $region20: #{tpu_custom_call.1} parent=11 // pred_fallthru
          _
        // Predicated region
        $region21: #{tpu_custom_call.1} parent=11 // pred_check
          %p523 = pneg %p119
        $region22: #{tpu_custom_call.1} parent=11 // pred_check_branch
          %525 = sbr.rel (%p523) target = $region24
        $region23: #{tpu_custom_call.1} parent=11 // pred_region
          _
        $region24: #{tpu_custom_call.1} parent=11 // pred_fallthru
          _
        // Predicated region
        $region25: #{tpu_custom_call.1} parent=11 // pred_check
          %p526 = pneg %p140
        $region26: #{tpu_custom_call.1} parent=11 // pred_check_branch
          %528 = sbr.rel (%p526) target = $region28
        $region27: #{tpu_custom_call.1} parent=11 // pred_region
          _
        $region28: #{tpu_custom_call.1} parent=11 // pred_fallthru
          _
        // Predicated region
        $region29: #{tpu_custom_call.1} parent=11 // pred_check
          %p529 = pneg %p161
        $region30: #{tpu_custom_call.1} parent=11 // pred_check_branch
          %531 = sbr.rel (%p529) target = $region32
        $region31: #{tpu_custom_call.1} parent=11 // pred_region
          _
        $region32: #{tpu_custom_call.1} parent=11 // pred_fallthru
          _
        // Predicated region
        $region33: #{tpu_custom_call.1} parent=11 // pred_check
          %p532 = pneg %p182
        $region34: #{tpu_custom_call.1} parent=11 // pred_check_branch
          %534 = sbr.rel (%p532) target = $region36
        $region35: #{tpu_custom_call.1} parent=11 // pred_region
          _
        $region36: #{tpu_custom_call.1} parent=11 // pred_fallthru
          _
        // Predicated region
        $region37: #{tpu_custom_call.1} parent=11 // pred_check
          %p535 = pneg %p203
        $region38: #{tpu_custom_call.1} parent=11 // pred_check_branch
          %537 = sbr.rel (%p535) target = $region40
        $region39: #{tpu_custom_call.1} parent=11 // pred_region
          _
        $region40: #{tpu_custom_call.1} parent=11 // pred_fallthru
          _
        // Predicated region
        $region41: #{tpu_custom_call.1} parent=11 // pred_check
          %p538 = pneg %p224
        $region42: #{tpu_custom_call.1} parent=11 // pred_check_branch
          %540 = sbr.rel (%p538) target = $region44
        $region43: #{tpu_custom_call.1} parent=11 // pred_region
          _
        $region44: #{tpu_custom_call.1} parent=11 // pred_fallthru
          _
        // Predicated region
        $region45: #{tpu_custom_call.1} parent=11 // pred_check
          %p541 = pneg %p245
        $region46: #{tpu_custom_call.1} parent=11 // pred_check_branch
          %543 = sbr.rel (%p541) target = $region48
        $region47: #{tpu_custom_call.1} parent=11 // pred_region
          _
        $region48: #{tpu_custom_call.1} parent=11 // pred_fallthru
          _
        // Predicated region
        $region49: #{tpu_custom_call.1} parent=11 // pred_check
          %p544 = pneg %p266
        $region50: #{tpu_custom_call.1} parent=11 // pred_check_branch
          %546 = sbr.rel (%p544) target = $region52
        $region51: #{tpu_custom_call.1} parent=11 // pred_region
          _
        $region52: #{tpu_custom_call.1} parent=11 // pred_fallthru
          _
        // Predicated region
        $region53: #{tpu_custom_call.1} parent=11 // pred_check
          %p547 = pneg %p287
        $region54: #{tpu_custom_call.1} parent=11 // pred_check_branch
          %549 = sbr.rel (%p547) target = $region56
        $region55: #{tpu_custom_call.1} parent=11 // pred_region
          _
        $region56: #{tpu_custom_call.1} parent=11 // pred_fallthru
          _
        // Predicated region
        $region57: #{tpu_custom_call.1} parent=11 // pred_check
          %p550 = pneg %p308
        $region58: #{tpu_custom_call.1} parent=11 // pred_check_branch
          %552 = sbr.rel (%p550) target = $region60
        $region59: #{tpu_custom_call.1} parent=11 // pred_region
          _
        $region60: #{tpu_custom_call.1} parent=11 // pred_fallthru
          _
        // Predicated region
        $region61: #{tpu_custom_call.1} parent=11 // pred_check
          %p553 = pneg %p329
        $region62: #{tpu_custom_call.1} parent=11 // pred_check_branch
          %555 = sbr.rel (%p553) target = $region64
        $region63: #{tpu_custom_call.1} parent=11 // pred_region
          _
        $region64: #{tpu_custom_call.1} parent=11 // pred_fallthru
          _
        // Predicated region
        $region65: #{tpu_custom_call.1} parent=11 // pred_check
          %p556 = pneg %p350
        $region66: #{tpu_custom_call.1} parent=11 // pred_check_branch
          %558 = sbr.rel (%p556) target = $region68
        $region67: #{tpu_custom_call.1} parent=11 // pred_region
          _
        $region68: #{tpu_custom_call.1} parent=11 // pred_fallthru
          _
        // Predicated region
        $region69: #{tpu_custom_call.1} parent=11 // pred_check
          %p559 = pneg %p371
        $region70: #{tpu_custom_call.1} parent=11 // pred_check_branch
          %561 = sbr.rel (%p559) target = $region72
        $region71: #{tpu_custom_call.1} parent=11 // pred_region
          _
        $region72: #{tpu_custom_call.1} parent=11 // pred_fallthru
          _
        // Predicated region
        $region73: #{tpu_custom_call.1} parent=11 // pred_check
          %p562 = pneg %p392
        $region74: #{tpu_custom_call.1} parent=11 // pred_check_branch
          %564 = sbr.rel (%p562) target = $region76
        $region75: #{tpu_custom_call.1} parent=11 // pred_region
          _
        $region76: #{tpu_custom_call.1} parent=11 // pred_fallthru
          _
        // Predicated region
        $region77: #{tpu_custom_call.1} parent=11 // pred_check
          %p565 = pneg %p413
        $region78: #{tpu_custom_call.1} parent=11 // pred_check_branch
          %567 = sbr.rel (%p565) target = $region80
        $region79: #{tpu_custom_call.1} parent=11 // pred_region
          _
        $region80: #{tpu_custom_call.1} parent=11 // pred_fallthru
          _
        // Predicated region
        $region81: #{tpu_custom_call.1} parent=11 // pred_check
          %p568 = pneg %p434
        $region82: #{tpu_custom_call.1} parent=11 // pred_check_branch
          %570 = sbr.rel (%p568) target = $region84
        $region83: #{tpu_custom_call.1} parent=11 // pred_region
          _
        $region84: #{tpu_custom_call.1} parent=11 // pred_fallthru
          _
        // Predicated region
        $region85: #{tpu_custom_call.1} parent=11 // pred_check
          %p571 = pneg %p455
        $region86: #{tpu_custom_call.1} parent=11 // pred_check_branch
          %573 = sbr.rel (%p571) target = $region88
        $region87: #{tpu_custom_call.1} parent=11 // pred_region
          _
        $region88: #{tpu_custom_call.1} parent=11 // pred_fallthru
          _
        // Predicated region
        $region89: #{tpu_custom_call.1} parent=11 // pred_check
          %p574 = pneg %p476
        $region90: #{tpu_custom_call.1} parent=11 // pred_check_branch
          %576 = sbr.rel (%p574) target = $region92
        $region91: #{tpu_custom_call.1} parent=11 // pred_region
          _
        $region92: #{tpu_custom_call.1} parent=11 // pred_fallthru
          _
      $region12: #{tpu_custom_call.1} parent=5 // pred_fallthru
        _
      %p577 = scmp.lt.s32.totalorder %s30, 2
      // Predicated region
      $region93: #{tpu_custom_call.1} parent=5 // pred_check
        %p578 = pneg %p577
      $region94: #{tpu_custom_call.1} parent=5 // pred_check_branch
        %580 = sbr.rel (%p578) target = $region96
      $region95: #{tpu_custom_call.1} parent=5 // pred_region
        // Predicated region
        $region97: #{tpu_custom_call.1} parent=95 // pred_check
          %p581 = pneg %p50
        $region98: #{tpu_custom_call.1} parent=95 // pred_check_branch
          %583 = sbr.rel (%p581) target = $region100
        $region99: #{tpu_custom_call.1} parent=95 // pred_region
          %p584 = scmp.lt.s32.totalorder %s30, 1
          %s585 = scalar_select %p584, %s30, 1
          %s586 = smul.addr %s585, 8
          %s587 = scalar_lea.vmem %s0, %s586
        $region100: #{tpu_custom_call.1} parent=95 // pred_fallthru
          _
      $region96: #{tpu_custom_call.1} parent=5 // pred_fallthru
        _
      %p588 = scmp.le.s32.totalorder 1, %s30
      %p589 = scmp.lt.s32.totalorder %s30, 3
      %p590 = pnand %p588, %p589
      %p591 = pneg %p590
      // Predicated region
      $region101: #{tpu_custom_call.1} parent=5 // pred_check
        _
      $region102: #{tpu_custom_call.1} parent=5 // pred_check_branch
        %593 = sbr.rel (%p590) target = $region104
      $region103: #{tpu_custom_call.1} parent=5 // pred_region
        %s594 = ssub.s32 %s30, 1
        %p595 = scmp.lt.s32.totalorder %s35, 1
        %s596 = scalar_select %p595, %s35, 1
        %s597 = smul.addr %s596, 8
        %s598 = scalar_lea.vmem %s0, %s597
        %p599 = pneg %p56
        %p600 = pneg %p53
        %p601 = pneg %p77
        %p602 = pneg %p74
        %p603 = pneg %p98
        %p604 = pneg %p95
        %p605 = pneg %p119
        %p606 = pneg %p116
        %p607 = pneg %p140
        %p608 = pneg %p137
        %p609 = pneg %p161
        %p610 = pneg %p158
        %p611 = pneg %p182
        %p612 = pneg %p179
        %p613 = pneg %p203
        %p614 = pneg %p200
        %p615 = pneg %p224
        %p616 = pneg %p221
        %p617 = pneg %p245
        %p618 = pneg %p242
        %p619 = pneg %p266
        %p620 = pneg %p263
        %p621 = pneg %p287
        %p622 = pneg %p284
        %p623 = pneg %p308
        %p624 = pneg %p305
        %p625 = pneg %p329
        %p626 = pneg %p326
        %p627 = pneg %p350
        %p628 = pneg %p347
        %p629 = pneg %p371
        %p630 = pneg %p368
        %p631 = pneg %p392
        %p632 = pneg %p389
        %p633 = pneg %p413
        %p634 = pneg %p410
        %p635 = pneg %p434
        %p636 = pneg %p431
        %p637 = pneg %p455
        %p638 = pneg %p452
        %p639 = pneg %p476
        %p640 = pneg %p473
        %p641 = pneg %p502
        %p642 = pneg %p499
        %s643 = sand.u32 %s489, 1
        %s644 = scalar_lea.sflag [#allocation3], %s643
        %s645 = sand.u32 %s489, 1
        %s646 = smul.addr %s645, 8
        %s647 = scalar_lea.vmem [#allocation2], %s646
        %p648 = scmp.lt.s32.totalorder %s35, 1
        %s649 = scalar_select %p648, %s35, 1
        %s650 = smul.addr %s649, 8
        %s651 = scalar_lea.vmem %s0, %s650
        %v652 = vld [vmem:[%s651] sm:$0xff]
        %v653 = vld [vmem:[%s1] sm:$0xff]
        %v654 = vld [vmem:[%s1 + $0x8] sm:$0xff]
        %v655 = vld [vmem:[%s2] sm:$0xff]
        %vm656 = vcmask 130048
        %v658 = vsel %vm656, %v652, 0
        %660 = vmatpush.msra.mxu0 0.0
        %661 = vmatpush.msra.mxu0 0.0
        %662 = vmatpush.msra.mxu0 0.0
        %663 = vmatpush.msra.mxu0 0.0
        %664 = vmatpush.msra.mxu0 0.0
        %665 = vmatpush.msra.mxu0 0.0
        %666 = vmatpush.msra.mxu0 0.0
        %667 = vmatpush.msra.mxu0 0.0
        %668 = vmatpush.msra.mxu0 0.0
        %669 = vmatpush.msra.mxu0 0.0
        %670 = vmatpush.msra.mxu0 0.0
        %671 = vmatpush.msra.mxu0 0.0
        %672 = vmatpush.msra.mxu0 0.0
        %673 = vmatpush.msra.mxu0 0.0
        %674 = vmatpush.msra.mxu0 %v654
        %675 = vmatpush.msra.mxu0 %v653
        %676 = vmatmul.f32.gmra.mxu0 %v658
        %v677 = vpop.f32.mrf.mxu0
        %v678 = vadd.f32 %v655, %v677
        %679 = vdwg.mxu0
        %v680 = vld [vmem:[%s3] sm:$0xff]
        %v681 = vld [vmem:[%s3 + $0x8] sm:$0xff]
        %v682 = vld [vmem:[%s3 + $0x10] sm:$0xff]
        %v683 = vld [vmem:[%s3 + $0x18] sm:$0xff]
        %v684 = vld [vmem:[%s3 + $0x20] sm:$0xff]
        %v685 = vld [vmem:[%s3 + $0x28] sm:$0xff]
        %v686 = vld [vmem:[%s3 + $0x30] sm:$0xff]
        %v687 = vld [vmem:[%s3 + $0x38] sm:$0xff]
        %v688 = vld [vmem:[%s3 + $0x40] sm:$0xff]
        %v689 = vld [vmem:[%s3 + $0x48] sm:$0xff]
        %v690 = vld [vmem:[%s3 + $0x50] sm:$0xff]
        %v691 = vld [vmem:[%s3 + $0x58] sm:$0xff]
        %v692 = vld [vmem:[%s3 + $0x60] sm:$0xff]
        %v693 = vld [vmem:[%s3 + $0x68] sm:$0xff]
        %v694 = vld [vmem:[%s3 + $0x70] sm:$0xff]
        %v695 = vld [vmem:[%s3 + $0x78] sm:$0xff]
        %v696 = vld [vmem:[%s4] sm:$0x1]
        %v697 = vld [vmem:[%s4 + $0x1] sm:$0x1]
        %v698 = vld [vmem:[%s4 + $0x2] sm:$0x1]
        %v699 = vld [vmem:[%s4 + $0x3] sm:$0x1]
        %v700 = vld [vmem:[%s5] sm:$0xff]
        %v701 = vld [vmem:[%s5 + $0x8] sm:$0xff]
        %v702 = vld [vmem:[%s5 + $0x10] sm:$0xff]
        %v703 = vld [vmem:[%s5 + $0x18] sm:$0xff]
        %v704 = vld [vmem:[%s5 + $0x20] sm:$0xff]
        %v705 = vld [vmem:[%s5 + $0x28] sm:$0xff]
        %v706 = vld [vmem:[%s5 + $0x30] sm:$0xff]
        %v707 = vld [vmem:[%s5 + $0x38] sm:$0xff]
        %v708 = vld [vmem:[%s5 + $0x40] sm:$0xff]
        %v709 = vld [vmem:[%s5 + $0x48] sm:$0xff]
        %v710 = vld [vmem:[%s5 + $0x50] sm:$0xff]
        %v711 = vld [vmem:[%s5 + $0x58] sm:$0xff]
        %v712 = vld [vmem:[%s5 + $0x60] sm:$0xff]
        %v713 = vld [vmem:[%s5 + $0x68] sm:$0xff]
        %v714 = vld [vmem:[%s5 + $0x70] sm:$0xff]
        %v715 = vld [vmem:[%s5 + $0x78] sm:$0xff]
        %v716 = vld [vmem:[%s6] sm:$0x1]
        %v717 = vld [vmem:[%s6 + $0x1] sm:$0x1]
        %v718 = vld [vmem:[%s6 + $0x2] sm:$0x1]
        %v719 = vld [vmem:[%s6 + $0x3] sm:$0x1]
        %v720 = vld [vmem:[%s7] sm:$0xff]
        %v721 = vld [vmem:[%s7 + $0x8] sm:$0xff]
        %v722 = vld [vmem:[%s7 + $0x10] sm:$0xff]
        %v723 = vld [vmem:[%s7 + $0x18] sm:$0xff]
        %v724 = vld [vmem:[%s7 + $0x20] sm:$0xff]
        %v725 = vld [vmem:[%s7 + $0x28] sm:$0xff]
        %v726 = vld [vmem:[%s7 + $0x30] sm:$0xff]
        %v727 = vld [vmem:[%s7 + $0x38] sm:$0xff]
        %v728 = vld [vmem:[%s7 + $0x40] sm:$0xff]
        %v729 = vld [vmem:[%s7 + $0x48] sm:$0xff]
        %v730 = vld [vmem:[%s7 + $0x50] sm:$0xff]
        %v731 = vld [vmem:[%s7 + $0x58] sm:$0xff]
        %v732 = vld [vmem:[%s7 + $0x60] sm:$0xff]
        %v733 = vld [vmem:[%s7 + $0x68] sm:$0xff]
        %v734 = vld [vmem:[%s7 + $0x70] sm:$0xff]
        %v735 = vld [vmem:[%s7 + $0x78] sm:$0xff]
        %v736 = vld [vmem:[%s8] sm:$0x1]
        %v737 = vld [vmem:[%s8 + $0x1] sm:$0x1]
        %v738 = vld [vmem:[%s8 + $0x2] sm:$0x1]
        %v739 = vld [vmem:[%s8 + $0x3] sm:$0x1]
        %v740 = vld [vmem:[%s9] sm:$0xff]
        %v741 = vld [vmem:[%s9 + $0x8] sm:$0xff]
        %v742 = vld [vmem:[%s9 + $0x10] sm:$0xff]
        %v743 = vld [vmem:[%s9 + $0x18] sm:$0xff]
        %v744 = vld [vmem:[%s10] sm:$0x1]
        %v745 = vld [vmem:[%s11] sm:$0x1]
        %v746 = vld [vmem:[%s12] sm:$0x1]
        %v747 = vld [vmem:[%s13] sm:$0xff]
        %v748 = vld [vmem:[%s13 + $0x8] sm:$0xff]
        %v749 = vld [vmem:[%s13 + $0x10] sm:$0xff]
        %v750 = vld [vmem:[%s13 + $0x18] sm:$0xff]
        %v751 = vld [vmem:[%s14] sm:$0x1]
        %v752 = vld [vmem:[%s15] sm:$0xff]
        %v753 = vld [vmem:[%s15 + $0x8] sm:$0xff]
        %v754 = vld [vmem:[%s15 + $0x10] sm:$0xff]
        %v755 = vld [vmem:[%s15 + $0x18] sm:$0xff]
        %v756 = vld [vmem:[%s16] sm:$0x1]
        %v757 = vld [vmem:[%s17] sm:$0x1]
        %v758 = vld [vmem:[%s18] sm:$0x1]
        %v763 = vperm.slane %v696, 0
        %v764 = vperm.slane %v697, 0
        %v765 = vperm.slane %v698, 0
        %v766 = vperm.slane %v699, 0
        %vm771 = vcmask 261120
        %v773 = vsel %vm771, %v678, 0
        %775 = vmatpush.msra.mxu0 0.0
        %776 = vmatpush.msra.mxu0 0.0
        %777 = vmatpush.msra.mxu0 0.0
        %778 = vmatpush.msra.mxu0 0.0
        %779 = vmatpush.msra.mxu0 0.0
        %780 = vmatpush.msra.mxu0 0.0
        %781 = vmatpush.msra.mxu0 0.0
        %782 = vmatpush.msra.mxu0 0.0
        %783 = vmatpush.msra.mxu0 0.0
        %784 = vmatpush.msra.mxu0 0.0
        %785 = vmatpush.msra.mxu0 0.0
        %786 = vmatpush.msra.mxu0 0.0
        %787 = vmatpush.msra.mxu0 %v683
        %788 = vmatpush.msra.mxu0 %v682
        %789 = vmatpush.msra.mxu0 %v681
        %790 = vmatpush.msra.mxu0 %v680
        %791 = vmatmul.f32.gmra.mxu0 %v773
        %v792 = vpop.f32.mrf.mxu0
        %v793 = vadd.f32 %v763, %v792
        %794 = vdwg.mxu0
        %795 = vmatpush.msra.mxu0 0.0
        %796 = vmatpush.msra.mxu0 0.0
        %797 = vmatpush.msra.mxu0 0.0
        %798 = vmatpush.msra.mxu0 0.0
        %799 = vmatpush.msra.mxu0 0.0
        %800 = vmatpush.msra.mxu0 0.0
        %801 = vmatpush.msra.mxu0 0.0
        %802 = vmatpush.msra.mxu0 0.0
        %803 = vmatpush.msra.mxu0 0.0
        %804 = vmatpush.msra.mxu0 0.0
        %805 = vmatpush.msra.mxu0 0.0
        %806 = vmatpush.msra.mxu0 0.0
        %807 = vmatpush.msra.mxu0 %v687
        %808 = vmatpush.msra.mxu0 %v686
        %809 = vmatpush.msra.mxu0 %v685
        %810 = vmatpush.msra.mxu0 %v684
        %811 = vmatmul.f32.gmra.mxu0 %v773
        %v812 = vpop.f32.mrf.mxu0
        %v813 = vadd.f32 %v764, %v812
        %814 = vdwg.mxu0
        %815 = vmatpush.msra.mxu0 0.0
        %816 = vmatpush.msra.mxu0 0.0
        %817 = vmatpush.msra.mxu0 0.0
        %818 = vmatpush.msra.mxu0 0.0
        %819 = vmatpush.msra.mxu0 0.0
        %820 = vmatpush.msra.mxu0 0.0
        %821 = vmatpush.msra.mxu0 0.0
        %822 = vmatpush.msra.mxu0 0.0
        %823 = vmatpush.msra.mxu0 0.0
        %824 = vmatpush.msra.mxu0 0.0
        %825 = vmatpush.msra.mxu0 0.0
        %826 = vmatpush.msra.mxu0 0.0
        %827 = vmatpush.msra.mxu0 %v691
        %828 = vmatpush.msra.mxu0 %v690
        %829 = vmatpush.msra.mxu0 %v689
        %830 = vmatpush.msra.mxu0 %v688
        %831 = vmatmul.f32.gmra.mxu0 %v773
        %v832 = vpop.f32.mrf.mxu0
        %v833 = vadd.f32 %v765, %v832
        %834 = vdwg.mxu0
        %835 = vmatpush.msra.mxu0 0.0
        %836 = vmatpush.msra.mxu0 0.0
        %837 = vmatpush.msra.mxu0 0.0
        %838 = vmatpush.msra.mxu0 0.0
        %839 = vmatpush.msra.mxu0 0.0
        %840 = vmatpush.msra.mxu0 0.0
        %841 = vmatpush.msra.mxu0 0.0
        %842 = vmatpush.msra.mxu0 0.0
        %843 = vmatpush.msra.mxu0 0.0
        %844 = vmatpush.msra.mxu0 0.0
        %845 = vmatpush.msra.mxu0 0.0
        %846 = vmatpush.msra.mxu0 0.0
        %847 = vmatpush.msra.mxu0 %v695
        %848 = vmatpush.msra.mxu0 %v694
        %849 = vmatpush.msra.mxu0 %v693
        %850 = vmatpush.msra.mxu0 %v692
        %851 = vmatmul.f32.gmra.mxu0 %v773
        %v852 = vpop.f32.mrf.mxu0
        %v853 = vadd.f32 %v766, %v852
        %854 = vdwg.mxu0
        %v859 = vperm.slane %v716, 0
        %v860 = vperm.slane %v717, 0
        %v861 = vperm.slane %v718, 0
        %v862 = vperm.slane %v719, 0
        %867 = vmatpush.msra.mxu0 0.0
        %868 = vmatpush.msra.mxu0 0.0
        %869 = vmatpush.msra.mxu0 0.0
        %870 = vmatpush.msra.mxu0 0.0
        %871 = vmatpush.msra.mxu0 0.0
        %872 = vmatpush.msra.mxu0 0.0
        %873 = vmatpush.msra.mxu0 0.0
        %874 = vmatpush.msra.mxu0 0.0
        %875 = vmatpush.msra.mxu0 0.0
        %876 = vmatpush.msra.mxu0 0.0
        %877 = vmatpush.msra.mxu0 0.0
        %878 = vmatpush.msra.mxu0 0.0
        %879 = vmatpush.msra.mxu0 %v703
        %880 = vmatpush.msra.mxu0 %v702
        %881 = vmatpush.msra.mxu0 %v701
        %882 = vmatpush.msra.mxu0 %v700
        %883 = vmatmul.f32.gmra.mxu0 %v773
        %v884 = vpop.f32.mrf.mxu0
        %v885 = vadd.f32 %v859, %v884
        %886 = vdwg.mxu0
        %887 = vmatpush.msra.mxu0 0.0
        %888 = vmatpush.msra.mxu0 0.0
        %889 = vmatpush.msra.mxu0 0.0
        %890 = vmatpush.msra.mxu0 0.0
        %891 = vmatpush.msra.mxu0 0.0
        %892 = vmatpush.msra.mxu0 0.0
        %893 = vmatpush.msra.mxu0 0.0
        %894 = vmatpush.msra.mxu0 0.0
        %895 = vmatpush.msra.mxu0 0.0
        %896 = vmatpush.msra.mxu0 0.0
        %897 = vmatpush.msra.mxu0 0.0
        %898 = vmatpush.msra.mxu0 0.0
        %899 = vmatpush.msra.mxu0 %v707
        %900 = vmatpush.msra.mxu0 %v706
        %901 = vmatpush.msra.mxu0 %v705
        %902 = vmatpush.msra.mxu0 %v704
        %903 = vmatmul.f32.gmra.mxu0 %v773
        %v904 = vpop.f32.mrf.mxu0
        %v905 = vadd.f32 %v860, %v904
        %906 = vdwg.mxu0
        %907 = vmatpush.msra.mxu0 0.0
        %908 = vmatpush.msra.mxu0 0.0
        %909 = vmatpush.msra.mxu0 0.0
        %910 = vmatpush.msra.mxu0 0.0
        %911 = vmatpush.msra.mxu0 0.0
        %912 = vmatpush.msra.mxu0 0.0
        %913 = vmatpush.msra.mxu0 0.0
        %914 = vmatpush.msra.mxu0 0.0
        %915 = vmatpush.msra.mxu0 0.0
        %916 = vmatpush.msra.mxu0 0.0
        %917 = vmatpush.msra.mxu0 0.0
        %918 = vmatpush.msra.mxu0 0.0
        %919 = vmatpush.msra.mxu0 %v711
        %920 = vmatpush.msra.mxu0 %v710
        %921 = vmatpush.msra.mxu0 %v709
        %922 = vmatpush.msra.mxu0 %v708
        %923 = vmatmul.f32.gmra.mxu0 %v773
        %v924 = vpop.f32.mrf.mxu0
        %v925 = vadd.f32 %v861, %v924
        %926 = vdwg.mxu0
        %927 = vmatpush.msra.mxu0 0.0
        %928 = vmatpush.msra.mxu0 0.0
        %929 = vmatpush.msra.mxu0 0.0
        %930 = vmatpush.msra.mxu0 0.0
        %931 = vmatpush.msra.mxu0 0.0
        %932 = vmatpush.msra.mxu0 0.0
        %933 = vmatpush.msra.mxu0 0.0
        %934 = vmatpush.msra.mxu0 0.0
        %935 = vmatpush.msra.mxu0 0.0
        %936 = vmatpush.msra.mxu0 0.0
        %937 = vmatpush.msra.mxu0 0.0
        %938 = vmatpush.msra.mxu0 0.0
        %939 = vmatpush.msra.mxu0 %v715
        %940 = vmatpush.msra.mxu0 %v714
        %941 = vmatpush.msra.mxu0 %v713
        %942 = vmatpush.msra.mxu0 %v712
        %943 = vmatmul.f32.gmra.mxu0 %v773
        %v944 = vpop.f32.mrf.mxu0
        %v945 = vadd.f32 %v862, %v944
        %946 = vdwg.mxu0
        %v951 = vperm.slane %v736, 0
        %v952 = vperm.slane %v737, 0
        %v953 = vperm.slane %v738, 0
        %v954 = vperm.slane %v739, 0
        %959 = vmatpush.msra.mxu0 0.0
        %960 = vmatpush.msra.mxu0 0.0
        %961 = vmatpush.msra.mxu0 0.0
        %962 = vmatpush.msra.mxu0 0.0
        %963 = vmatpush.msra.mxu0 0.0
        %964 = vmatpush.msra.mxu0 0.0
        %965 = vmatpush.msra.mxu0 0.0
        %966 = vmatpush.msra.mxu0 0.0
        %967 = vmatpush.msra.mxu0 0.0
        %968 = vmatpush.msra.mxu0 0.0
        %969 = vmatpush.msra.mxu0 0.0
        %970 = vmatpush.msra.mxu0 0.0
        %971 = vmatpush.msra.mxu0 %v723
        %972 = vmatpush.msra.mxu0 %v722
        %973 = vmatpush.msra.mxu0 %v721
        %974 = vmatpush.msra.mxu0 %v720
        %975 = vmatmul.f32.gmra.mxu0 %v773
        %v976 = vpop.f32.mrf.mxu0
        %v977 = vadd.f32 %v951, %v976
        %978 = vdwg.mxu0
        %979 = vmatpush.msra.mxu0 0.0
        %980 = vmatpush.msra.mxu0 0.0
        %981 = vmatpush.msra.mxu0 0.0
        %982 = vmatpush.msra.mxu0 0.0
        %983 = vmatpush.msra.mxu0 0.0
        %984 = vmatpush.msra.mxu0 0.0
        %985 = vmatpush.msra.mxu0 0.0
        %986 = vmatpush.msra.mxu0 0.0
        %987 = vmatpush.msra.mxu0 0.0
        %988 = vmatpush.msra.mxu0 0.0
        %989 = vmatpush.msra.mxu0 0.0
        %990 = vmatpush.msra.mxu0 0.0
        %991 = vmatpush.msra.mxu0 %v727
        %992 = vmatpush.msra.mxu0 %v726
        %993 = vmatpush.msra.mxu0 %v725
        %994 = vmatpush.msra.mxu0 %v724
        %995 = vmatmul.f32.gmra.mxu0 %v773
        %v996 = vpop.f32.mrf.mxu0
        %v997 = vadd.f32 %v952, %v996
        %998 = vdwg.mxu0
        %999 = vmatpush.msra.mxu0 0.0
        %1000 = vmatpush.msra.mxu0 0.0
        %1001 = vmatpush.msra.mxu0 0.0
        %1002 = vmatpush.msra.mxu0 0.0
        %1003 = vmatpush.msra.mxu0 0.0
        %1004 = vmatpush.msra.mxu0 0.0
        %1005 = vmatpush.msra.mxu0 0.0
        %1006 = vmatpush.msra.mxu0 0.0
        %1007 = vmatpush.msra.mxu0 0.0
        %1008 = vmatpush.msra.mxu0 0.0
        %1009 = vmatpush.msra.mxu0 0.0
        %1010 = vmatpush.msra.mxu0 0.0
        %1011 = vmatpush.msra.mxu0 %v731
        %1012 = vmatpush.msra.mxu0 %v730
        %1013 = vmatpush.msra.mxu0 %v729
        %1014 = vmatpush.msra.mxu0 %v728
        %1015 = vmatmul.f32.gmra.mxu0 %v773
        %v1016 = vpop.f32.mrf.mxu0
        %v1017 = vadd.f32 %v953, %v1016
        %1018 = vdwg.mxu0
        %1019 = vmatpush.msra.mxu0 0.0
        %1020 = vmatpush.msra.mxu0 0.0
        %1021 = vmatpush.msra.mxu0 0.0
        %1022 = vmatpush.msra.mxu0 0.0
        %1023 = vmatpush.msra.mxu0 0.0
        %1024 = vmatpush.msra.mxu0 0.0
        %1025 = vmatpush.msra.mxu0 0.0
        %1026 = vmatpush.msra.mxu0 0.0
        %1027 = vmatpush.msra.mxu0 0.0
        %1028 = vmatpush.msra.mxu0 0.0
        %1029 = vmatpush.msra.mxu0 0.0
        %1030 = vmatpush.msra.mxu0 0.0
        %1031 = vmatpush.msra.mxu0 %v735
        %1032 = vmatpush.msra.mxu0 %v734
        %1033 = vmatpush.msra.mxu0 %v733
        %1034 = vmatpush.msra.mxu0 %v732
        %1035 = vmatmul.f32.gmra.mxu0 %v773
        %v1036 = vpop.f32.mrf.mxu0
        %v1037 = vadd.f32 %v954, %v1036
        %1038 = vdwg.mxu0
        %vm1039 = vcmask 64512
        %v1041 = vsel %vm1039, %v793, 0
        %v1044 = vsel %vm1039, %v885, 0
        %1046 = vmatpush.xpose.msra.mxu0 0.0
        %1047 = vmatpush.xpose.msra.mxu0 0.0
        %1048 = vmatpush.xpose.msra.mxu0 0.0
        %1049 = vmatpush.xpose.msra.mxu0 0.0
        %1050 = vmatpush.xpose.msra.mxu0 0.0
        %1051 = vmatpush.xpose.msra.mxu0 0.0
        %1052 = vmatpush.xpose.msra.mxu0 0.0
        %1053 = vmatpush.xpose.msra.mxu0 0.0
        %1054 = vmatpush.xpose.msra.mxu0 0.0
        %1055 = vmatpush.xpose.msra.mxu0 0.0
        %1056 = vmatpush.xpose.msra.mxu0 0.0
        %1057 = vmatpush.xpose.msra.mxu0 0.0
        %1058 = vmatpush.xpose.msra.mxu0 0.0
        %1059 = vmatpush.xpose.msra.mxu0 0.0
        %1060 = vmatpush.xpose.msra.mxu0 0.0
        %1061 = vmatpush.xpose.msra.mxu0 %v1044
        %1062 = vmatmul.f32.gmra.mxu0 %v1041
        %v1063 = vpop.f32.mrf.mxu0
        %v1064 = vadd.f32 0.0, %v1063
        %1065 = vdwg.mxu0
        %v1067 = vsel %vm1039, %v813, 0
        %v1070 = vsel %vm1039, %v905, 0
        %1072 = vmatpush.xpose.msra.mxu0 0.0
        %1073 = vmatpush.xpose.msra.mxu0 0.0
        %1074 = vmatpush.xpose.msra.mxu0 0.0
        %1075 = vmatpush.xpose.msra.mxu0 0.0
        %1076 = vmatpush.xpose.msra.mxu0 0.0
        %1077 = vmatpush.xpose.msra.mxu0 0.0
        %1078 = vmatpush.xpose.msra.mxu0 0.0
        %1079 = vmatpush.xpose.msra.mxu0 0.0
        %1080 = vmatpush.xpose.msra.mxu0 0.0
        %1081 = vmatpush.xpose.msra.mxu0 0.0
        %1082 = vmatpush.xpose.msra.mxu0 0.0
        %1083 = vmatpush.xpose.msra.mxu0 0.0
        %1084 = vmatpush.xpose.msra.mxu0 0.0
        %1085 = vmatpush.xpose.msra.mxu0 0.0
        %1086 = vmatpush.xpose.msra.mxu0 0.0
        %1087 = vmatpush.xpose.msra.mxu0 %v1070
        %1088 = vmatmul.f32.gmra.mxu0 %v1067
        %v1089 = vpop.f32.mrf.mxu0
        %v1090 = vadd.f32 0.0, %v1089
        %1091 = vdwg.mxu0
        %v1093 = vsel %vm1039, %v833, 0
        %v1096 = vsel %vm1039, %v925, 0
        %1098 = vmatpush.xpose.msra.mxu0 0.0
        %1099 = vmatpush.xpose.msra.mxu0 0.0
        %1100 = vmatpush.xpose.msra.mxu0 0.0
        %1101 = vmatpush.xpose.msra.mxu0 0.0
        %1102 = vmatpush.xpose.msra.mxu0 0.0
        %1103 = vmatpush.xpose.msra.mxu0 0.0
        %1104 = vmatpush.xpose.msra.mxu0 0.0
        %1105 = vmatpush.xpose.msra.mxu0 0.0
        %1106 = vmatpush.xpose.msra.mxu0 0.0
        %1107 = vmatpush.xpose.msra.mxu0 0.0
        %1108 = vmatpush.xpose.msra.mxu0 0.0
        %1109 = vmatpush.xpose.msra.mxu0 0.0
        %1110 = vmatpush.xpose.msra.mxu0 0.0
        %1111 = vmatpush.xpose.msra.mxu0 0.0
        %1112 = vmatpush.xpose.msra.mxu0 0.0
        %1113 = vmatpush.xpose.msra.mxu0 %v1096
        %1114 = vmatmul.f32.gmra.mxu0 %v1093
        %v1115 = vpop.f32.mrf.mxu0
        %v1116 = vadd.f32 0.0, %v1115
        %1117 = vdwg.mxu0
        %v1119 = vsel %vm1039, %v853, 0
        %v1122 = vsel %vm1039, %v945, 0
        %1124 = vmatpush.xpose.msra.mxu0 0.0
        %1125 = vmatpush.xpose.msra.mxu0 0.0
        %1126 = vmatpush.xpose.msra.mxu0 0.0
        %1127 = vmatpush.xpose.msra.mxu0 0.0
        %1128 = vmatpush.xpose.msra.mxu0 0.0
        %1129 = vmatpush.xpose.msra.mxu0 0.0
        %1130 = vmatpush.xpose.msra.mxu0 0.0
        %1131 = vmatpush.xpose.msra.mxu0 0.0
        %1132 = vmatpush.xpose.msra.mxu0 0.0
        %1133 = vmatpush.xpose.msra.mxu0 0.0
        %1134 = vmatpush.xpose.msra.mxu0 0.0
        %1135 = vmatpush.xpose.msra.mxu0 0.0
        %1136 = vmatpush.xpose.msra.mxu0 0.0
        %1137 = vmatpush.xpose.msra.mxu0 0.0
        %1138 = vmatpush.xpose.msra.mxu0 0.0
        %1139 = vmatpush.xpose.msra.mxu0 %v1122
        %1140 = vmatmul.f32.gmra.mxu0 %v1119
        %v1141 = vpop.f32.mrf.mxu0
        %v1142 = vadd.f32 0.0, %v1141
        %1143 = vdwg.mxu0
        %v1144 = vmul.f32 %v1064, 0.35355338
        %v1145 = vmul.f32 %v1090, 0.35355338
        %v1146 = vmul.f32 %v1116, 0.35355338
        %v1147 = vmul.f32 %v1142, 0.35355338
        %v1148 = vsel %vm1039, %v1144, -inf
        %1149 = vmax.xlane.f32.xlu0 %v1148
        %v1150 = vpop.xlane.xlu0 %1149
        %v1151 = vsel %vm1039, %v1145, -inf
        %1152 = vmax.xlane.f32.xlu0 %v1151
        %v1153 = vpop.xlane.xlu0 %1152
        %v1154 = vsel %vm1039, %v1146, -inf
        %1155 = vmax.xlane.f32.xlu0 %v1154
        %v1156 = vpop.xlane.xlu0 %1155
        %v1157 = vsel %vm1039, %v1147, -inf
        %1158 = vmax.xlane.f32.xlu0 %v1157
        %v1159 = vpop.xlane.xlu0 %1158
        %v1160 = vsub.f32 %v1144, %v1150
        %v1161 = vsub.f32 %v1145, %v1153
        %v1162 = vsub.f32 %v1146, %v1156
        %v1163 = vsub.f32 %v1147, %v1159
        %v1164 = vmul.f32 %v1160, 1.442695
        %v1165 = vpow.pop %v1164
        %v1166 = vmul.f32 %v1161, 1.442695
        %v1167 = vpow.pop %v1166
        %v1168 = vmul.f32 %v1162, 1.442695
        %v1169 = vpow.pop %v1168
        %v1170 = vmul.f32 %v1163, 1.442695
        %v1171 = vpow.pop %v1170
        %v1172 = vsel %vm1039, %v1165, 0.0
        %1173 = vadd.xlane.f32.xlu0 %v1172
        %v1174 = vpop.xlane.xlu0 %1173
        %v1175 = vsel %vm1039, %v1167, 0.0
        %1176 = vadd.xlane.f32.xlu0 %v1175
        %v1177 = vpop.xlane.xlu0 %1176
        %v1178 = vsel %vm1039, %v1169, 0.0
        %1179 = vadd.xlane.f32.xlu0 %v1178
        %v1180 = vpop.xlane.xlu0 %1179
        %v1181 = vsel %vm1039, %v1171, 0.0
        %1182 = vadd.xlane.f32.xlu0 %v1181
        %v1183 = vpop.xlane.xlu0 %1182
        %v1184 = vrcp.pop %v1174
        %v1185 = vrcp.pop %v1177
        %v1186 = vrcp.pop %v1180
        %v1187 = vrcp.pop %v1183
        %v1188 = vmul.f32 %v1165, %v1184
        %v1189 = vmul.f32 %v1167, %v1185
        %v1190 = vmul.f32 %v1169, %v1186
        %v1191 = vmul.f32 %v1171, %v1187
        %v1193 = vsel %vm1039, %v1188, 0
        %1195 = vmatpush.msra.mxu0 0.0
        %1196 = vmatpush.msra.mxu0 0.0
        %1197 = vmatpush.msra.mxu0 0.0
        %1198 = vmatpush.msra.mxu0 0.0
        %1199 = vmatpush.msra.mxu0 0.0
        %1200 = vmatpush.msra.mxu0 0.0
        %1201 = vmatpush.msra.mxu0 0.0
        %1202 = vmatpush.msra.mxu0 0.0
        %1203 = vmatpush.msra.mxu0 0.0
        %1204 = vmatpush.msra.mxu0 0.0
        %1205 = vmatpush.msra.mxu0 0.0
        %1206 = vmatpush.msra.mxu0 0.0
        %1207 = vmatpush.msra.mxu0 0.0
        %1208 = vmatpush.msra.mxu0 0.0
        %1209 = vmatpush.msra.mxu0 0.0
        %1210 = vmatpush.msra.mxu0 %v977
        %1211 = vmatmul.f32.gmra.mxu0 %v1193
        %v1212 = vpop.f32.mrf.mxu0
        %v1213 = vadd.f32 0.0, %v1212
        %1214 = vdwg.mxu0
        %v1216 = vsel %vm1039, %v1189, 0
        %1218 = vmatpush.msra.mxu0 0.0
        %1219 = vmatpush.msra.mxu0 0.0
        %1220 = vmatpush.msra.mxu0 0.0
        %1221 = vmatpush.msra.mxu0 0.0
        %1222 = vmatpush.msra.mxu0 0.0
        %1223 = vmatpush.msra.mxu0 0.0
        %1224 = vmatpush.msra.mxu0 0.0
        %1225 = vmatpush.msra.mxu0 0.0
        %1226 = vmatpush.msra.mxu0 0.0
        %1227 = vmatpush.msra.mxu0 0.0
        %1228 = vmatpush.msra.mxu0 0.0
        %1229 = vmatpush.msra.mxu0 0.0
        %1230 = vmatpush.msra.mxu0 0.0
        %1231 = vmatpush.msra.mxu0 0.0
        %1232 = vmatpush.msra.mxu0 0.0
        %1233 = vmatpush.msra.mxu0 %v997
        %1234 = vmatmul.f32.gmra.mxu0 %v1216
        %v1235 = vpop.f32.mrf.mxu0
        %v1236 = vadd.f32 0.0, %v1235
        %1237 = vdwg.mxu0
        %v1239 = vsel %vm1039, %v1190, 0
        %1241 = vmatpush.msra.mxu0 0.0
        %1242 = vmatpush.msra.mxu0 0.0
        %1243 = vmatpush.msra.mxu0 0.0
        %1244 = vmatpush.msra.mxu0 0.0
        %1245 = vmatpush.msra.mxu0 0.0
        %1246 = vmatpush.msra.mxu0 0.0
        %1247 = vmatpush.msra.mxu0 0.0
        %1248 = vmatpush.msra.mxu0 0.0
        %1249 = vmatpush.msra.mxu0 0.0
        %1250 = vmatpush.msra.mxu0 0.0
        %1251 = vmatpush.msra.mxu0 0.0
        %1252 = vmatpush.msra.mxu0 0.0
        %1253 = vmatpush.msra.mxu0 0.0
        %1254 = vmatpush.msra.mxu0 0.0
        %1255 = vmatpush.msra.mxu0 0.0
        %1256 = vmatpush.msra.mxu0 %v1017
        %1257 = vmatmul.f32.gmra.mxu0 %v1239
        %v1258 = vpop.f32.mrf.mxu0
        %v1259 = vadd.f32 0.0, %v1258
        %1260 = vdwg.mxu0
        %v1262 = vsel %vm1039, %v1191, 0
        %1264 = vmatpush.msra.mxu0 0.0
        %1265 = vmatpush.msra.mxu0 0.0
        %1266 = vmatpush.msra.mxu0 0.0
        %1267 = vmatpush.msra.mxu0 0.0
        %1268 = vmatpush.msra.mxu0 0.0
        %1269 = vmatpush.msra.mxu0 0.0
        %1270 = vmatpush.msra.mxu0 0.0
        %1271 = vmatpush.msra.mxu0 0.0
        %1272 = vmatpush.msra.mxu0 0.0
        %1273 = vmatpush.msra.mxu0 0.0
        %1274 = vmatpush.msra.mxu0 0.0
        %1275 = vmatpush.msra.mxu0 0.0
        %1276 = vmatpush.msra.mxu0 0.0
        %1277 = vmatpush.msra.mxu0 0.0
        %1278 = vmatpush.msra.mxu0 0.0
        %1279 = vmatpush.msra.mxu0 %v1037
        %1280 = vmatmul.f32.gmra.mxu0 %v1262
        %v1281 = vpop.f32.mrf.mxu0
        %v1282 = vadd.f32 0.0, %v1281
        %1283 = vdwg.mxu0
        %v1285 = vsel %vm1039, %v1213, 0
        %1287 = vmatpush.msra.mxu0 0.0
        %1288 = vmatpush.msra.mxu0 0.0
        %1289 = vmatpush.msra.mxu0 0.0
        %1290 = vmatpush.msra.mxu0 0.0
        %1291 = vmatpush.msra.mxu0 0.0
        %1292 = vmatpush.msra.mxu0 0.0
        %1293 = vmatpush.msra.mxu0 0.0
        %1294 = vmatpush.msra.mxu0 0.0
        %1295 = vmatpush.msra.mxu0 0.0
        %1296 = vmatpush.msra.mxu0 0.0
        %1297 = vmatpush.msra.mxu0 0.0
        %1298 = vmatpush.msra.mxu0 0.0
        %1299 = vmatpush.msra.mxu0 0.0
        %1300 = vmatpush.msra.mxu0 0.0
        %1301 = vmatpush.msra.mxu0 0.0
        %1302 = vmatpush.msra.mxu0 %v740
        %1303 = vmatmul.f32.gmra.mxu0 %v1285
        %v1304 = vpop.f32.mrf.mxu0
        %v1305 = vadd.f32 0.0, %v1304
        %1306 = vdwg.mxu0
        %v1308 = vsel %vm1039, %v1236, 0
        %1310 = vmatpush.msra.mxu0 0.0
        %1311 = vmatpush.msra.mxu0 0.0
        %1312 = vmatpush.msra.mxu0 0.0
        %1313 = vmatpush.msra.mxu0 0.0
        %1314 = vmatpush.msra.mxu0 0.0
        %1315 = vmatpush.msra.mxu0 0.0
        %1316 = vmatpush.msra.mxu0 0.0
        %1317 = vmatpush.msra.mxu0 0.0
        %1318 = vmatpush.msra.mxu0 0.0
        %1319 = vmatpush.msra.mxu0 0.0
        %1320 = vmatpush.msra.mxu0 0.0
        %1321 = vmatpush.msra.mxu0 0.0
        %1322 = vmatpush.msra.mxu0 0.0
        %1323 = vmatpush.msra.mxu0 0.0
        %1324 = vmatpush.msra.mxu0 0.0
        %1325 = vmatpush.msra.mxu0 %v741
        %1326 = vmatmul.f32.gmra.mxu0 %v1308
        %v1327 = vpop.f32.mrf.mxu0
        %v1328 = vadd.f32 0.0, %v1327
        %1329 = vdwg.mxu0
        %v1331 = vsel %vm1039, %v1259, 0
        %1333 = vmatpush.msra.mxu0 0.0
        %1334 = vmatpush.msra.mxu0 0.0
        %1335 = vmatpush.msra.mxu0 0.0
        %1336 = vmatpush.msra.mxu0 0.0
        %1337 = vmatpush.msra.mxu0 0.0
        %1338 = vmatpush.msra.mxu0 0.0
        %1339 = vmatpush.msra.mxu0 0.0
        %1340 = vmatpush.msra.mxu0 0.0
        %1341 = vmatpush.msra.mxu0 0.0
        %1342 = vmatpush.msra.mxu0 0.0
        %1343 = vmatpush.msra.mxu0 0.0
        %1344 = vmatpush.msra.mxu0 0.0
        %1345 = vmatpush.msra.mxu0 0.0
        %1346 = vmatpush.msra.mxu0 0.0
        %1347 = vmatpush.msra.mxu0 0.0
        %1348 = vmatpush.msra.mxu0 %v742
        %1349 = vmatmul.f32.gmra.mxu0 %v1331
        %v1350 = vpop.f32.mrf.mxu0
        %v1351 = vadd.f32 0.0, %v1350
        %1352 = vdwg.mxu0
        %v1354 = vsel %vm1039, %v1282, 0
        %1356 = vmatpush.msra.mxu0 0.0
        %1357 = vmatpush.msra.mxu0 0.0
        %1358 = vmatpush.msra.mxu0 0.0
        %1359 = vmatpush.msra.mxu0 0.0
        %1360 = vmatpush.msra.mxu0 0.0
        %1361 = vmatpush.msra.mxu0 0.0
        %1362 = vmatpush.msra.mxu0 0.0
        %1363 = vmatpush.msra.mxu0 0.0
        %1364 = vmatpush.msra.mxu0 0.0
        %1365 = vmatpush.msra.mxu0 0.0
        %1366 = vmatpush.msra.mxu0 0.0
        %1367 = vmatpush.msra.mxu0 0.0
        %1368 = vmatpush.msra.mxu0 0.0
        %1369 = vmatpush.msra.mxu0 0.0
        %1370 = vmatpush.msra.mxu0 0.0
        %1371 = vmatpush.msra.mxu0 %v743
        %1372 = vmatmul.f32.gmra.mxu0 %v1354
        %v1373 = vpop.f32.mrf.mxu0
        %v1374 = vadd.f32 0.0, %v1373
        %1375 = vdwg.mxu0
        %v1376 = vsel %vm771, %v1305, 0.0
        %v1377 = vsel %vm771, %v1328, 0.0
        %v1378 = vadd.f32 %v1376, %v1377
        %v1379 = vsel %vm771, %v1351, 0.0
        %v1380 = vadd.f32 %v1378, %v1379
        %v1381 = vsel %vm771, %v1374, 0.0
        %v1382 = vadd.f32 %v1380, %v1381
        %v1384 = vperm.slane %v744, 0
        %v1386 = vadd.f32 %v1382, %v1384
        %v1387 = vadd.f32 %v678, %v1386
        %v1388 = vsel %vm771, %v1387, 0.0
        %1389 = vadd.xlane.f32.xlu0 %v1388
        %v1390 = vpop.xlane.xlu0 %1389
        %v1391 = vrcp.pop 32.0
        %v1392 = vmul.f32 32.0, %v1391
        %v1393 = vsub.f32 1.0, %v1392
        %v1394 = vmul.f32 %v1391, %v1393
        %v1395 = vadd.f32 %v1391, %v1394
        %vm1396 = vweird.f32 %v1391
        %v1397 = vsel %vm1396, %v1391, %v1395
        %v1398 = vmul.f32 %v1390, %v1397
        %v1399 = vmul.f32 %v1387, %v1387
        %v1400 = vsel %vm771, %v1399, 0.0
        %1401 = vadd.xlane.f32.xlu0 %v1400
        %v1402 = vpop.xlane.xlu0 %1401
        %v1403 = vmul.f32 %v1402, %v1397
        %v1404 = vmul.f32 %v1398, %v1398
        %v1405 = vsub.f32 %v1403, %v1404
        %v1406 = vsub.f32 %v1387, %v1398
        %v1407 = vadd.f32 %v1405, 1e-05
        %v1408 = vrsqrt.pop %v1407
        %v1409 = vmul.f32 %v1408, %v1407
        %v1410 = vmul.f32 %v1409, %v1408
        %v1411 = vmul.f32 0.5, %v1410
        %v1412 = vsub.f32 1.5, %v1411
        %v1413 = vmul.f32 %v1408, %v1412
        %vm1414 = vweird.f32 %v1407
        %vm1415 = vweird.f32 %v1408
        %vm1416 = vmor %vm1414, %vm1415
        %v1417 = vsel %vm1416, %v1408, %v1413
        %v1418 = vmul.f32 %v1406, %v1417
        %v1420 = vperm.slane %v745, 0
        %v1422 = vmul.f32 %v1418, %v1420
        %v1424 = vperm.slane %v746, 0
        %v1426 = vadd.f32 %v1422, %v1424
        %v1428 = vperm.slane %v751, 0
        %v1431 = vsel %vm771, %v1426, 0
        %1433 = vmatpush.msra.mxu0 0.0
        %1434 = vmatpush.msra.mxu0 0.0
        %1435 = vmatpush.msra.mxu0 0.0
        %1436 = vmatpush.msra.mxu0 0.0
        %1437 = vmatpush.msra.mxu0 0.0
        %1438 = vmatpush.msra.mxu0 0.0
        %1439 = vmatpush.msra.mxu0 0.0
        %1440 = vmatpush.msra.mxu0 0.0
        %1441 = vmatpush.msra.mxu0 0.0
        %1442 = vmatpush.msra.mxu0 0.0
        %1443 = vmatpush.msra.mxu0 0.0
        %1444 = vmatpush.msra.mxu0 0.0
        %1445 = vmatpush.msra.mxu0 %v750
        %1446 = vmatpush.msra.mxu0 %v749
        %1447 = vmatpush.msra.mxu0 %v748
        %1448 = vmatpush.msra.mxu0 %v747
        %1449 = vmatmul.f32.gmra.mxu0 %v1431
        %v1450 = vpop.f32.mrf.mxu0
        %v1451 = vadd.f32 %v1428, %v1450
        %1452 = vdwg.mxu0
        %v1453 = vmax.f32 %v1451, 0.0
        %v1455 = vperm.slane %v756, 0
        %v1458 = vsel %vm771, %v1453, 0
        %1460 = vmatpush.msra.mxu0 0.0
        %1461 = vmatpush.msra.mxu0 0.0
        %1462 = vmatpush.msra.mxu0 0.0
        %1463 = vmatpush.msra.mxu0 0.0
        %1464 = vmatpush.msra.mxu0 0.0
        %1465 = vmatpush.msra.mxu0 0.0
        %1466 = vmatpush.msra.mxu0 0.0
        %1467 = vmatpush.msra.mxu0 0.0
        %1468 = vmatpush.msra.mxu0 0.0
        %1469 = vmatpush.msra.mxu0 0.0
        %1470 = vmatpush.msra.mxu0 0.0
        %1471 = vmatpush.msra.mxu0 0.0
        %1472 = vmatpush.msra.mxu0 %v755
        %1473 = vmatpush.msra.mxu0 %v754
        %1474 = vmatpush.msra.mxu0 %v753
        %1475 = vmatpush.msra.mxu0 %v752
        %1476 = vmatmul.f32.gmra.mxu0 %v1458
        %v1477 = vpop.f32.mrf.mxu0
        %v1478 = vadd.f32 %v1455, %v1477
        %1479 = vdwg.mxu0
        %v1480 = vadd.f32 %v1426, %v1478
        %v1481 = vsel %vm771, %v1480, 0.0
        %1482 = vadd.xlane.f32.xlu0 %v1481
        %v1483 = vpop.xlane.xlu0 %1482
        %v1484 = vmul.f32 %v1483, %v1397
        %v1485 = vmul.f32 %v1480, %v1480
        %v1486 = vsel %vm771, %v1485, 0.0
        %1487 = vadd.xlane.f32.xlu0 %v1486
        %v1488 = vpop.xlane.xlu0 %1487
        %v1489 = vmul.f32 %v1488, %v1397
        %v1490 = vmul.f32 %v1484, %v1484
        %v1491 = vsub.f32 %v1489, %v1490
        %v1492 = vsub.f32 %v1480, %v1484
        %v1493 = vadd.f32 %v1491, 1e-05
        %v1494 = vrsqrt.pop %v1493
        %v1495 = vmul.f32 %v1494, %v1493
        %v1496 = vmul.f32 %v1495, %v1494
        %v1497 = vmul.f32 0.5, %v1496
        %v1498 = vsub.f32 1.5, %v1497
        %v1499 = vmul.f32 %v1494, %v1498
        %vm1500 = vweird.f32 %v1493
        %vm1501 = vweird.f32 %v1494
        %vm1502 = vmor %vm1500, %vm1501
        %v1503 = vsel %vm1502, %v1494, %v1499
        %v1504 = vmul.f32 %v1492, %v1503
        %v1506 = vperm.slane %v757, 0
        %v1508 = vmul.f32 %v1504, %v1506
        %v1510 = vperm.slane %v758, 0
        %v1512 = vadd.f32 %v1508, %v1510
        %s1513 = scalar_lea.vmem %s3, 128
        %v1514 = vld [vmem:[%s1513] sm:$0xff]
        %v1515 = vld [vmem:[%s1513 + $0x8] sm:$0xff]
        %v1516 = vld [vmem:[%s1513 + $0x10] sm:$0xff]
        %v1517 = vld [vmem:[%s1513 + $0x18] sm:$0xff]
        %v1518 = vld [vmem:[%s1513 + $0x20] sm:$0xff]
        %v1519 = vld [vmem:[%s1513 + $0x28] sm:$0xff]
        %v1520 = vld [vmem:[%s1513 + $0x30] sm:$0xff]
        %v1521 = vld [vmem:[%s1513 + $0x38] sm:$0xff]
        %v1522 = vld [vmem:[%s1513 + $0x40] sm:$0xff]
        %v1523 = vld [vmem:[%s1513 + $0x48] sm:$0xff]
        %v1524 = vld [vmem:[%s1513 + $0x50] sm:$0xff]
        %v1525 = vld [vmem:[%s1513 + $0x58] sm:$0xff]
        %v1526 = vld [vmem:[%s1513 + $0x60] sm:$0xff]
        %v1527 = vld [vmem:[%s1513 + $0x68] sm:$0xff]
        %v1528 = vld [vmem:[%s1513 + $0x70] sm:$0xff]
        %v1529 = vld [vmem:[%s1513 + $0x78] sm:$0xff]
        %s1530 = scalar_lea.vmem %s4, 4
        %v1531 = vld [vmem:[%s1530] sm:$0x1]
        %v1532 = vld [vmem:[%s1530 + $0x1] sm:$0x1]
        %v1533 = vld [vmem:[%s1530 + $0x2] sm:$0x1]
        %v1534 = vld [vmem:[%s1530 + $0x3] sm:$0x1]
        %s1535 = scalar_lea.vmem %s5, 128
        %v1536 = vld [vmem:[%s1535] sm:$0xff]
        %v1537 = vld [vmem:[%s1535 + $0x8] sm:$0xff]
        %v1538 = vld [vmem:[%s1535 + $0x10] sm:$0xff]
        %v1539 = vld [vmem:[%s1535 + $0x18] sm:$0xff]
        %v1540 = vld [vmem:[%s1535 + $0x20] sm:$0xff]
        %v1541 = vld [vmem:[%s1535 + $0x28] sm:$0xff]
        %v1542 = vld [vmem:[%s1535 + $0x30] sm:$0xff]
        %v1543 = vld [vmem:[%s1535 + $0x38] sm:$0xff]
        %v1544 = vld [vmem:[%s1535 + $0x40] sm:$0xff]
        %v1545 = vld [vmem:[%s1535 + $0x48] sm:$0xff]
        %v1546 = vld [vmem:[%s1535 + $0x50] sm:$0xff]
        %v1547 = vld [vmem:[%s1535 + $0x58] sm:$0xff]
        %v1548 = vld [vmem:[%s1535 + $0x60] sm:$0xff]
        %v1549 = vld [vmem:[%s1535 + $0x68] sm:$0xff]
        %v1550 = vld [vmem:[%s1535 + $0x70] sm:$0xff]
        %v1551 = vld [vmem:[%s1535 + $0x78] sm:$0xff]
        %s1552 = scalar_lea.vmem %s6, 4
        %v1553 = vld [vmem:[%s1552] sm:$0x1]
        %v1554 = vld [vmem:[%s1552 + $0x1] sm:$0x1]
        %v1555 = vld [vmem:[%s1552 + $0x2] sm:$0x1]
        %v1556 = vld [vmem:[%s1552 + $0x3] sm:$0x1]
        %s1557 = scalar_lea.vmem %s7, 128
        %v1558 = vld [vmem:[%s1557] sm:$0xff]
        %v1559 = vld [vmem:[%s1557 + $0x8] sm:$0xff]
        %v1560 = vld [vmem:[%s1557 + $0x10] sm:$0xff]
        %v1561 = vld [vmem:[%s1557 + $0x18] sm:$0xff]
        %v1562 = vld [vmem:[%s1557 + $0x20] sm:$0xff]
        %v1563 = vld [vmem:[%s1557 + $0x28] sm:$0xff]
        %v1564 = vld [vmem:[%s1557 + $0x30] sm:$0xff]
        %v1565 = vld [vmem:[%s1557 + $0x38] sm:$0xff]
        %v1566 = vld [vmem:[%s1557 + $0x40] sm:$0xff]
        %v1567 = vld [vmem:[%s1557 + $0x48] sm:$0xff]
        %v1568 = vld [vmem:[%s1557 + $0x50] sm:$0xff]
        %v1569 = vld [vmem:[%s1557 + $0x58] sm:$0xff]
        %v1570 = vld [vmem:[%s1557 + $0x60] sm:$0xff]
        %v1571 = vld [vmem:[%s1557 + $0x68] sm:$0xff]
        %v1572 = vld [vmem:[%s1557 + $0x70] sm:$0xff]
        %v1573 = vld [vmem:[%s1557 + $0x78] sm:$0xff]
        %s1574 = scalar_lea.vmem %s8, 4
        %v1575 = vld [vmem:[%s1574] sm:$0x1]
        %v1576 = vld [vmem:[%s1574 + $0x1] sm:$0x1]
        %v1577 = vld [vmem:[%s1574 + $0x2] sm:$0x1]
        %v1578 = vld [vmem:[%s1574 + $0x3] sm:$0x1]
        %s1579 = scalar_lea.vmem %s9, 32
        %v1580 = vld [vmem:[%s1579] sm:$0xff]
        %v1581 = vld [vmem:[%s1579 + $0x8] sm:$0xff]
        %v1582 = vld [vmem:[%s1579 + $0x10] sm:$0xff]
        %v1583 = vld [vmem:[%s1579 + $0x18] sm:$0xff]
        %s1584 = scalar_lea.vmem %s10, 1
        %v1585 = vld [vmem:[%s1584] sm:$0x1]
        %s1586 = scalar_lea.vmem %s11, 1
        %v1587 = vld [vmem:[%s1586] sm:$0x1]
        %s1588 = scalar_lea.vmem %s12, 1
        %v1589 = vld [vmem:[%s1588] sm:$0x1]
        %s1590 = scalar_lea.vmem %s13, 32
        %v1591 = vld [vmem:[%s1590] sm:$0xff]
        %v1592 = vld [vmem:[%s1590 + $0x8] sm:$0xff]
        %v1593 = vld [vmem:[%s1590 + $0x10] sm:$0xff]
        %v1594 = vld [vmem:[%s1590 + $0x18] sm:$0xff]
        %s1595 = scalar_lea.vmem %s14, 1
        %v1596 = vld [vmem:[%s1595] sm:$0x1]
        %s1597 = scalar_lea.vmem %s15, 32
        %v1598 = vld [vmem:[%s1597] sm:$0xff]
        %v1599 = vld [vmem:[%s1597 + $0x8] sm:$0xff]
        %v1600 = vld [vmem:[%s1597 + $0x10] sm:$0xff]
        %v1601 = vld [vmem:[%s1597 + $0x18] sm:$0xff]
        %s1602 = scalar_lea.vmem %s16, 1
        %v1603 = vld [vmem:[%s1602] sm:$0x1]
        %s1604 = scalar_lea.vmem %s17, 1
        %v1605 = vld [vmem:[%s1604] sm:$0x1]
        %s1606 = scalar_lea.vmem %s18, 1
        %v1607 = vld [vmem:[%s1606] sm:$0x1]
        %v1612 = vperm.slane %v1531, 0
        %v1613 = vperm.slane %v1532, 0
        %v1614 = vperm.slane %v1533, 0
        %v1615 = vperm.slane %v1534, 0
        %v1621 = vsel %vm771, %v1512, 0
        %1623 = vmatpush.msra.mxu0 0.0
        %1624 = vmatpush.msra.mxu0 0.0
        %1625 = vmatpush.msra.mxu0 0.0
        %1626 = vmatpush.msra.mxu0 0.0
        %1627 = vmatpush.msra.mxu0 0.0
        %1628 = vmatpush.msra.mxu0 0.0
        %1629 = vmatpush.msra.mxu0 0.0
        %1630 = vmatpush.msra.mxu0 0.0
        %1631 = vmatpush.msra.mxu0 0.0
        %1632 = vmatpush.msra.mxu0 0.0
        %1633 = vmatpush.msra.mxu0 0.0
        %1634 = vmatpush.msra.mxu0 0.0
        %1635 = vmatpush.msra.mxu0 %v1517
        %1636 = vmatpush.msra.mxu0 %v1516
        %1637 = vmatpush.msra.mxu0 %v1515
        %1638 = vmatpush.msra.mxu0 %v1514
        %1639 = vmatmul.f32.gmra.mxu0 %v1621
        %v1640 = vpop.f32.mrf.mxu0
        %v1641 = vadd.f32 %v1612, %v1640
        %1642 = vdwg.mxu0
        %1643 = vmatpush.msra.mxu0 0.0
        %1644 = vmatpush.msra.mxu0 0.0
        %1645 = vmatpush.msra.mxu0 0.0
        %1646 = vmatpush.msra.mxu0 0.0
        %1647 = vmatpush.msra.mxu0 0.0
        %1648 = vmatpush.msra.mxu0 0.0
        %1649 = vmatpush.msra.mxu0 0.0
        %1650 = vmatpush.msra.mxu0 0.0
        %1651 = vmatpush.msra.mxu0 0.0
        %1652 = vmatpush.msra.mxu0 0.0
        %1653 = vmatpush.msra.mxu0 0.0
        %1654 = vmatpush.msra.mxu0 0.0
        %1655 = vmatpush.msra.mxu0 %v1521
        %1656 = vmatpush.msra.mxu0 %v1520
        %1657 = vmatpush.msra.mxu0 %v1519
        %1658 = vmatpush.msra.mxu0 %v1518
        %1659 = vmatmul.f32.gmra.mxu0 %v1621
        %v1660 = vpop.f32.mrf.mxu0
        %v1661 = vadd.f32 %v1613, %v1660
        %1662 = vdwg.mxu0
        %1663 = vmatpush.msra.mxu0 0.0
        %1664 = vmatpush.msra.mxu0 0.0
        %1665 = vmatpush.msra.mxu0 0.0
        %1666 = vmatpush.msra.mxu0 0.0
        %1667 = vmatpush.msra.mxu0 0.0
        %1668 = vmatpush.msra.mxu0 0.0
        %1669 = vmatpush.msra.mxu0 0.0
        %1670 = vmatpush.msra.mxu0 0.0
        %1671 = vmatpush.msra.mxu0 0.0
        %1672 = vmatpush.msra.mxu0 0.0
        %1673 = vmatpush.msra.mxu0 0.0
        %1674 = vmatpush.msra.mxu0 0.0
        %1675 = vmatpush.msra.mxu0 %v1525
        %1676 = vmatpush.msra.mxu0 %v1524
        %1677 = vmatpush.msra.mxu0 %v1523
        %1678 = vmatpush.msra.mxu0 %v1522
        %1679 = vmatmul.f32.gmra.mxu0 %v1621
        %v1680 = vpop.f32.mrf.mxu0
        %v1681 = vadd.f32 %v1614, %v1680
        %1682 = vdwg.mxu0
        %1683 = vmatpush.msra.mxu0 0.0
        %1684 = vmatpush.msra.mxu0 0.0
        %1685 = vmatpush.msra.mxu0 0.0
        %1686 = vmatpush.msra.mxu0 0.0
        %1687 = vmatpush.msra.mxu0 0.0
        %1688 = vmatpush.msra.mxu0 0.0
        %1689 = vmatpush.msra.mxu0 0.0
        %1690 = vmatpush.msra.mxu0 0.0
        %1691 = vmatpush.msra.mxu0 0.0
        %1692 = vmatpush.msra.mxu0 0.0
        %1693 = vmatpush.msra.mxu0 0.0
        %1694 = vmatpush.msra.mxu0 0.0
        %1695 = vmatpush.msra.mxu0 %v1529
        %1696 = vmatpush.msra.mxu0 %v1528
        %1697 = vmatpush.msra.mxu0 %v1527
        %1698 = vmatpush.msra.mxu0 %v1526
        %1699 = vmatmul.f32.gmra.mxu0 %v1621
        %v1700 = vpop.f32.mrf.mxu0
        %v1701 = vadd.f32 %v1615, %v1700
        %1702 = vdwg.mxu0
        %v1707 = vperm.slane %v1553, 0
        %v1708 = vperm.slane %v1554, 0
        %v1709 = vperm.slane %v1555, 0
        %v1710 = vperm.slane %v1556, 0
        %1715 = vmatpush.msra.mxu0 0.0
        %1716 = vmatpush.msra.mxu0 0.0
        %1717 = vmatpush.msra.mxu0 0.0
        %1718 = vmatpush.msra.mxu0 0.0
        %1719 = vmatpush.msra.mxu0 0.0
        %1720 = vmatpush.msra.mxu0 0.0
        %1721 = vmatpush.msra.mxu0 0.0
        %1722 = vmatpush.msra.mxu0 0.0
        %1723 = vmatpush.msra.mxu0 0.0
        %1724 = vmatpush.msra.mxu0 0.0
        %1725 = vmatpush.msra.mxu0 0.0
        %1726 = vmatpush.msra.mxu0 0.0
        %1727 = vmatpush.msra.mxu0 %v1539
        %1728 = vmatpush.msra.mxu0 %v1538
        %1729 = vmatpush.msra.mxu0 %v1537
        %1730 = vmatpush.msra.mxu0 %v1536
        %1731 = vmatmul.f32.gmra.mxu0 %v1621
        %v1732 = vpop.f32.mrf.mxu0
        %v1733 = vadd.f32 %v1707, %v1732
        %1734 = vdwg.mxu0
        %1735 = vmatpush.msra.mxu0 0.0
        %1736 = vmatpush.msra.mxu0 0.0
        %1737 = vmatpush.msra.mxu0 0.0
        %1738 = vmatpush.msra.mxu0 0.0
        %1739 = vmatpush.msra.mxu0 0.0
        %1740 = vmatpush.msra.mxu0 0.0
        %1741 = vmatpush.msra.mxu0 0.0
        %1742 = vmatpush.msra.mxu0 0.0
        %1743 = vmatpush.msra.mxu0 0.0
        %1744 = vmatpush.msra.mxu0 0.0
        %1745 = vmatpush.msra.mxu0 0.0
        %1746 = vmatpush.msra.mxu0 0.0
        %1747 = vmatpush.msra.mxu0 %v1543
        %1748 = vmatpush.msra.mxu0 %v1542
        %1749 = vmatpush.msra.mxu0 %v1541
        %1750 = vmatpush.msra.mxu0 %v1540
        %1751 = vmatmul.f32.gmra.mxu0 %v1621
        %v1752 = vpop.f32.mrf.mxu0
        %v1753 = vadd.f32 %v1708, %v1752
        %1754 = vdwg.mxu0
        %1755 = vmatpush.msra.mxu0 0.0
        %1756 = vmatpush.msra.mxu0 0.0
        %1757 = vmatpush.msra.mxu0 0.0
        %1758 = vmatpush.msra.mxu0 0.0
        %1759 = vmatpush.msra.mxu0 0.0
        %1760 = vmatpush.msra.mxu0 0.0
        %1761 = vmatpush.msra.mxu0 0.0
        %1762 = vmatpush.msra.mxu0 0.0
        %1763 = vmatpush.msra.mxu0 0.0
        %1764 = vmatpush.msra.mxu0 0.0
        %1765 = vmatpush.msra.mxu0 0.0
        %1766 = vmatpush.msra.mxu0 0.0
        %1767 = vmatpush.msra.mxu0 %v1547
        %1768 = vmatpush.msra.mxu0 %v1546
        %1769 = vmatpush.msra.mxu0 %v1545
        %1770 = vmatpush.msra.mxu0 %v1544
        %1771 = vmatmul.f32.gmra.mxu0 %v1621
        %v1772 = vpop.f32.mrf.mxu0
        %v1773 = vadd.f32 %v1709, %v1772
        %1774 = vdwg.mxu0
        %1775 = vmatpush.msra.mxu0 0.0
        %1776 = vmatpush.msra.mxu0 0.0
        %1777 = vmatpush.msra.mxu0 0.0
        %1778 = vmatpush.msra.mxu0 0.0
        %1779 = vmatpush.msra.mxu0 0.0
        %1780 = vmatpush.msra.mxu0 0.0
        %1781 = vmatpush.msra.mxu0 0.0
        %1782 = vmatpush.msra.mxu0 0.0
        %1783 = vmatpush.msra.mxu0 0.0
        %1784 = vmatpush.msra.mxu0 0.0
        %1785 = vmatpush.msra.mxu0 0.0
        %1786 = vmatpush.msra.mxu0 0.0
        %1787 = vmatpush.msra.mxu0 %v1551
        %1788 = vmatpush.msra.mxu0 %v1550
        %1789 = vmatpush.msra.mxu0 %v1549
        %1790 = vmatpush.msra.mxu0 %v1548
        %1791 = vmatmul.f32.gmra.mxu0 %v1621
        %v1792 = vpop.f32.mrf.mxu0
        %v1793 = vadd.f32 %v1710, %v1792
        %1794 = vdwg.mxu0
        %v1799 = vperm.slane %v1575, 0
        %v1800 = vperm.slane %v1576, 0
        %v1801 = vperm.slane %v1577, 0
        %v1802 = vperm.slane %v1578, 0
        %1807 = vmatpush.msra.mxu0 0.0
        %1808 = vmatpush.msra.mxu0 0.0
        %1809 = vmatpush.msra.mxu0 0.0
        %1810 = vmatpush.msra.mxu0 0.0
        %1811 = vmatpush.msra.mxu0 0.0
        %1812 = vmatpush.msra.mxu0 0.0
        %1813 = vmatpush.msra.mxu0 0.0
        %1814 = vmatpush.msra.mxu0 0.0
        %1815 = vmatpush.msra.mxu0 0.0
        %1816 = vmatpush.msra.mxu0 0.0
        %1817 = vmatpush.msra.mxu0 0.0
        %1818 = vmatpush.msra.mxu0 0.0
        %1819 = vmatpush.msra.mxu0 %v1561
        %1820 = vmatpush.msra.mxu0 %v1560
        %1821 = vmatpush.msra.mxu0 %v1559
        %1822 = vmatpush.msra.mxu0 %v1558
        %1823 = vmatmul.f32.gmra.mxu0 %v1621
        %v1824 = vpop.f32.mrf.mxu0
        %v1825 = vadd.f32 %v1799, %v1824
        %1826 = vdwg.mxu0
        %1827 = vmatpush.msra.mxu0 0.0
        %1828 = vmatpush.msra.mxu0 0.0
        %1829 = vmatpush.msra.mxu0 0.0
        %1830 = vmatpush.msra.mxu0 0.0
        %1831 = vmatpush.msra.mxu0 0.0
        %1832 = vmatpush.msra.mxu0 0.0
        %1833 = vmatpush.msra.mxu0 0.0
        %1834 = vmatpush.msra.mxu0 0.0
        %1835 = vmatpush.msra.mxu0 0.0
        %1836 = vmatpush.msra.mxu0 0.0
        %1837 = vmatpush.msra.mxu0 0.0
        %1838 = vmatpush.msra.mxu0 0.0
        %1839 = vmatpush.msra.mxu0 %v1565
        %1840 = vmatpush.msra.mxu0 %v1564
        %1841 = vmatpush.msra.mxu0 %v1563
        %1842 = vmatpush.msra.mxu0 %v1562
        %1843 = vmatmul.f32.gmra.mxu0 %v1621
        %v1844 = vpop.f32.mrf.mxu0
        %v1845 = vadd.f32 %v1800, %v1844
        %1846 = vdwg.mxu0
        %1847 = vmatpush.msra.mxu0 0.0
        %1848 = vmatpush.msra.mxu0 0.0
        %1849 = vmatpush.msra.mxu0 0.0
        %1850 = vmatpush.msra.mxu0 0.0
        %1851 = vmatpush.msra.mxu0 0.0
        %1852 = vmatpush.msra.mxu0 0.0
        %1853 = vmatpush.msra.mxu0 0.0
        %1854 = vmatpush.msra.mxu0 0.0
        %1855 = vmatpush.msra.mxu0 0.0
        %1856 = vmatpush.msra.mxu0 0.0
        %1857 = vmatpush.msra.mxu0 0.0
        %1858 = vmatpush.msra.mxu0 0.0
        %1859 = vmatpush.msra.mxu0 %v1569
        %1860 = vmatpush.msra.mxu0 %v1568
        %1861 = vmatpush.msra.mxu0 %v1567
        %1862 = vmatpush.msra.mxu0 %v1566
        %1863 = vmatmul.f32.gmra.mxu0 %v1621
        %v1864 = vpop.f32.mrf.mxu0
        %v1865 = vadd.f32 %v1801, %v1864
        %1866 = vdwg.mxu0
        %1867 = vmatpush.msra.mxu0 0.0
        %1868 = vmatpush.msra.mxu0 0.0
        %1869 = vmatpush.msra.mxu0 0.0
        %1870 = vmatpush.msra.mxu0 0.0
        %1871 = vmatpush.msra.mxu0 0.0
        %1872 = vmatpush.msra.mxu0 0.0
        %1873 = vmatpush.msra.mxu0 0.0
        %1874 = vmatpush.msra.mxu0 0.0
        %1875 = vmatpush.msra.mxu0 0.0
        %1876 = vmatpush.msra.mxu0 0.0
        %1877 = vmatpush.msra.mxu0 0.0
        %1878 = vmatpush.msra.mxu0 0.0
        %1879 = vmatpush.msra.mxu0 %v1573
        %1880 = vmatpush.msra.mxu0 %v1572
        %1881 = vmatpush.msra.mxu0 %v1571
        %1882 = vmatpush.msra.mxu0 %v1570
        %1883 = vmatmul.f32.gmra.mxu0 %v1621
        %v1884 = vpop.f32.mrf.mxu0
        %v1885 = vadd.f32 %v1802, %v1884
        %1886 = vdwg.mxu0
        %v1888 = vsel %vm1039, %v1641, 0
        %v1891 = vsel %vm1039, %v1733, 0
        %1893 = vmatpush.xpose.msra.mxu0 0.0
        %1894 = vmatpush.xpose.msra.mxu0 0.0
        %1895 = vmatpush.xpose.msra.mxu0 0.0
        %1896 = vmatpush.xpose.msra.mxu0 0.0
        %1897 = vmatpush.xpose.msra.mxu0 0.0
        %1898 = vmatpush.xpose.msra.mxu0 0.0
        %1899 = vmatpush.xpose.msra.mxu0 0.0
        %1900 = vmatpush.xpose.msra.mxu0 0.0
        %1901 = vmatpush.xpose.msra.mxu0 0.0
        %1902 = vmatpush.xpose.msra.mxu0 0.0
        %1903 = vmatpush.xpose.msra.mxu0 0.0
        %1904 = vmatpush.xpose.msra.mxu0 0.0
        %1905 = vmatpush.xpose.msra.mxu0 0.0
        %1906 = vmatpush.xpose.msra.mxu0 0.0
        %1907 = vmatpush.xpose.msra.mxu0 0.0
        %1908 = vmatpush.xpose.msra.mxu0 %v1891
        %1909 = vmatmul.f32.gmra.mxu0 %v1888
        %v1910 = vpop.f32.mrf.mxu0
        %v1911 = vadd.f32 0.0, %v1910
        %1912 = vdwg.mxu0
        %v1914 = vsel %vm1039, %v1661, 0
        %v1917 = vsel %vm1039, %v1753, 0
        %1919 = vmatpush.xpose.msra.mxu0 0.0
        %1920 = vmatpush.xpose.msra.mxu0 0.0
        %1921 = vmatpush.xpose.msra.mxu0 0.0
        %1922 = vmatpush.xpose.msra.mxu0 0.0
        %1923 = vmatpush.xpose.msra.mxu0 0.0
        %1924 = vmatpush.xpose.msra.mxu0 0.0
        %1925 = vmatpush.xpose.msra.mxu0 0.0
        %1926 = vmatpush.xpose.msra.mxu0 0.0
        %1927 = vmatpush.xpose.msra.mxu0 0.0
        %1928 = vmatpush.xpose.msra.mxu0 0.0
        %1929 = vmatpush.xpose.msra.mxu0 0.0
        %1930 = vmatpush.xpose.msra.mxu0 0.0
        %1931 = vmatpush.xpose.msra.mxu0 0.0
        %1932 = vmatpush.xpose.msra.mxu0 0.0
        %1933 = vmatpush.xpose.msra.mxu0 0.0
        %1934 = vmatpush.xpose.msra.mxu0 %v1917
        %1935 = vmatmul.f32.gmra.mxu0 %v1914
        %v1936 = vpop.f32.mrf.mxu0
        %v1937 = vadd.f32 0.0, %v1936
        %1938 = vdwg.mxu0
        %v1940 = vsel %vm1039, %v1681, 0
        %v1943 = vsel %vm1039, %v1773, 0
        %1945 = vmatpush.xpose.msra.mxu0 0.0
        %1946 = vmatpush.xpose.msra.mxu0 0.0
        %1947 = vmatpush.xpose.msra.mxu0 0.0
        %1948 = vmatpush.xpose.msra.mxu0 0.0
        %1949 = vmatpush.xpose.msra.mxu0 0.0
        %1950 = vmatpush.xpose.msra.mxu0 0.0
        %1951 = vmatpush.xpose.msra.mxu0 0.0
        %1952 = vmatpush.xpose.msra.mxu0 0.0
        %1953 = vmatpush.xpose.msra.mxu0 0.0
        %1954 = vmatpush.xpose.msra.mxu0 0.0
        %1955 = vmatpush.xpose.msra.mxu0 0.0
        %1956 = vmatpush.xpose.msra.mxu0 0.0
        %1957 = vmatpush.xpose.msra.mxu0 0.0
        %1958 = vmatpush.xpose.msra.mxu0 0.0
        %1959 = vmatpush.xpose.msra.mxu0 0.0
        %1960 = vmatpush.xpose.msra.mxu0 %v1943
        %1961 = vmatmul.f32.gmra.mxu0 %v1940
        %v1962 = vpop.f32.mrf.mxu0
        %v1963 = vadd.f32 0.0, %v1962
        %1964 = vdwg.mxu0
        %v1966 = vsel %vm1039, %v1701, 0
        %v1969 = vsel %vm1039, %v1793, 0
        %1971 = vmatpush.xpose.msra.mxu0 0.0
        %1972 = vmatpush.xpose.msra.mxu0 0.0
        %1973 = vmatpush.xpose.msra.mxu0 0.0
        %1974 = vmatpush.xpose.msra.mxu0 0.0
        %1975 = vmatpush.xpose.msra.mxu0 0.0
        %1976 = vmatpush.xpose.msra.mxu0 0.0
        %1977 = vmatpush.xpose.msra.mxu0 0.0
        %1978 = vmatpush.xpose.msra.mxu0 0.0
        %1979 = vmatpush.xpose.msra.mxu0 0.0
        %1980 = vmatpush.xpose.msra.mxu0 0.0
        %1981 = vmatpush.xpose.msra.mxu0 0.0
        %1982 = vmatpush.xpose.msra.mxu0 0.0
        %1983 = vmatpush.xpose.msra.mxu0 0.0
        %1984 = vmatpush.xpose.msra.mxu0 0.0
        %1985 = vmatpush.xpose.msra.mxu0 0.0
        %1986 = vmatpush.xpose.msra.mxu0 %v1969
        %1987 = vmatmul.f32.gmra.mxu0 %v1966
        %v1988 = vpop.f32.mrf.mxu0
        %v1989 = vadd.f32 0.0, %v1988
        %1990 = vdwg.mxu0
        %v1991 = vmul.f32 %v1911, 0.35355338
        %v1992 = vmul.f32 %v1937, 0.35355338
        %v1993 = vmul.f32 %v1963, 0.35355338
        %v1994 = vmul.f32 %v1989, 0.35355338
        %v1995 = vsel %vm1039, %v1991, -inf
        %1996 = vmax.xlane.f32.xlu0 %v1995
        %v1997 = vpop.xlane.xlu0 %1996
        %v1998 = vsel %vm1039, %v1992, -inf
        %1999 = vmax.xlane.f32.xlu0 %v1998
        %v2000 = vpop.xlane.xlu0 %1999
        %v2001 = vsel %vm1039, %v1993, -inf
        %2002 = vmax.xlane.f32.xlu0 %v2001
        %v2003 = vpop.xlane.xlu0 %2002
        %v2004 = vsel %vm1039, %v1994, -inf
        %2005 = vmax.xlane.f32.xlu0 %v2004
        %v2006 = vpop.xlane.xlu0 %2005
        %v2007 = vsub.f32 %v1991, %v1997
        %v2008 = vsub.f32 %v1992, %v2000
        %v2009 = vsub.f32 %v1993, %v2003
        %v2010 = vsub.f32 %v1994, %v2006
        %v2011 = vmul.f32 %v2007, 1.442695
        %v2012 = vpow.pop %v2011
        %v2013 = vmul.f32 %v2008, 1.442695
        %v2014 = vpow.pop %v2013
        %v2015 = vmul.f32 %v2009, 1.442695
        %v2016 = vpow.pop %v2015
        %v2017 = vmul.f32 %v2010, 1.442695
        %v2018 = vpow.pop %v2017
        %v2019 = vsel %vm1039, %v2012, 0.0
        %2020 = vadd.xlane.f32.xlu0 %v2019
        %v2021 = vpop.xlane.xlu0 %2020
        %v2022 = vsel %vm1039, %v2014, 0.0
        %2023 = vadd.xlane.f32.xlu0 %v2022
        %v2024 = vpop.xlane.xlu0 %2023
        %v2025 = vsel %vm1039, %v2016, 0.0
        %2026 = vadd.xlane.f32.xlu0 %v2025
        %v2027 = vpop.xlane.xlu0 %2026
        %v2028 = vsel %vm1039, %v2018, 0.0
        %2029 = vadd.xlane.f32.xlu0 %v2028
        %v2030 = vpop.xlane.xlu0 %2029
        %v2031 = vrcp.pop %v2021
        %v2032 = vrcp.pop %v2024
        %v2033 = vrcp.pop %v2027
        %v2034 = vrcp.pop %v2030
        %v2035 = vmul.f32 %v2012, %v2031
        %v2036 = vmul.f32 %v2014, %v2032
        %v2037 = vmul.f32 %v2016, %v2033
        %v2038 = vmul.f32 %v2018, %v2034
        %v2040 = vsel %vm1039, %v2035, 0
        %2042 = vmatpush.msra.mxu0 0.0
        %2043 = vmatpush.msra.mxu0 0.0
        %2044 = vmatpush.msra.mxu0 0.0
        %2045 = vmatpush.msra.mxu0 0.0
        %2046 = vmatpush.msra.mxu0 0.0
        %2047 = vmatpush.msra.mxu0 0.0
        %2048 = vmatpush.msra.mxu0 0.0
        %2049 = vmatpush.msra.mxu0 0.0
        %2050 = vmatpush.msra.mxu0 0.0
        %2051 = vmatpush.msra.mxu0 0.0
        %2052 = vmatpush.msra.mxu0 0.0
        %2053 = vmatpush.msra.mxu0 0.0
        %2054 = vmatpush.msra.mxu0 0.0
        %2055 = vmatpush.msra.mxu0 0.0
        %2056 = vmatpush.msra.mxu0 0.0
        %2057 = vmatpush.msra.mxu0 %v1825
        %2058 = vmatmul.f32.gmra.mxu0 %v2040
        %v2059 = vpop.f32.mrf.mxu0
        %v2060 = vadd.f32 0.0, %v2059
        %2061 = vdwg.mxu0
        %v2063 = vsel %vm1039, %v2036, 0
        %2065 = vmatpush.msra.mxu0 0.0
        %2066 = vmatpush.msra.mxu0 0.0
        %2067 = vmatpush.msra.mxu0 0.0
        %2068 = vmatpush.msra.mxu0 0.0
        %2069 = vmatpush.msra.mxu0 0.0
        %2070 = vmatpush.msra.mxu0 0.0
        %2071 = vmatpush.msra.mxu0 0.0
        %2072 = vmatpush.msra.mxu0 0.0
        %2073 = vmatpush.msra.mxu0 0.0
        %2074 = vmatpush.msra.mxu0 0.0
        %2075 = vmatpush.msra.mxu0 0.0
        %2076 = vmatpush.msra.mxu0 0.0
        %2077 = vmatpush.msra.mxu0 0.0
        %2078 = vmatpush.msra.mxu0 0.0
        %2079 = vmatpush.msra.mxu0 0.0
        %2080 = vmatpush.msra.mxu0 %v1845
        %2081 = vmatmul.f32.gmra.mxu0 %v2063
        %v2082 = vpop.f32.mrf.mxu0
        %v2083 = vadd.f32 0.0, %v2082
        %2084 = vdwg.mxu0
        %v2086 = vsel %vm1039, %v2037, 0
        %2088 = vmatpush.msra.mxu0 0.0
        %2089 = vmatpush.msra.mxu0 0.0
        %2090 = vmatpush.msra.mxu0 0.0
        %2091 = vmatpush.msra.mxu0 0.0
        %2092 = vmatpush.msra.mxu0 0.0
        %2093 = vmatpush.msra.mxu0 0.0
        %2094 = vmatpush.msra.mxu0 0.0
        %2095 = vmatpush.msra.mxu0 0.0
        %2096 = vmatpush.msra.mxu0 0.0
        %2097 = vmatpush.msra.mxu0 0.0
        %2098 = vmatpush.msra.mxu0 0.0
        %2099 = vmatpush.msra.mxu0 0.0
        %2100 = vmatpush.msra.mxu0 0.0
        %2101 = vmatpush.msra.mxu0 0.0
        %2102 = vmatpush.msra.mxu0 0.0
        %2103 = vmatpush.msra.mxu0 %v1865
        %2104 = vmatmul.f32.gmra.mxu0 %v2086
        %v2105 = vpop.f32.mrf.mxu0
        %v2106 = vadd.f32 0.0, %v2105
        %2107 = vdwg.mxu0
        %v2109 = vsel %vm1039, %v2038, 0
        %2111 = vmatpush.msra.mxu0 0.0
        %2112 = vmatpush.msra.mxu0 0.0
        %2113 = vmatpush.msra.mxu0 0.0
        %2114 = vmatpush.msra.mxu0 0.0
        %2115 = vmatpush.msra.mxu0 0.0
        %2116 = vmatpush.msra.mxu0 0.0
        %2117 = vmatpush.msra.mxu0 0.0
        %2118 = vmatpush.msra.mxu0 0.0
        %2119 = vmatpush.msra.mxu0 0.0
        %2120 = vmatpush.msra.mxu0 0.0
        %2121 = vmatpush.msra.mxu0 0.0
        %2122 = vmatpush.msra.mxu0 0.0
        %2123 = vmatpush.msra.mxu0 0.0
        %2124 = vmatpush.msra.mxu0 0.0
        %2125 = vmatpush.msra.mxu0 0.0
        %2126 = vmatpush.msra.mxu0 %v1885
        %2127 = vmatmul.f32.gmra.mxu0 %v2109
        %v2128 = vpop.f32.mrf.mxu0
        %v2129 = vadd.f32 0.0, %v2128
        %2130 = vdwg.mxu0
        %v2132 = vsel %vm1039, %v2060, 0
        %2134 = vmatpush.msra.mxu0 0.0
        %2135 = vmatpush.msra.mxu0 0.0
        %2136 = vmatpush.msra.mxu0 0.0
        %2137 = vmatpush.msra.mxu0 0.0
        %2138 = vmatpush.msra.mxu0 0.0
        %2139 = vmatpush.msra.mxu0 0.0
        %2140 = vmatpush.msra.mxu0 0.0
        %2141 = vmatpush.msra.mxu0 0.0
        %2142 = vmatpush.msra.mxu0 0.0
        %2143 = vmatpush.msra.mxu0 0.0
        %2144 = vmatpush.msra.mxu0 0.0
        %2145 = vmatpush.msra.mxu0 0.0
        %2146 = vmatpush.msra.mxu0 0.0
        %2147 = vmatpush.msra.mxu0 0.0
        %2148 = vmatpush.msra.mxu0 0.0
        %2149 = vmatpush.msra.mxu0 %v1580
        %2150 = vmatmul.f32.gmra.mxu0 %v2132
        %v2151 = vpop.f32.mrf.mxu0
        %v2152 = vadd.f32 0.0, %v2151
        %2153 = vdwg.mxu0
        %v2155 = vsel %vm1039, %v2083, 0
        %2157 = vmatpush.msra.mxu0 0.0
        %2158 = vmatpush.msra.mxu0 0.0
        %2159 = vmatpush.msra.mxu0 0.0
        %2160 = vmatpush.msra.mxu0 0.0
        %2161 = vmatpush.msra.mxu0 0.0
        %2162 = vmatpush.msra.mxu0 0.0
        %2163 = vmatpush.msra.mxu0 0.0
        %2164 = vmatpush.msra.mxu0 0.0
        %2165 = vmatpush.msra.mxu0 0.0
        %2166 = vmatpush.msra.mxu0 0.0
        %2167 = vmatpush.msra.mxu0 0.0
        %2168 = vmatpush.msra.mxu0 0.0
        %2169 = vmatpush.msra.mxu0 0.0
        %2170 = vmatpush.msra.mxu0 0.0
        %2171 = vmatpush.msra.mxu0 0.0
        %2172 = vmatpush.msra.mxu0 %v1581
        %2173 = vmatmul.f32.gmra.mxu0 %v2155
        %v2174 = vpop.f32.mrf.mxu0
        %v2175 = vadd.f32 0.0, %v2174
        %2176 = vdwg.mxu0
        %v2178 = vsel %vm1039, %v2106, 0
        %2180 = vmatpush.msra.mxu0 0.0
        %2181 = vmatpush.msra.mxu0 0.0
        %2182 = vmatpush.msra.mxu0 0.0
        %2183 = vmatpush.msra.mxu0 0.0
        %2184 = vmatpush.msra.mxu0 0.0
        %2185 = vmatpush.msra.mxu0 0.0
        %2186 = vmatpush.msra.mxu0 0.0
        %2187 = vmatpush.msra.mxu0 0.0
        %2188 = vmatpush.msra.mxu0 0.0
        %2189 = vmatpush.msra.mxu0 0.0
        %2190 = vmatpush.msra.mxu0 0.0
        %2191 = vmatpush.msra.mxu0 0.0
        %2192 = vmatpush.msra.mxu0 0.0
        %2193 = vmatpush.msra.mxu0 0.0
        %2194 = vmatpush.msra.mxu0 0.0
        %2195 = vmatpush.msra.mxu0 %v1582
        %2196 = vmatmul.f32.gmra.mxu0 %v2178
        %v2197 = vpop.f32.mrf.mxu0
        %v2198 = vadd.f32 0.0, %v2197
        %2199 = vdwg.mxu0
        %v2201 = vsel %vm1039, %v2129, 0
        %2203 = vmatpush.msra.mxu0 0.0
        %2204 = vmatpush.msra.mxu0 0.0
        %2205 = vmatpush.msra.mxu0 0.0
        %2206 = vmatpush.msra.mxu0 0.0
        %2207 = vmatpush.msra.mxu0 0.0
        %2208 = vmatpush.msra.mxu0 0.0
        %2209 = vmatpush.msra.mxu0 0.0
        %2210 = vmatpush.msra.mxu0 0.0
        %2211 = vmatpush.msra.mxu0 0.0
        %2212 = vmatpush.msra.mxu0 0.0
        %2213 = vmatpush.msra.mxu0 0.0
        %2214 = vmatpush.msra.mxu0 0.0
        %2215 = vmatpush.msra.mxu0 0.0
        %2216 = vmatpush.msra.mxu0 0.0
        %2217 = vmatpush.msra.mxu0 0.0
        %2218 = vmatpush.msra.mxu0 %v1583
        %2219 = vmatmul.f32.gmra.mxu0 %v2201
        %v2220 = vpop.f32.mrf.mxu0
        %v2221 = vadd.f32 0.0, %v2220
        %2222 = vdwg.mxu0
        %v2223 = vsel %vm771, %v2152, 0.0
        %v2224 = vsel %vm771, %v2175, 0.0
        %v2225 = vadd.f32 %v2223, %v2224
        %v2226 = vsel %vm771, %v2198, 0.0
        %v2227 = vadd.f32 %v2225, %v2226
        %v2228 = vsel %vm771, %v2221, 0.0
        %v2229 = vadd.f32 %v2227, %v2228
        %v2231 = vperm.slane %v1585, 0
        %v2233 = vadd.f32 %v2229, %v2231
        %v2234 = vadd.f32 %v1512, %v2233
        %v2235 = vsel %vm771, %v2234, 0.0
        %2236 = vadd.xlane.f32.xlu0 %v2235
        %v2237 = vpop.xlane.xlu0 %2236
        %v2238 = vmul.f32 %v2237, %v1397
        %v2239 = vmul.f32 %v2234, %v2234
        %v2240 = vsel %vm771, %v2239, 0.0
        %2241 = vadd.xlane.f32.xlu0 %v2240
        %v2242 = vpop.xlane.xlu0 %2241
        %v2243 = vmul.f32 %v2242, %v1397
        %v2244 = vmul.f32 %v2238, %v2238
        %v2245 = vsub.f32 %v2243, %v2244
        %v2246 = vsub.f32 %v2234, %v2238
        %v2247 = vadd.f32 %v2245, 1e-05
        %v2248 = vrsqrt.pop %v2247
        %v2249 = vmul.f32 %v2248, %v2247
        %v2250 = vmul.f32 %v2249, %v2248
        %v2251 = vmul.f32 0.5, %v2250
        %v2252 = vsub.f32 1.5, %v2251
        %v2253 = vmul.f32 %v2248, %v2252
        %vm2254 = vweird.f32 %v2247
        %vm2255 = vweird.f32 %v2248
        %vm2256 = vmor %vm2254, %vm2255
        %v2257 = vsel %vm2256, %v2248, %v2253
        %v2258 = vmul.f32 %v2246, %v2257
        %v2260 = vperm.slane %v1587, 0
        %v2262 = vmul.f32 %v2258, %v2260
        %v2264 = vperm.slane %v1589, 0
        %v2266 = vadd.f32 %v2262, %v2264
        %v2268 = vperm.slane %v1596, 0
        %v2271 = vsel %vm771, %v2266, 0
        %2273 = vmatpush.msra.mxu0 0.0
        %2274 = vmatpush.msra.mxu0 0.0
        %2275 = vmatpush.msra.mxu0 0.0
        %2276 = vmatpush.msra.mxu0 0.0
        %2277 = vmatpush.msra.mxu0 0.0
        %2278 = vmatpush.msra.mxu0 0.0
        %2279 = vmatpush.msra.mxu0 0.0
        %2280 = vmatpush.msra.mxu0 0.0
        %2281 = vmatpush.msra.mxu0 0.0
        %2282 = vmatpush.msra.mxu0 0.0
        %2283 = vmatpush.msra.mxu0 0.0
        %2284 = vmatpush.msra.mxu0 0.0
        %2285 = vmatpush.msra.mxu0 %v1594
        %2286 = vmatpush.msra.mxu0 %v1593
        %2287 = vmatpush.msra.mxu0 %v1592
        %2288 = vmatpush.msra.mxu0 %v1591
        %2289 = vmatmul.f32.gmra.mxu0 %v2271
        %v2290 = vpop.f32.mrf.mxu0
        %v2291 = vadd.f32 %v2268, %v2290
        %2292 = vdwg.mxu0
        %v2293 = vmax.f32 %v2291, 0.0
        %v2295 = vperm.slane %v1603, 0
        %v2298 = vsel %vm771, %v2293, 0
        %2300 = vmatpush.msra.mxu0 0.0
        %2301 = vmatpush.msra.mxu0 0.0
        %2302 = vmatpush.msra.mxu0 0.0
        %2303 = vmatpush.msra.mxu0 0.0
        %2304 = vmatpush.msra.mxu0 0.0
        %2305 = vmatpush.msra.mxu0 0.0
        %2306 = vmatpush.msra.mxu0 0.0
        %2307 = vmatpush.msra.mxu0 0.0
        %2308 = vmatpush.msra.mxu0 0.0
        %2309 = vmatpush.msra.mxu0 0.0
        %2310 = vmatpush.msra.mxu0 0.0
        %2311 = vmatpush.msra.mxu0 0.0
        %2312 = vmatpush.msra.mxu0 %v1601
        %2313 = vmatpush.msra.mxu0 %v1600
        %2314 = vmatpush.msra.mxu0 %v1599
        %2315 = vmatpush.msra.mxu0 %v1598
        %2316 = vmatmul.f32.gmra.mxu0 %v2298
        %v2317 = vpop.f32.mrf.mxu0
        %v2318 = vadd.f32 %v2295, %v2317
        %2319 = vdwg.mxu0
        %v2320 = vadd.f32 %v2266, %v2318
        %v2321 = vsel %vm771, %v2320, 0.0
        %2322 = vadd.xlane.f32.xlu0 %v2321
        %v2323 = vpop.xlane.xlu0 %2322
        %v2324 = vmul.f32 %v2323, %v1397
        %v2325 = vmul.f32 %v2320, %v2320
        %v2326 = vsel %vm771, %v2325, 0.0
        %2327 = vadd.xlane.f32.xlu0 %v2326
        %v2328 = vpop.xlane.xlu0 %2327
        %v2329 = vmul.f32 %v2328, %v1397
        %v2330 = vmul.f32 %v2324, %v2324
        %v2331 = vsub.f32 %v2329, %v2330
        %v2332 = vsub.f32 %v2320, %v2324
        %v2333 = vadd.f32 %v2331, 1e-05
        %v2334 = vrsqrt.pop %v2333
        %v2335 = vmul.f32 %v2334, %v2333
        %v2336 = vmul.f32 %v2335, %v2334
        %v2337 = vmul.f32 0.5, %v2336
        %v2338 = vsub.f32 1.5, %v2337
        %v2339 = vmul.f32 %v2334, %v2338
        %vm2340 = vweird.f32 %v2333
        %vm2341 = vweird.f32 %v2334
        %vm2342 = vmor %vm2340, %vm2341
        %v2343 = vsel %vm2342, %v2334, %v2339
        %v2344 = vmul.f32 %v2332, %v2343
        %v2346 = vperm.slane %v1605, 0
        %v2348 = vmul.f32 %v2344, %v2346
        %v2350 = vperm.slane %v1607, 0
        %v2352 = vadd.f32 %v2348, %v2350
        %v2353 = vld [vmem:[%s19] sm:$0xff]
        %v2354 = vld [vmem:[%s19 + $0x8] sm:$0xff]
        %v2355 = vld [vmem:[%s19 + $0x10] sm:$0xff]
        %v2356 = vld [vmem:[%s19 + $0x18] sm:$0xff]
        %v2357 = vld [vmem:[%s20] sm:$0x1]
        %v2359 = vperm.slane %v2357, 0
        %v2362 = vsel %vm771, %v2352, 0
        %2364 = vmatpush.msra.mxu0 0.0
        %2365 = vmatpush.msra.mxu0 0.0
        %2366 = vmatpush.msra.mxu0 0.0
        %2367 = vmatpush.msra.mxu0 0.0
        %2368 = vmatpush.msra.mxu0 0.0
        %2369 = vmatpush.msra.mxu0 0.0
        %2370 = vmatpush.msra.mxu0 0.0
        %2371 = vmatpush.msra.mxu0 0.0
        %2372 = vmatpush.msra.mxu0 0.0
        %2373 = vmatpush.msra.mxu0 0.0
        %2374 = vmatpush.msra.mxu0 0.0
        %2375 = vmatpush.msra.mxu0 0.0
        %2376 = vmatpush.msra.mxu0 %v2356
        %2377 = vmatpush.msra.mxu0 %v2355
        %2378 = vmatpush.msra.mxu0 %v2354
        %2379 = vmatpush.msra.mxu0 %v2353
        %2380 = vmatmul.f32.gmra.mxu0 %v2362
        %v2381 = vpop.f32.mrf.mxu0
        %v2382 = vadd.f32 %v2359, %v2381
        %2383 = vdwg.mxu0
        %2384 = vst [vmem:[%s647] sm:$0xff] %v2382
        %s2385 = sand.u32 %s489, 1
        %s2386 = scalar_lea.sflag [#allocation3], %s2385
        %s2387 = sand.u32 %s489, 1
        %s2388 = smul.addr %s2387, 8
        %s2389 = scalar_lea.vmem [#allocation2], %s2388
        // Predicated region
        $region105: #{tpu_custom_call.1} parent=103 // pred_check
          %p2390 = pneg %p499
        $region106: #{tpu_custom_call.1} parent=103 // pred_check_branch
          %2392 = sbr.rel (%p2390) target = $region108
        $region107: #{tpu_custom_call.1} parent=103 // pred_region
          %2394 = vsyncadd %s2386, 0
          %s2395 = smul.addr %s35, 8
          %s2396 = scalar_lea.hbm %s21, %s2395
          %s2398 = sshll.u32 %s2389, 4
          %s2399 = int_to_ptr.vmem [resolvable:$true] %s2398
          %s2400 = sshll.u32 %s2396, 4
          %s2401 = int_to_ptr.hbm [resolvable:$true] %s2400
          %2403 = dma.vmem_to_hbm [thread:$0]  %s2399, 128, %s2401, %s2386
        $region108: #{tpu_custom_call.1} parent=103 // pred_fallthru
          _
      $region104: #{tpu_custom_call.1} parent=5 // pred_fallthru
        _
      %p2404 = scmp.le.s32.totalorder 2, %s30
      // Predicated region
      $region109: #{tpu_custom_call.1} parent=5 // pred_check
        %p2405 = pneg %p2404
      $region110: #{tpu_custom_call.1} parent=5 // pred_check_branch
        %2407 = sbr.rel (%p2405) target = $region112
      $region111: #{tpu_custom_call.1} parent=5 // pred_region
        %s2408 = ssub.s32 %s30, 2
        // Predicated region
        $region113: #{tpu_custom_call.1} parent=111 // pred_check
          %p2409 = pneg %p505
        $region114: #{tpu_custom_call.1} parent=111 // pred_check_branch
          %2411 = sbr.rel (%p2409) target = $region116
        $region115: #{tpu_custom_call.1} parent=111 // pred_region
          %s2412 = sand.u32 %s490, 1
          %s2413 = scalar_lea.sflag [#allocation3], %s2412
          %s2414 = sand.u32 %s490, 1
          %s2415 = smul.addr %s2414, 8
          %s2416 = scalar_lea.vmem [#allocation2], %s2415
          %2418 = dma.done %s2413, 128
        $region116: #{tpu_custom_call.1} parent=111 // pred_fallthru
          _
      $region112: #{tpu_custom_call.1} parent=5 // pred_fallthru
        _
    $region6: #{tpu_custom_call.1} parent=1 // loop_footer
      %s34 = sadd.s32 1, %s30
    $region7: #{tpu_custom_call.1} parent=1 // loop_footer_branch
      %29 = sbr.rel target = $region3
    $region8: #{tpu_custom_call.1} parent=1 // loop_exit
      _
    %2419 = vsyncpa [#allocation3], 1
    %s2420 = scalar_lea.sflag [#allocation3], 1
    %2421 = vsyncpa %s2420, 1

</llo_original>
